<compile_context>
chip_gen: v6e
topology: v6e:2x2x1
jax: 0.10.0
libtpu: 0.0.40
codegen_flags: <defaults>
</compile_context>

<pallas_src>
import jax
import jax.numpy as jnp
import numpy as np
from jax.experimental import pallas as pl
from jax.experimental.pallas import tpu as pltpu

KH = KW = 3
EPS = 1e-5
_TAPS = tuple((kh, kw) for kh in range(KH) for kw in range(KW))


def _bridge_kernel(xcol_ref, w1_ref, g1_ref, b1_ref, w2t_ref, g2_ref, b2_ref,
                   out_ref, h1pad_ref, p2_ref):
    """Fused Bridge forward.

    xcol_ref : (N*H*W, 9*Cin)  im2col of the padded input
    w1_ref   : (9*Cin, C)      conv1 weights, taps folded into K
    g1_ref   : (1, C)          BN1 gamma
    b1_ref   : (1, C)          BN1 beta
    w2t_ref  : (C, 9*C)        conv2 weights, transposed, taps folded into K
    g2_ref   : (C, 1)          BN2 gamma (channels-major)
    b2_ref   : (C, 1)          BN2 beta  (channels-major)
    out_ref  : (C, N*H*W)      lane-dense output slab
    h1pad_ref: (N, H+2, W+2, C) f32 scratch — intermediate with zero halo
    p2_ref   : (N*H*W, 9*C)    f32 scratch — conv2 im2col staging
    """
    N, Hp, Wp, C = h1pad_ref.shape
    H, W = Hp - 2, Wp - 2
    M = N * H * W
    inv_m = 1.0 / float(M)

    # ---------------- ConvBlock 1: one K=9*Cin MXU contraction ----------------
    y1 = jnp.dot(xcol_ref[...], w1_ref[...], preferred_element_type=jnp.float32)

    # One-pass BN stats (biased variance, training-mode).  Conv bias omitted:
    # it cancels exactly against the batch mean.
    mean1 = jnp.sum(y1, axis=0, keepdims=True) * inv_m
    var1 = jnp.maximum(jnp.sum(y1 * y1, axis=0, keepdims=True) * inv_m
                       - mean1 * mean1, 0.0)
    h1 = jnp.maximum((y1 - mean1) * jax.lax.rsqrt(var1 + EPS) * g1_ref[...]
                     + b1_ref[...], 0.0)

    # Stage the intermediate entirely in VMEM with a zero halo (no HBM traffic).
    h1pad_ref[...] = jnp.zeros_like(h1pad_ref)
    h1pad_ref[:, 1:H + 1, 1:W + 1, :] = h1.reshape(N, H, W, C)

    # ---------------- ConvBlock 2: one K=9*C MXU contraction -------------------
    # Assemble the im2col operand (M, 9*C) from the VMEM intermediate.
    for t, (kh, kw) in enumerate(_TAPS):
        p2_ref[:, t * C:(t + 1) * C] = (
            h1pad_ref[:, kh:kh + H, kw:kw + W, :].reshape(M, C))

    # Transposed-RHS dot: (C, 9C) x (M, 9C)^T -> (C, M).  The result is
    # channels-major, so the whole BN2/ReLU epilogue and the store are
    # lane-dense (M = N*H*W lanes).
    y2t = jax.lax.dot_general(
        w2t_ref[...], p2_ref[...],
        dimension_numbers=(((1,), (1,)), ((), ())),
        preferred_element_type=jnp.float32)

    mean2 = jnp.sum(y2t, axis=1, keepdims=True) * inv_m
    var2 = jnp.maximum(jnp.sum(y2t * y2t, axis=1, keepdims=True) * inv_m
                       - mean2 * mean2, 0.0)
    h2t = jnp.maximum((y2t - mean2) * jax.lax.rsqrt(var2 + EPS) * g2_ref[...]
                      + b2_ref[...], 0.0)
    out_ref[...] = h2t.astype(out_ref.dtype)


def _im2col_3x3(xpad, H, W):
    """(N, H+2, W+2, Cin) -> (N*H*W, 9*Cin), tap-major / channel-minor order."""
    N, _, _, Cin = xpad.shape
    cols = [xpad[:, kh:kh + H, kw:kw + W, :].reshape(N * H * W, Cin)
            for kh, kw in _TAPS]
    return jnp.concatenate(cols, axis=-1)


def bridge_forward(x_nchw, params):
    """Bridge.forward: two fused ConvBlocks. Input/output are NCHW like PyTorch."""
    (w1, _cb1, g1, bt1), (w2, _cb2, g2, bt2) = params   # conv biases unused (cancel in BN)
    N, Cin, H, W = x_nchw.shape
    C = w1.shape[-1]
    M = N * H * W
    Hp, Wp = H + 2, W + 2

    x_nhwc = jnp.transpose(x_nchw, (0, 2, 3, 1))                 # NCHW -> NHWC
    xpad = jnp.pad(x_nhwc, ((0, 0), (1, 1), (1, 1), (0, 0)))
    xcol = _im2col_3x3(xpad, H, W)                               # (M, 9*Cin)
    w1_2d = w1.reshape(KH * KW * Cin, C)                         # (9*Cin, C)
    w2t_2d = jnp.transpose(w2.reshape(KH * KW * C, C))           # (C, 9*C)

    out_cm = pl.pallas_call(
        _bridge_kernel,
        out_shape=jax.ShapeDtypeStruct((C, M), jnp.float32),
        grid=(1,),
        in_specs=[
            pl.BlockSpec((M, KH * KW * Cin), lambda i: (0, 0)),
            pl.BlockSpec((KH * KW * Cin, C), lambda i: (0, 0)),
            pl.BlockSpec((1, C), lambda i: (0, 0)),
            pl.BlockSpec((1, C), lambda i: (0, 0)),
            pl.BlockSpec((C, KH * KW * C), lambda i: (0, 0)),
            pl.BlockSpec((C, 1), lambda i: (0, 0)),
            pl.BlockSpec((C, 1), lambda i: (0, 0)),
        ],
        out_specs=pl.BlockSpec((C, M), lambda i: (0, 0)),
        scratch_shapes=[
            pltpu.VMEM((N, Hp, Wp, C), jnp.float32),     # haloed intermediate
            pltpu.VMEM((M, KH * KW * C), jnp.float32),   # conv2 im2col staging
        ],
        compiler_params=pltpu.CompilerParams(
            dimension_semantics=("arbitrary",)),
    )(xcol, w1_2d, g1.reshape(1, C), bt1.reshape(1, C),
      w2t_2d, g2.reshape(C, 1), bt2.reshape(C, 1))

    # (C, N*H*W) -> (N, C, H, W)  (free layout plumbing in the wrapper)
    return jnp.transpose(out_cm.reshape(C, N, H, W), (1, 0, 2, 3))


def init_bridge_params(key, in_channels, out_channels):
    """Deterministic synthetic parameters for Bridge (two ConvBlocks)."""
    params = []
    cin = in_channels
    for _ in range(2):
        key, kw_, kb_, kg_, kbt_ = jax.random.split(key, 5)
        w = 0.1 * jax.random.normal(kw_, (KH, KW, cin, out_channels), jnp.float32)
        b = 0.1 * jax.random.normal(kb_, (out_channels,), jnp.float32)
        gamma = 1.0 + 0.1 * jax.random.normal(kg_, (out_channels,), jnp.float32)
        beta = 0.1 * jax.random.normal(kbt_, (out_channels,), jnp.float32)
        params.append((w, b, gamma, beta))
        cin = out_channels
    return params


# ---- pure-JAX reference (includes the conv bias; proves it cancels) ----
def _ref_block(x_nhwc, w, b, gamma, beta):
    y = jax.lax.conv_general_dilated(
        x_nhwc, w, window_strides=(1, 1), padding=((1, 1), (1, 1)),
        dimension_numbers=("NHWC", "HWIO", "NHWC"))
    y = y + b
    mean = jnp.mean(y, axis=(0, 1, 2), keepdims=True)
    var = jnp.mean((y - mean) ** 2, axis=(0, 1, 2), keepdims=True)
    y = (y - mean) * jax.lax.rsqrt(var + EPS) * gamma + beta
    return jnp.maximum(y, 0.0)


def _ref_bridge(x_nchw, params):
    x = jnp.transpose(x_nchw, (0, 2, 3, 1))
    for (w, b, gamma, beta) in params:
        x = _ref_block(x, w, b, gamma, beta)
    return jnp.transpose(x, (0, 3, 1, 2))


if __name__ == "__main__":
    key = jax.random.PRNGKey(0)
    k_x, k_p = jax.random.split(key)

    N, Cin, H, W = 2, 4, 16, 16
    Cout = 8
    x = jax.random.normal(k_x, (N, Cin, H, W), jnp.float32)  # NCHW, like PyTorch
    params = init_bridge_params(k_p, Cin, Cout)

    out = jax.block_until_ready(bridge_forward(x, params))
    assert out.shape == (N, Cout, H, W), out.shape

    ref = jax.block_until_ready(_ref_bridge(x, params))
    np.testing.assert_allclose(np.asarray(out), np.asarray(ref),
                               rtol=1e-4, atol=1e-4)
    print("KERNEL_OK")
</pallas_src>

<mosaic_0001>
module attributes {stable_mosaic.version = 11 : i64} {
  func.func @_bridge_kernel(%arg0: i32, %arg1: memref<512x36xf32, #tpu.memory_space<vmem>>, %arg2: memref<36x8xf32, #tpu.memory_space<vmem>>, %arg3: memref<1x8xf32, #tpu.memory_space<vmem>>, %arg4: memref<1x8xf32, #tpu.memory_space<vmem>>, %arg5: memref<8x72xf32, #tpu.memory_space<vmem>>, %arg6: memref<8x1xf32, #tpu.memory_space<vmem>>, %arg7: memref<8x1xf32, #tpu.memory_space<vmem>>, %arg8: memref<8x512xf32, #tpu.memory_space<vmem>>, %arg9: memref<2x18x18x8xf32, #tpu.memory_space<vmem>>, %arg10: memref<512x72xf32, #tpu.memory_space<vmem>>) attributes {dimension_semantics = [#tpu.dimension_semantics<arbitrary>], iteration_bounds = array<i64: 1>, scalar_prefetch = 0 : i64, scratch_operands = 2 : i64, tpu.core_type = #tpu.core_type<tc>, window_params = [{pipeline_mode = #tpu.pipeline_mode<synchronous>, transform_indices = @transform_0, window_bounds = array<i64: 512, 36>}, {pipeline_mode = #tpu.pipeline_mode<synchronous>, transform_indices = @transform_1, window_bounds = array<i64: 36, 8>}, {pipeline_mode = #tpu.pipeline_mode<synchronous>, transform_indices = @transform_2, window_bounds = array<i64: 1, 8>}, {pipeline_mode = #tpu.pipeline_mode<synchronous>, transform_indices = @transform_3, window_bounds = array<i64: 1, 8>}, {pipeline_mode = #tpu.pipeline_mode<synchronous>, transform_indices = @transform_4, window_bounds = array<i64: 8, 72>}, {pipeline_mode = #tpu.pipeline_mode<synchronous>, transform_indices = @transform_5, window_bounds = array<i64: 8, 1>}, {pipeline_mode = #tpu.pipeline_mode<synchronous>, transform_indices = @transform_6, window_bounds = array<i64: 8, 1>}, {pipeline_mode = #tpu.pipeline_mode<synchronous>, transform_indices = @transform_7, window_bounds = array<i64: 8, 512>}]} {
    %c0 = arith.constant 0 : index
    %c0_0 = arith.constant 0 : index
    %0 = vector.load %arg1[%c0, %c0_0] : memref<512x36xf32, #tpu.memory_space<vmem>>, vector<512x36xf32>
    %c0_1 = arith.constant 0 : index
    %c0_2 = arith.constant 0 : index
    %1 = vector.load %arg2[%c0_1, %c0_2] : memref<36x8xf32, #tpu.memory_space<vmem>>, vector<36x8xf32>
    %cst = arith.constant dense<0.000000e+00> : vector<512x8xf32>
    %2 = tpu.matmul %0, %1, %cst {dimension_numbers = #tpu.dot_dimension_numbers<[1], [0], [0], [1], [0, 0, 1, 1], [], []>} : vector<512x36xf32>, vector<36x8xf32>, vector<512x8xf32> -> vector<512x8xf32>
    %cst_3 = arith.constant dense<0.000000e+00> : vector<8xf32>
    %3 = vector.multi_reduction <add>, %2, %cst_3 [0] : vector<512x8xf32> to vector<8xf32>
    %4 = vector.shape_cast %3 : vector<8xf32> to vector<1x8xf32>
    %cst_4 = arith.constant 0.001953125 : f32
    %5 = vector.broadcast %cst_4 : f32 to vector<1x8xf32>
    %6 = arith.mulf %4, %5 : vector<1x8xf32>
    %7 = arith.mulf %2, %2 : vector<512x8xf32>
    %cst_5 = arith.constant dense<0.000000e+00> : vector<8xf32>
    %8 = vector.multi_reduction <add>, %7, %cst_5 [0] : vector<512x8xf32> to vector<8xf32>
    %9 = vector.shape_cast %8 : vector<8xf32> to vector<1x8xf32>
    %cst_6 = arith.constant 0.001953125 : f32
    %10 = vector.broadcast %cst_6 : f32 to vector<1x8xf32>
    %11 = arith.mulf %9, %10 : vector<1x8xf32>
    %12 = arith.mulf %6, %6 : vector<1x8xf32>
    %13 = arith.subf %11, %12 : vector<1x8xf32>
    %cst_7 = arith.constant 0.000000e+00 : f32
    %14 = vector.broadcast %cst_7 : f32 to vector<1x8xf32>
    %15 = arith.maximumf %13, %14 : vector<1x8xf32>
    %16 = vector.broadcast %6 : vector<1x8xf32> to vector<512x8xf32>
    %17 = arith.subf %2, %16 : vector<512x8xf32>
    %cst_8 = arith.constant 9.99999974E-6 : f32
    %18 = vector.broadcast %cst_8 : f32 to vector<1x8xf32>
    %19 = arith.addf %15, %18 : vector<1x8xf32>
    %20 = math.rsqrt %19 : vector<1x8xf32>
    %21 = vector.broadcast %20 : vector<1x8xf32> to vector<512x8xf32>
    %22 = arith.mulf %17, %21 : vector<512x8xf32>
    %c0_9 = arith.constant 0 : index
    %c0_10 = arith.constant 0 : index
    %23 = vector.load %arg3[%c0_9, %c0_10] : memref<1x8xf32, #tpu.memory_space<vmem>>, vector<1x8xf32>
    %24 = vector.broadcast %23 : vector<1x8xf32> to vector<512x8xf32>
    %25 = arith.mulf %22, %24 : vector<512x8xf32>
    %c0_11 = arith.constant 0 : index
    %c0_12 = arith.constant 0 : index
    %26 = vector.load %arg4[%c0_11, %c0_12] : memref<1x8xf32, #tpu.memory_space<vmem>>, vector<1x8xf32>
    %27 = vector.broadcast %26 : vector<1x8xf32> to vector<512x8xf32>
    %28 = arith.addf %25, %27 : vector<512x8xf32>
    %cst_13 = arith.constant 0.000000e+00 : f32
    %29 = vector.broadcast %cst_13 : f32 to vector<512x8xf32>
    %30 = arith.maximumf %28, %29 : vector<512x8xf32>
    %cst_14 = arith.constant 0.000000e+00 : f32
    %31 = vector.broadcast %cst_14 : f32 to vector<2x18x18x8xf32>
    %c0_15 = arith.constant 0 : index
    %c0_16 = arith.constant 0 : index
    %c0_17 = arith.constant 0 : index
    %c0_18 = arith.constant 0 : index
    %32 = vector.load %arg9[%c0_15, %c0_16, %c0_17, %c0_18] : memref<2x18x18x8xf32, #tpu.memory_space<vmem>>, vector<2x18x18x8xf32>
    tpu.vector_store %arg9[%c0_15, %c0_16, %c0_17, %c0_18], %31 {strides = array<i32>} : memref<2x18x18x8xf32, #tpu.memory_space<vmem>>, vector<2x18x18x8xf32>,
    %33 = vector.shape_cast %30 : vector<512x8xf32> to vector<2x16x16x8xf32>
    %c0_19 = arith.constant 0 : index
    %c1 = arith.constant 1 : index
    %c1_20 = arith.constant 1 : index
    %c0_21 = arith.constant 0 : index
    %34 = vector.load %arg9[%c0_19, %c1, %c1_20, %c0_21] : memref<2x18x18x8xf32, #tpu.memory_space<vmem>>, vector<2x16x16x8xf32>
    tpu.vector_store %arg9[%c0_19, %c1, %c1_20, %c0_21], %33 {strides = array<i32>} : memref<2x18x18x8xf32, #tpu.memory_space<vmem>>, vector<2x16x16x8xf32>,
    %c0_22 = arith.constant 0 : index
    %c0_23 = arith.constant 0 : index
    %c0_24 = arith.constant 0 : index
    %c0_25 = arith.constant 0 : index
    %35 = vector.load %arg9[%c0_22, %c0_23, %c0_24, %c0_25] : memref<2x18x18x8xf32, #tpu.memory_space<vmem>>, vector<2x16x16x8xf32>
    %36 = vector.shape_cast %35 : vector<2x16x16x8xf32> to vector<512x8xf32>
    %c0_26 = arith.constant 0 : index
    %c0_27 = arith.constant 0 : index
    %37 = vector.load %arg10[%c0_26, %c0_27] : memref<512x72xf32, #tpu.memory_space<vmem>>, vector<512x8xf32>
    tpu.vector_store %arg10[%c0_26, %c0_27], %36 {strides = array<i32>} : memref<512x72xf32, #tpu.memory_space<vmem>>, vector<512x8xf32>,
    %c0_28 = arith.constant 0 : index
    %c0_29 = arith.constant 0 : index
    %c1_30 = arith.constant 1 : index
    %c0_31 = arith.constant 0 : index
    %38 = vector.load %arg9[%c0_28, %c0_29, %c1_30, %c0_31] : memref<2x18x18x8xf32, #tpu.memory_space<vmem>>, vector<2x16x16x8xf32>
    %39 = vector.shape_cast %38 : vector<2x16x16x8xf32> to vector<512x8xf32>
    %c0_32 = arith.constant 0 : index
    %c8 = arith.constant 8 : index
    %40 = vector.load %arg10[%c0_32, %c8] : memref<512x72xf32, #tpu.memory_space<vmem>>, vector<512x8xf32>
    tpu.vector_store %arg10[%c0_32, %c8], %39 {strides = array<i32>} : memref<512x72xf32, #tpu.memory_space<vmem>>, vector<512x8xf32>,
    %c0_33 = arith.constant 0 : index
    %c0_34 = arith.constant 0 : index
    %c2 = arith.constant 2 : index
    %c0_35 = arith.constant 0 : index
    %41 = vector.load %arg9[%c0_33, %c0_34, %c2, %c0_35] : memref<2x18x18x8xf32, #tpu.memory_space<vmem>>, vector<2x16x16x8xf32>
    %42 = vector.shape_cast %41 : vector<2x16x16x8xf32> to vector<512x8xf32>
    %c0_36 = arith.constant 0 : index
    %c16 = arith.constant 16 : index
    %43 = vector.load %arg10[%c0_36, %c16] : memref<512x72xf32, #tpu.memory_space<vmem>>, vector<512x8xf32>
    tpu.vector_store %arg10[%c0_36, %c16], %42 {strides = array<i32>} : memref<512x72xf32, #tpu.memory_space<vmem>>, vector<512x8xf32>,
    %c0_37 = arith.constant 0 : index
    %c1_38 = arith.constant 1 : index
    %c0_39 = arith.constant 0 : index
    %c0_40 = arith.constant 0 : index
    %44 = vector.load %arg9[%c0_37, %c1_38, %c0_39, %c0_40] : memref<2x18x18x8xf32, #tpu.memory_space<vmem>>, vector<2x16x16x8xf32>
    %45 = vector.shape_cast %44 : vector<2x16x16x8xf32> to vector<512x8xf32>
    %c0_41 = arith.constant 0 : index
    %c24 = arith.constant 24 : index
    %46 = vector.load %arg10[%c0_41, %c24] : memref<512x72xf32, #tpu.memory_space<vmem>>, vector<512x8xf32>
    tpu.vector_store %arg10[%c0_41, %c24], %45 {strides = array<i32>} : memref<512x72xf32, #tpu.memory_space<vmem>>, vector<512x8xf32>,
    %c0_42 = arith.constant 0 : index
    %c1_43 = arith.constant 1 : index
    %c1_44 = arith.constant 1 : index
    %c0_45 = arith.constant 0 : index
    %47 = vector.load %arg9[%c0_42, %c1_43, %c1_44, %c0_45] : memref<2x18x18x8xf32, #tpu.memory_space<vmem>>, vector<2x16x16x8xf32>
    %48 = vector.shape_cast %47 : vector<2x16x16x8xf32> to vector<512x8xf32>
    %c0_46 = arith.constant 0 : index
    %c32 = arith.constant 32 : index
    %49 = vector.load %arg10[%c0_46, %c32] : memref<512x72xf32, #tpu.memory_space<vmem>>, vector<512x8xf32>
    tpu.vector_store %arg10[%c0_46, %c32], %48 {strides = array<i32>} : memref<512x72xf32, #tpu.memory_space<vmem>>, vector<512x8xf32>,
    %c0_47 = arith.constant 0 : index
    %c1_48 = arith.constant 1 : index
    %c2_49 = arith.constant 2 : index
    %c0_50 = arith.constant 0 : index
    %50 = vector.load %arg9[%c0_47, %c1_48, %c2_49, %c0_50] : memref<2x18x18x8xf32, #tpu.memory_space<vmem>>, vector<2x16x16x8xf32>
    %51 = vector.shape_cast %50 : vector<2x16x16x8xf32> to vector<512x8xf32>
    %c0_51 = arith.constant 0 : index
    %c40 = arith.constant 40 : index
    %52 = vector.load %arg10[%c0_51, %c40] : memref<512x72xf32, #tpu.memory_space<vmem>>, vector<512x8xf32>
    tpu.vector_store %arg10[%c0_51, %c40], %51 {strides = array<i32>} : memref<512x72xf32, #tpu.memory_space<vmem>>, vector<512x8xf32>,
    %c0_52 = arith.constant 0 : index
    %c2_53 = arith.constant 2 : index
    %c0_54 = arith.constant 0 : index
    %c0_55 = arith.constant 0 : index
    %53 = vector.load %arg9[%c0_52, %c2_53, %c0_54, %c0_55] : memref<2x18x18x8xf32, #tpu.memory_space<vmem>>, vector<2x16x16x8xf32>
    %54 = vector.shape_cast %53 : vector<2x16x16x8xf32> to vector<512x8xf32>
    %c0_56 = arith.constant 0 : index
    %c48 = arith.constant 48 : index
    %55 = vector.load %arg10[%c0_56, %c48] : memref<512x72xf32, #tpu.memory_space<vmem>>, vector<512x8xf32>
    tpu.vector_store %arg10[%c0_56, %c48], %54 {strides = array<i32>} : memref<512x72xf32, #tpu.memory_space<vmem>>, vector<512x8xf32>,
    %c0_57 = arith.constant 0 : index
    %c2_58 = arith.constant 2 : index
    %c1_59 = arith.constant 1 : index
    %c0_60 = arith.constant 0 : index
    %56 = vector.load %arg9[%c0_57, %c2_58, %c1_59, %c0_60] : memref<2x18x18x8xf32, #tpu.memory_space<vmem>>, vector<2x16x16x8xf32>
    %57 = vector.shape_cast %56 : vector<2x16x16x8xf32> to vector<512x8xf32>
    %c0_61 = arith.constant 0 : index
    %c56 = arith.constant 56 : index
    %58 = vector.load %arg10[%c0_61, %c56] : memref<512x72xf32, #tpu.memory_space<vmem>>, vector<512x8xf32>
    tpu.vector_store %arg10[%c0_61, %c56], %57 {strides = array<i32>} : memref<512x72xf32, #tpu.memory_space<vmem>>, vector<512x8xf32>,
    %c0_62 = arith.constant 0 : index
    %c2_63 = arith.constant 2 : index
    %c2_64 = arith.constant 2 : index
    %c0_65 = arith.constant 0 : index
    %59 = vector.load %arg9[%c0_62, %c2_63, %c2_64, %c0_65] : memref<2x18x18x8xf32, #tpu.memory_space<vmem>>, vector<2x16x16x8xf32>
    %60 = vector.shape_cast %59 : vector<2x16x16x8xf32> to vector<512x8xf32>
    %c0_66 = arith.constant 0 : index
    %c64 = arith.constant 64 : index
    %61 = vector.load %arg10[%c0_66, %c64] : memref<512x72xf32, #tpu.memory_space<vmem>>, vector<512x8xf32>
    tpu.vector_store %arg10[%c0_66, %c64], %60 {strides = array<i32>} : memref<512x72xf32, #tpu.memory_space<vmem>>, vector<512x8xf32>,
    %c0_67 = arith.constant 0 : index
    %c0_68 = arith.constant 0 : index
    %62 = vector.load %arg5[%c0_67, %c0_68] : memref<8x72xf32, #tpu.memory_space<vmem>>, vector<8x72xf32>
    %c0_69 = arith.constant 0 : index
    %c0_70 = arith.constant 0 : index
    %63 = vector.load %arg10[%c0_69, %c0_70] : memref<512x72xf32, #tpu.memory_space<vmem>>, vector<512x72xf32>
    %cst_71 = arith.constant dense<0.000000e+00> : vector<8x512xf32>
    %64 = tpu.matmul %62, %63, %cst_71 {dimension_numbers = #tpu.dot_dimension_numbers<[1], [1], [0], [0], [0, 0, 1, 0], [], []>} : vector<8x72xf32>, vector<512x72xf32>, vector<8x512xf32> -> vector<8x512xf32>
    %cst_72 = arith.constant dense<0.000000e+00> : vector<8xf32>
    %65 = vector.multi_reduction <add>, %64, %cst_72 [1] : vector<8x512xf32> to vector<8xf32>
    %66 = vector.shape_cast %65 : vector<8xf32> to vector<8x1xf32>
    %cst_73 = arith.constant 0.001953125 : f32
    %67 = vector.broadcast %cst_73 : f32 to vector<8x1xf32>
    %68 = arith.mulf %66, %67 : vector<8x1xf32>
    %69 = arith.mulf %64, %64 : vector<8x512xf32>
    %cst_74 = arith.constant dense<0.000000e+00> : vector<8xf32>
    %70 = vector.multi_reduction <add>, %69, %cst_74 [1] : vector<8x512xf32> to vector<8xf32>
    %71 = vector.shape_cast %70 : vector<8xf32> to vector<8x1xf32>
    %cst_75 = arith.constant 0.001953125 : f32
    %72 = vector.broadcast %cst_75 : f32 to vector<8x1xf32>
    %73 = arith.mulf %71, %72 : vector<8x1xf32>
    %74 = arith.mulf %68, %68 : vector<8x1xf32>
    %75 = arith.subf %73, %74 : vector<8x1xf32>
    %cst_76 = arith.constant 0.000000e+00 : f32
    %76 = vector.broadcast %cst_76 : f32 to vector<8x1xf32>
    %77 = arith.maximumf %75, %76 : vector<8x1xf32>
    %78 = vector.broadcast %68 : vector<8x1xf32> to vector<8x512xf32>
    %79 = arith.subf %64, %78 : vector<8x512xf32>
    %cst_77 = arith.constant 9.99999974E-6 : f32
    %80 = vector.broadcast %cst_77 : f32 to vector<8x1xf32>
    %81 = arith.addf %77, %80 : vector<8x1xf32>
    %82 = math.rsqrt %81 : vector<8x1xf32>
    %83 = vector.broadcast %82 : vector<8x1xf32> to vector<8x512xf32>
    %84 = arith.mulf %79, %83 : vector<8x512xf32>
    %c0_78 = arith.constant 0 : index
    %c0_79 = arith.constant 0 : index
    %85 = vector.load %arg6[%c0_78, %c0_79] : memref<8x1xf32, #tpu.memory_space<vmem>>, vector<8x1xf32>
    %86 = vector.broadcast %85 : vector<8x1xf32> to vector<8x512xf32>
    %87 = arith.mulf %84, %86 : vector<8x512xf32>
    %c0_80 = arith.constant 0 : index
    %c0_81 = arith.constant 0 : index
    %88 = vector.load %arg7[%c0_80, %c0_81] : memref<8x1xf32, #tpu.memory_space<vmem>>, vector<8x1xf32>
    %89 = vector.broadcast %88 : vector<8x1xf32> to vector<8x512xf32>
    %90 = arith.addf %87, %89 : vector<8x512xf32>
    %cst_82 = arith.constant 0.000000e+00 : f32
    %91 = vector.broadcast %cst_82 : f32 to vector<8x512xf32>
    %92 = arith.maximumf %90, %91 : vector<8x512xf32>
    %c0_83 = arith.constant 0 : index
    %c0_84 = arith.constant 0 : index
    %93 = vector.load %arg8[%c0_83, %c0_84] : memref<8x512xf32, #tpu.memory_space<vmem>>, vector<8x512xf32>
    tpu.vector_store %arg8[%c0_83, %c0_84], %92 {strides = array<i32>} : memref<8x512xf32, #tpu.memory_space<vmem>>, vector<8x512xf32>,
    return
  }
  func.func @transform_0(%arg0: i32) -> (i32, i32) {
    %c0_i32 = arith.constant 0 : i32
    %c0_i32_0 = arith.constant 0 : i32
    %c0_i32_1 = arith.constant 0 : i32
    return %c0_i32, %c0_i32_0 : i32, i32
  }
  func.func @transform_1(%arg0: i32) -> (i32, i32) {
    %c0_i32 = arith.constant 0 : i32
    %c0_i32_0 = arith.constant 0 : i32
    %c0_i32_1 = arith.constant 0 : i32
    return %c0_i32, %c0_i32_0 : i32, i32
  }
  func.func @transform_2(%arg0: i32) -> (i32, i32) {
    %c0_i32 = arith.constant 0 : i32
    %c0_i32_0 = arith.constant 0 : i32
    %c0_i32_1 = arith.constant 0 : i32
    return %c0_i32, %c0_i32_0 : i32, i32
  }
  func.func @transform_3(%arg0: i32) -> (i32, i32) {
    %c0_i32 = arith.constant 0 : i32
    %c0_i32_0 = arith.constant 0 : i32
    %c0_i32_1 = arith.constant 0 : i32
    return %c0_i32, %c0_i32_0 : i32, i32
  }
  func.func @transform_4(%arg0: i32) -> (i32, i32) {
    %c0_i32 = arith.constant 0 : i32
    %c0_i32_0 = arith.constant 0 : i32
    %c0_i32_1 = arith.constant 0 : i32
    return %c0_i32, %c0_i32_0 : i32, i32
  }
  func.func @transform_5(%arg0: i32) -> (i32, i32) {
    %c0_i32 = arith.constant 0 : i32
    %c0_i32_0 = arith.constant 0 : i32
    %c0_i32_1 = arith.constant 0 : i32
    return %c0_i32, %c0_i32_0 : i32, i32
  }
  func.func @transform_6(%arg0: i32) -> (i32, i32) {
    %c0_i32 = arith.constant 0 : i32
    %c0_i32_0 = arith.constant 0 : i32
    %c0_i32_1 = arith.constant 0 : i32
    return %c0_i32, %c0_i32_0 : i32, i32
  }
  func.func @transform_7(%arg0: i32) -> (i32, i32) {
    %c0_i32 = arith.constant 0 : i32
    %c0_i32_0 = arith.constant 0 : i32
    %c0_i32_1 = arith.constant 0 : i32
    return %c0_i32, %c0_i32_0 : i32, i32
  }
}

</mosaic_0001>

<llo_original>
// kernel: tpu_custom_call.1
$region0: #{tpu_custom_call.1}
  #allocation0 [shape = 'u32[]', space=smem, size = 0x4, offset = 0x4, fixed_abs, tag = 'smem constant byte address 0x4 - core index']
  #allocation1 [shape = 'u32[144,128]{1,0:T(1,128)}', space=vmem, size = 0x12000, scoped, tag = 'internal scratch']
  #allocation2 [shape = 'f32[2,18,18,8]{3,2,1,0:T(8,128)}', space=vmem, size = 0x6c000, scoped, tag = 'scratch operand']
  #allocation3 [shape = 'f32[512,72]{1,0:T(8,128)}', space=vmem, size = 0x40000, scoped, tag = 'scratch operand']
  %s0 = inlined_call_operand.vmem [shape: f32[512,36], index: 0, kind: input, shape index: {}]
  %s1 = inlined_call_operand.vmem [shape: f32[36,8], index: 1, kind: input, shape index: {}]
  %s2 = inlined_call_operand.vmem [shape: f32[1,8], index: 2, kind: input, shape index: {}]
  %s3 = inlined_call_operand.vmem [shape: f32[1,8], index: 3, kind: input, shape index: {}]
  %s4 = inlined_call_operand.vmem [shape: f32[8,72], index: 4, kind: input, shape index: {}]
  %s5 = inlined_call_operand.vmem [shape: f32[8,1], index: 5, kind: input, shape index: {}]
  %s6 = inlined_call_operand.vmem [shape: f32[8,1], index: 6, kind: input, shape index: {}]
  %s7 = inlined_call_operand.hbm [shape: f32[8,512], index: 7, kind: output, shape index: {}]
  %s8 = sld [smem:[#allocation0]]
  $region38: #{tpu_custom_call.1} parent=0
    _
  %s10 = ssub.s32 1, %s8
  %s11 = scalar_select 0, %s10, %s8
  $region1: #{tpu_custom_call.1} parent=0
    #allocation4 [shape = 'u8[16384]{0}', space=vmem, size = 0x4000, scoped, tag = 'output window, operand 0, single buffered']
    #allocation5 [shape = 's32[1]{0}', space=sflag, size = 0x4, scoped, tag = 'scoped memory for tpu_custom_call.1']
    %12 = vsyncpa [#allocation5], 0
    // Predicated region
    $region2: #{tpu_custom_call.1} parent=1 // pred_check
      _
    $region3: #{tpu_custom_call.1} parent=1 // pred_check_branch
      %14 = sbr.rel (0) target = $region5
    $region4: #{tpu_custom_call.1} parent=1 // pred_region
      _
    $region5: #{tpu_custom_call.1} parent=1 // pred_fallthru
      _
    // Predicated region
    $region6: #{tpu_custom_call.1} parent=1 // pred_check
      _
    $region7: #{tpu_custom_call.1} parent=1 // pred_check_branch
      %16 = sbr.rel (0) target = $region9
    $region8: #{tpu_custom_call.1} parent=1 // pred_region
      _
    $region9: #{tpu_custom_call.1} parent=1 // pred_fallthru
      _
    // Predicated region
    $region10: #{tpu_custom_call.1} parent=1 // pred_check
      _
    $region11: #{tpu_custom_call.1} parent=1 // pred_check_branch
      %18 = sbr.rel (0) target = $region13
    $region12: #{tpu_custom_call.1} parent=1 // pred_region
      _
    $region13: #{tpu_custom_call.1} parent=1 // pred_fallthru
      _
    // Predicated region
    $region14: #{tpu_custom_call.1} parent=1 // pred_check
      _
    $region15: #{tpu_custom_call.1} parent=1 // pred_check_branch
      %20 = sbr.rel (0) target = $region17
    $region16: #{tpu_custom_call.1} parent=1 // pred_region
      _
    $region17: #{tpu_custom_call.1} parent=1 // pred_fallthru
      _
    // Predicated region
    $region18: #{tpu_custom_call.1} parent=1 // pred_check
      _
    $region19: #{tpu_custom_call.1} parent=1 // pred_check_branch
      %22 = sbr.rel (0) target = $region21
    $region20: #{tpu_custom_call.1} parent=1 // pred_region
      _
    $region21: #{tpu_custom_call.1} parent=1 // pred_fallthru
      _
    // Predicated region
    $region22: #{tpu_custom_call.1} parent=1 // pred_check
      _
    $region23: #{tpu_custom_call.1} parent=1 // pred_check_branch
      %24 = sbr.rel (0) target = $region25
    $region24: #{tpu_custom_call.1} parent=1 // pred_region
      _
    $region25: #{tpu_custom_call.1} parent=1 // pred_fallthru
      _
    // Predicated region
    $region26: #{tpu_custom_call.1} parent=1 // pred_check
      _
    $region27: #{tpu_custom_call.1} parent=1 // pred_check_branch
      %26 = sbr.rel (0) target = $region29
    $region28: #{tpu_custom_call.1} parent=1 // pred_region
      _
    $region29: #{tpu_custom_call.1} parent=1 // pred_fallthru
      _
    %v27 = vld [vmem:[%s0] sm:$0xff]
    %v28 = vld [vmem:[%s0 + $0x8] sm:$0xff]
    %v29 = vld [vmem:[%s0 + $0x10] sm:$0xff]
    %v30 = vld [vmem:[%s0 + $0x18] sm:$0xff]
    %v31 = vld [vmem:[%s0 + $0x20] sm:$0xff]
    %v32 = vld [vmem:[%s0 + $0x28] sm:$0xff]
    %v33 = vld [vmem:[%s0 + $0x30] sm:$0xff]
    %v34 = vld [vmem:[%s0 + $0x38] sm:$0xff]
    %v35 = vld [vmem:[%s0 + $0x40] sm:$0xff]
    %v36 = vld [vmem:[%s0 + $0x48] sm:$0xff]
    %v37 = vld [vmem:[%s0 + $0x50] sm:$0xff]
    %v38 = vld [vmem:[%s0 + $0x58] sm:$0xff]
    %v39 = vld [vmem:[%s0 + $0x60] sm:$0xff]
    %v40 = vld [vmem:[%s0 + $0x68] sm:$0xff]
    %v41 = vld [vmem:[%s0 + $0x70] sm:$0xff]
    %v42 = vld [vmem:[%s0 + $0x78] sm:$0xff]
    %v43 = vld [vmem:[%s0 + $0x80] sm:$0xff]
    %v44 = vld [vmem:[%s0 + $0x88] sm:$0xff]
    %v45 = vld [vmem:[%s0 + $0x90] sm:$0xff]
    %v46 = vld [vmem:[%s0 + $0x98] sm:$0xff]
    %v47 = vld [vmem:[%s0 + $0xa0] sm:$0xff]
    %v48 = vld [vmem:[%s0 + $0xa8] sm:$0xff]
    %v49 = vld [vmem:[%s0 + $0xb0] sm:$0xff]
    %v50 = vld [vmem:[%s0 + $0xb8] sm:$0xff]
    %v51 = vld [vmem:[%s0 + $0xc0] sm:$0xff]
    %v52 = vld [vmem:[%s0 + $0xc8] sm:$0xff]
    %v53 = vld [vmem:[%s0 + $0xd0] sm:$0xff]
    %v54 = vld [vmem:[%s0 + $0xd8] sm:$0xff]
    %v55 = vld [vmem:[%s0 + $0xe0] sm:$0xff]
    %v56 = vld [vmem:[%s0 + $0xe8] sm:$0xff]
    %v57 = vld [vmem:[%s0 + $0xf0] sm:$0xff]
    %v58 = vld [vmem:[%s0 + $0xf8] sm:$0xff]
    %v59 = vld [vmem:[%s0 + $0x100] sm:$0xff]
    %v60 = vld [vmem:[%s0 + $0x108] sm:$0xff]
    %v61 = vld [vmem:[%s0 + $0x110] sm:$0xff]
    %v62 = vld [vmem:[%s0 + $0x118] sm:$0xff]
    %v63 = vld [vmem:[%s0 + $0x120] sm:$0xff]
    %v64 = vld [vmem:[%s0 + $0x128] sm:$0xff]
    %v65 = vld [vmem:[%s0 + $0x130] sm:$0xff]
    %v66 = vld [vmem:[%s0 + $0x138] sm:$0xff]
    %v67 = vld [vmem:[%s0 + $0x140] sm:$0xff]
    %v68 = vld [vmem:[%s0 + $0x148] sm:$0xff]
    %v69 = vld [vmem:[%s0 + $0x150] sm:$0xff]
    %v70 = vld [vmem:[%s0 + $0x158] sm:$0xff]
    %v71 = vld [vmem:[%s0 + $0x160] sm:$0xff]
    %v72 = vld [vmem:[%s0 + $0x168] sm:$0xff]
    %v73 = vld [vmem:[%s0 + $0x170] sm:$0xff]
    %v74 = vld [vmem:[%s0 + $0x178] sm:$0xff]
    %v75 = vld [vmem:[%s0 + $0x180] sm:$0xff]
    %v76 = vld [vmem:[%s0 + $0x188] sm:$0xff]
    %v77 = vld [vmem:[%s0 + $0x190] sm:$0xff]
    %v78 = vld [vmem:[%s0 + $0x198] sm:$0xff]
    %v79 = vld [vmem:[%s0 + $0x1a0] sm:$0xff]
    %v80 = vld [vmem:[%s0 + $0x1a8] sm:$0xff]
    %v81 = vld [vmem:[%s0 + $0x1b0] sm:$0xff]
    %v82 = vld [vmem:[%s0 + $0x1b8] sm:$0xff]
    %v83 = vld [vmem:[%s0 + $0x1c0] sm:$0xff]
    %v84 = vld [vmem:[%s0 + $0x1c8] sm:$0xff]
    %v85 = vld [vmem:[%s0 + $0x1d0] sm:$0xff]
    %v86 = vld [vmem:[%s0 + $0x1d8] sm:$0xff]
    %v87 = vld [vmem:[%s0 + $0x1e0] sm:$0xff]
    %v88 = vld [vmem:[%s0 + $0x1e8] sm:$0xff]
    %v89 = vld [vmem:[%s0 + $0x1f0] sm:$0xff]
    %v90 = vld [vmem:[%s0 + $0x1f8] sm:$0xff]
    %v91 = vld [vmem:[%s1] sm:$0xff]
    %v92 = vld [vmem:[%s1 + $0x8] sm:$0xff]
    %v93 = vld [vmem:[%s1 + $0x10] sm:$0xff]
    %v94 = vld [vmem:[%s1 + $0x18] sm:$0xff]
    %v95 = vld [vmem:[%s1 + $0x20] sm:$0xf]
    %vm96 = vcmask 293888
    %v98 = vsel %vm96, %v27, 0
    %v101 = vsel %vm96, %v28, 0
    %v104 = vsel %vm96, %v29, 0
    %v107 = vsel %vm96, %v30, 0
    %v110 = vsel %vm96, %v31, 0
    %v113 = vsel %vm96, %v32, 0
    %v116 = vsel %vm96, %v33, 0
    %v119 = vsel %vm96, %v34, 0
    %v122 = vsel %vm96, %v35, 0
    %v125 = vsel %vm96, %v36, 0
    %v128 = vsel %vm96, %v37, 0
    %v131 = vsel %vm96, %v38, 0
    %v134 = vsel %vm96, %v39, 0
    %v137 = vsel %vm96, %v40, 0
    %v140 = vsel %vm96, %v41, 0
    %v143 = vsel %vm96, %v42, 0
    %v146 = vsel %vm96, %v43, 0
    %v149 = vsel %vm96, %v44, 0
    %v152 = vsel %vm96, %v45, 0
    %v155 = vsel %vm96, %v46, 0
    %v158 = vsel %vm96, %v47, 0
    %v161 = vsel %vm96, %v48, 0
    %v164 = vsel %vm96, %v49, 0
    %v167 = vsel %vm96, %v50, 0
    %v170 = vsel %vm96, %v51, 0
    %v173 = vsel %vm96, %v52, 0
    %v176 = vsel %vm96, %v53, 0
    %v179 = vsel %vm96, %v54, 0
    %v182 = vsel %vm96, %v55, 0
    %v185 = vsel %vm96, %v56, 0
    %v188 = vsel %vm96, %v57, 0
    %v191 = vsel %vm96, %v58, 0
    %v194 = vsel %vm96, %v59, 0
    %v197 = vsel %vm96, %v60, 0
    %v200 = vsel %vm96, %v61, 0
    %v203 = vsel %vm96, %v62, 0
    %v206 = vsel %vm96, %v63, 0
    %v209 = vsel %vm96, %v64, 0
    %v212 = vsel %vm96, %v65, 0
    %v215 = vsel %vm96, %v66, 0
    %v218 = vsel %vm96, %v67, 0
    %v221 = vsel %vm96, %v68, 0
    %v224 = vsel %vm96, %v69, 0
    %v227 = vsel %vm96, %v70, 0
    %v230 = vsel %vm96, %v71, 0
    %v233 = vsel %vm96, %v72, 0
    %v236 = vsel %vm96, %v73, 0
    %v239 = vsel %vm96, %v74, 0
    %v242 = vsel %vm96, %v75, 0
    %v245 = vsel %vm96, %v76, 0
    %v248 = vsel %vm96, %v77, 0
    %v251 = vsel %vm96, %v78, 0
    %v254 = vsel %vm96, %v79, 0
    %v257 = vsel %vm96, %v80, 0
    %v260 = vsel %vm96, %v81, 0
    %v263 = vsel %vm96, %v82, 0
    %v266 = vsel %vm96, %v83, 0
    %v269 = vsel %vm96, %v84, 0
    %v272 = vsel %vm96, %v85, 0
    %v275 = vsel %vm96, %v86, 0
    %v278 = vsel %vm96, %v87, 0
    %v281 = vsel %vm96, %v88, 0
    %v284 = vsel %vm96, %v89, 0
    %v287 = vsel %vm96, %v90, 0
    %vm289 = vcmask 1043456
    %v291 = vsel %vm289, %v95, 0
    %293 = vmatprep.subr.mxu0 0.0
    %294 = vmatpush1.msra.mxu0 0.0
    %295 = vmatprep.subr.mxu0 0.0
    %296 = vmatpush1.msra.mxu0 0.0
    %297 = vmatprep.subr.mxu0 0.0
    %298 = vmatpush1.msra.mxu0 0.0
    %299 = vmatprep.subr.mxu0 0.0
    %300 = vmatpush1.msra.mxu0 0.0
    %301 = vmatprep.subr.mxu0 0.0
    %302 = vmatpush1.msra.mxu0 0.0
    %303 = vmatprep.subr.mxu0 0.0
    %304 = vmatpush1.msra.mxu0 0.0
    %305 = vmatprep.subr.mxu0 0.0
    %306 = vmatpush1.msra.mxu0 0.0
    %307 = vmatprep.subr.mxu0 0.0
    %308 = vmatpush1.msra.mxu0 0.0
    %309 = vmatprep.subr.mxu0 0.0
    %310 = vmatpush1.msra.mxu0 0.0
    %311 = vmatprep.subr.mxu0 0.0
    %312 = vmatpush1.msra.mxu0 0.0
    %313 = vmatprep.subr.mxu0 0.0
    %314 = vmatpush1.msra.mxu0 0.0
    %315 = vmatprep.subr.mxu0 0.0
    %316 = vmatpush1.msra.mxu0 %v291
    %317 = vmatprep.subr.mxu0 0.0
    %318 = vmatpush1.msra.mxu0 %v94
    %319 = vmatprep.subr.mxu0 0.0
    %320 = vmatpush1.msra.mxu0 %v93
    %321 = vmatprep.subr.mxu0 0.0
    %322 = vmatpush1.msra.mxu0 %v92
    %323 = vmatprep.subr.mxu0 0.0
    %324 = vmatpush1.msra.mxu0 %v91
    %325 = vmatprep.subr.mxu0 0.0
    %326 = vmatpush2.msra.mxu0 0.0
    %327 = vmatprep.subr.mxu0 0.0
    %328 = vmatpush2.msra.mxu0 0.0
    %329 = vmatprep.subr.mxu0 0.0
    %330 = vmatpush2.msra.mxu0 0.0
    %331 = vmatprep.subr.mxu0 0.0
    %332 = vmatpush2.msra.mxu0 0.0
    %333 = vmatprep.subr.mxu0 0.0
    %334 = vmatpush2.msra.mxu0 0.0
    %335 = vmatprep.subr.mxu0 0.0
    %336 = vmatpush2.msra.mxu0 0.0
    %337 = vmatprep.subr.mxu0 0.0
    %338 = vmatpush2.msra.mxu0 0.0
    %339 = vmatprep.subr.mxu0 0.0
    %340 = vmatpush2.msra.mxu0 0.0
    %341 = vmatprep.subr.mxu0 0.0
    %342 = vmatpush2.msra.mxu0 0.0
    %343 = vmatprep.subr.mxu0 0.0
    %344 = vmatpush2.msra.mxu0 0.0
    %345 = vmatprep.subr.mxu0 0.0
    %346 = vmatpush2.msra.mxu0 0.0
    %347 = vmatprep.subr.mxu0 0.0
    %348 = vmatpush2.msra.mxu0 0.0
    %349 = vmatprep.subr.mxu0 0.0
    %350 = vmatpush2.msra.mxu0 0.0
    %351 = vmatprep.subr.mxu0 0.0
    %352 = vmatpush2.msra.mxu0 0.0
    %353 = vmatprep.subr.mxu0 0.0
    %354 = vmatpush2.msra.mxu0 0.0
    %355 = vmatprep.subr.mxu0 0.0
    %356 = vmatpush2.msra.mxu0 0.0
    %357 = vmatprep.mubr.f32.mxu0 0.0
    %358 = vmatmul.mubr.f32.gmra.mxu0 %v98
    %v359 = vpop.f32.mrf.mxu0
    %v360 = vadd.f32 0.0, %v359
    %v361 = vpop.f32.mrf.mxu0
    %362 = vmatprep.mubr.f32.mxu0 0.0
    %363 = vmatmul.mubr.f32.gmra.mxu0 %v101
    %v364 = vpop.f32.mrf.mxu0
    %v365 = vadd.f32 0.0, %v364
    %v366 = vpop.f32.mrf.mxu0
    %367 = vmatprep.mubr.f32.mxu0 0.0
    %368 = vmatmul.mubr.f32.gmra.mxu0 %v104
    %v369 = vpop.f32.mrf.mxu0
    %v370 = vadd.f32 0.0, %v369
    %v371 = vpop.f32.mrf.mxu0
    %372 = vmatprep.mubr.f32.mxu0 0.0
    %373 = vmatmul.mubr.f32.gmra.mxu0 %v107
    %v374 = vpop.f32.mrf.mxu0
    %v375 = vadd.f32 0.0, %v374
    %v376 = vpop.f32.mrf.mxu0
    %377 = vmatprep.mubr.f32.mxu0 0.0
    %378 = vmatmul.mubr.f32.gmra.mxu0 %v110
    %v379 = vpop.f32.mrf.mxu0
    %v380 = vadd.f32 0.0, %v379
    %v381 = vpop.f32.mrf.mxu0
    %382 = vmatprep.mubr.f32.mxu0 0.0
    %383 = vmatmul.mubr.f32.gmra.mxu0 %v113
    %v384 = vpop.f32.mrf.mxu0
    %v385 = vadd.f32 0.0, %v384
    %v386 = vpop.f32.mrf.mxu0
    %387 = vmatprep.mubr.f32.mxu0 0.0
    %388 = vmatmul.mubr.f32.gmra.mxu0 %v116
    %v389 = vpop.f32.mrf.mxu0
    %v390 = vadd.f32 0.0, %v389
    %v391 = vpop.f32.mrf.mxu0
    %392 = vmatprep.mubr.f32.mxu0 0.0
    %393 = vmatmul.mubr.f32.gmra.mxu0 %v119
    %v394 = vpop.f32.mrf.mxu0
    %v395 = vadd.f32 0.0, %v394
    %v396 = vpop.f32.mrf.mxu0
    %397 = vmatprep.mubr.f32.mxu0 0.0
    %398 = vmatmul.mubr.f32.gmra.mxu0 %v122
    %v399 = vpop.f32.mrf.mxu0
    %v400 = vadd.f32 0.0, %v399
    %v401 = vpop.f32.mrf.mxu0
    %402 = vmatprep.mubr.f32.mxu0 0.0
    %403 = vmatmul.mubr.f32.gmra.mxu0 %v125
    %v404 = vpop.f32.mrf.mxu0
    %v405 = vadd.f32 0.0, %v404
    %v406 = vpop.f32.mrf.mxu0
    %407 = vmatprep.mubr.f32.mxu0 0.0
    %408 = vmatmul.mubr.f32.gmra.mxu0 %v128
    %v409 = vpop.f32.mrf.mxu0
    %v410 = vadd.f32 0.0, %v409
    %v411 = vpop.f32.mrf.mxu0
    %412 = vmatprep.mubr.f32.mxu0 0.0
    %413 = vmatmul.mubr.f32.gmra.mxu0 %v131
    %v414 = vpop.f32.mrf.mxu0
    %v415 = vadd.f32 0.0, %v414
    %v416 = vpop.f32.mrf.mxu0
    %417 = vmatprep.mubr.f32.mxu0 0.0
    %418 = vmatmul.mubr.f32.gmra.mxu0 %v134
    %v419 = vpop.f32.mrf.mxu0
    %v420 = vadd.f32 0.0, %v419
    %v421 = vpop.f32.mrf.mxu0
    %422 = vmatprep.mubr.f32.mxu0 0.0
    %423 = vmatmul.mubr.f32.gmra.mxu0 %v137
    %v424 = vpop.f32.mrf.mxu0
    %v425 = vadd.f32 0.0, %v424
    %v426 = vpop.f32.mrf.mxu0
    %427 = vmatprep.mubr.f32.mxu0 0.0
    %428 = vmatmul.mubr.f32.gmra.mxu0 %v140
    %v429 = vpop.f32.mrf.mxu0
    %v430 = vadd.f32 0.0, %v429
    %v431 = vpop.f32.mrf.mxu0
    %432 = vmatprep.mubr.f32.mxu0 0.0
    %433 = vmatmul.mubr.f32.gmra.mxu0 %v143
    %v434 = vpop.f32.mrf.mxu0
    %v435 = vadd.f32 0.0, %v434
    %v436 = vpop.f32.mrf.mxu0
    %437 = vmatprep.mubr.f32.mxu0 0.0
    %438 = vmatmul.mubr.f32.gmra.mxu0 %v146
    %v439 = vpop.f32.mrf.mxu0
    %v440 = vadd.f32 0.0, %v439
    %v441 = vpop.f32.mrf.mxu0
    %442 = vmatprep.mubr.f32.mxu0 0.0
    %443 = vmatmul.mubr.f32.gmra.mxu0 %v149
    %v444 = vpop.f32.mrf.mxu0
    %v445 = vadd.f32 0.0, %v444
    %v446 = vpop.f32.mrf.mxu0
    %447 = vmatprep.mubr.f32.mxu0 0.0
    %448 = vmatmul.mubr.f32.gmra.mxu0 %v152
    %v449 = vpop.f32.mrf.mxu0
    %v450 = vadd.f32 0.0, %v449
    %v451 = vpop.f32.mrf.mxu0
    %452 = vmatprep.mubr.f32.mxu0 0.0
    %453 = vmatmul.mubr.f32.gmra.mxu0 %v155
    %v454 = vpop.f32.mrf.mxu0
    %v455 = vadd.f32 0.0, %v454
    %v456 = vpop.f32.mrf.mxu0
    %457 = vmatprep.mubr.f32.mxu0 0.0
    %458 = vmatmul.mubr.f32.gmra.mxu0 %v158
    %v459 = vpop.f32.mrf.mxu0
    %v460 = vadd.f32 0.0, %v459
    %v461 = vpop.f32.mrf.mxu0
    %462 = vmatprep.mubr.f32.mxu0 0.0
    %463 = vmatmul.mubr.f32.gmra.mxu0 %v161
    %v464 = vpop.f32.mrf.mxu0
    %v465 = vadd.f32 0.0, %v464
    %v466 = vpop.f32.mrf.mxu0
    %467 = vmatprep.mubr.f32.mxu0 0.0
    %468 = vmatmul.mubr.f32.gmra.mxu0 %v164
    %v469 = vpop.f32.mrf.mxu0
    %v470 = vadd.f32 0.0, %v469
    %v471 = vpop.f32.mrf.mxu0
    %472 = vmatprep.mubr.f32.mxu0 0.0
    %473 = vmatmul.mubr.f32.gmra.mxu0 %v167
    %v474 = vpop.f32.mrf.mxu0
    %v475 = vadd.f32 0.0, %v474
    %v476 = vpop.f32.mrf.mxu0
    %477 = vmatprep.mubr.f32.mxu0 0.0
    %478 = vmatmul.mubr.f32.gmra.mxu0 %v170
    %v479 = vpop.f32.mrf.mxu0
    %v480 = vadd.f32 0.0, %v479
    %v481 = vpop.f32.mrf.mxu0
    %482 = vmatprep.mubr.f32.mxu0 0.0
    %483 = vmatmul.mubr.f32.gmra.mxu0 %v173
    %v484 = vpop.f32.mrf.mxu0
    %v485 = vadd.f32 0.0, %v484
    %v486 = vpop.f32.mrf.mxu0
    %487 = vmatprep.mubr.f32.mxu0 0.0
    %488 = vmatmul.mubr.f32.gmra.mxu0 %v176
    %v489 = vpop.f32.mrf.mxu0
    %v490 = vadd.f32 0.0, %v489
    %v491 = vpop.f32.mrf.mxu0
    %492 = vmatprep.mubr.f32.mxu0 0.0
    %493 = vmatmul.mubr.f32.gmra.mxu0 %v179
    %v494 = vpop.f32.mrf.mxu0
    %v495 = vadd.f32 0.0, %v494
    %v496 = vpop.f32.mrf.mxu0
    %497 = vmatprep.mubr.f32.mxu0 0.0
    %498 = vmatmul.mubr.f32.gmra.mxu0 %v182
    %v499 = vpop.f32.mrf.mxu0
    %v500 = vadd.f32 0.0, %v499
    %v501 = vpop.f32.mrf.mxu0
    %502 = vmatprep.mubr.f32.mxu0 0.0
    %503 = vmatmul.mubr.f32.gmra.mxu0 %v185
    %v504 = vpop.f32.mrf.mxu0
    %v505 = vadd.f32 0.0, %v504
    %v506 = vpop.f32.mrf.mxu0
    %507 = vmatprep.mubr.f32.mxu0 0.0
    %508 = vmatmul.mubr.f32.gmra.mxu0 %v188
    %v509 = vpop.f32.mrf.mxu0
    %v510 = vadd.f32 0.0, %v509
    %v511 = vpop.f32.mrf.mxu0
    %512 = vmatprep.mubr.f32.mxu0 0.0
    %513 = vmatmul.mubr.f32.gmra.mxu0 %v191
    %v514 = vpop.f32.mrf.mxu0
    %v515 = vadd.f32 0.0, %v514
    %v516 = vpop.f32.mrf.mxu0
    %517 = vmatprep.mubr.f32.mxu0 0.0
    %518 = vmatmul.mubr.f32.gmra.mxu0 %v194
    %v519 = vpop.f32.mrf.mxu0
    %v520 = vadd.f32 0.0, %v519
    %v521 = vpop.f32.mrf.mxu0
    %522 = vmatprep.mubr.f32.mxu0 0.0
    %523 = vmatmul.mubr.f32.gmra.mxu0 %v197
    %v524 = vpop.f32.mrf.mxu0
    %v525 = vadd.f32 0.0, %v524
    %v526 = vpop.f32.mrf.mxu0
    %527 = vmatprep.mubr.f32.mxu0 0.0
    %528 = vmatmul.mubr.f32.gmra.mxu0 %v200
    %v529 = vpop.f32.mrf.mxu0
    %v530 = vadd.f32 0.0, %v529
    %v531 = vpop.f32.mrf.mxu0
    %532 = vmatprep.mubr.f32.mxu0 0.0
    %533 = vmatmul.mubr.f32.gmra.mxu0 %v203
    %v534 = vpop.f32.mrf.mxu0
    %v535 = vadd.f32 0.0, %v534
    %v536 = vpop.f32.mrf.mxu0
    %537 = vmatprep.mubr.f32.mxu0 0.0
    %538 = vmatmul.mubr.f32.gmra.mxu0 %v206
    %v539 = vpop.f32.mrf.mxu0
    %v540 = vadd.f32 0.0, %v539
    %v541 = vpop.f32.mrf.mxu0
    %542 = vmatprep.mubr.f32.mxu0 0.0
    %543 = vmatmul.mubr.f32.gmra.mxu0 %v209
    %v544 = vpop.f32.mrf.mxu0
    %v545 = vadd.f32 0.0, %v544
    %v546 = vpop.f32.mrf.mxu0
    %547 = vmatprep.mubr.f32.mxu0 0.0
    %548 = vmatmul.mubr.f32.gmra.mxu0 %v212
    %v549 = vpop.f32.mrf.mxu0
    %v550 = vadd.f32 0.0, %v549
    %v551 = vpop.f32.mrf.mxu0
    %552 = vmatprep.mubr.f32.mxu0 0.0
    %553 = vmatmul.mubr.f32.gmra.mxu0 %v215
    %v554 = vpop.f32.mrf.mxu0
    %v555 = vadd.f32 0.0, %v554
    %v556 = vpop.f32.mrf.mxu0
    %557 = vmatprep.mubr.f32.mxu0 0.0
    %558 = vmatmul.mubr.f32.gmra.mxu0 %v218
    %v559 = vpop.f32.mrf.mxu0
    %v560 = vadd.f32 0.0, %v559
    %v561 = vpop.f32.mrf.mxu0
    %562 = vmatprep.mubr.f32.mxu0 0.0
    %563 = vmatmul.mubr.f32.gmra.mxu0 %v221
    %v564 = vpop.f32.mrf.mxu0
    %v565 = vadd.f32 0.0, %v564
    %v566 = vpop.f32.mrf.mxu0
    %567 = vmatprep.mubr.f32.mxu0 0.0
    %568 = vmatmul.mubr.f32.gmra.mxu0 %v224
    %v569 = vpop.f32.mrf.mxu0
    %v570 = vadd.f32 0.0, %v569
    %v571 = vpop.f32.mrf.mxu0
    %572 = vmatprep.mubr.f32.mxu0 0.0
    %573 = vmatmul.mubr.f32.gmra.mxu0 %v227
    %v574 = vpop.f32.mrf.mxu0
    %v575 = vadd.f32 0.0, %v574
    %v576 = vpop.f32.mrf.mxu0
    %577 = vmatprep.mubr.f32.mxu0 0.0
    %578 = vmatmul.mubr.f32.gmra.mxu0 %v230
    %v579 = vpop.f32.mrf.mxu0
    %v580 = vadd.f32 0.0, %v579
    %v581 = vpop.f32.mrf.mxu0
    %582 = vmatprep.mubr.f32.mxu0 0.0
    %583 = vmatmul.mubr.f32.gmra.mxu0 %v233
    %v584 = vpop.f32.mrf.mxu0
    %v585 = vadd.f32 0.0, %v584
    %v586 = vpop.f32.mrf.mxu0
    %587 = vmatprep.mubr.f32.mxu0 0.0
    %588 = vmatmul.mubr.f32.gmra.mxu0 %v236
    %v589 = vpop.f32.mrf.mxu0
    %v590 = vadd.f32 0.0, %v589
    %v591 = vpop.f32.mrf.mxu0
    %592 = vmatprep.mubr.f32.mxu0 0.0
    %593 = vmatmul.mubr.f32.gmra.mxu0 %v239
    %v594 = vpop.f32.mrf.mxu0
    %v595 = vadd.f32 0.0, %v594
    %v596 = vpop.f32.mrf.mxu0
    %597 = vmatprep.mubr.f32.mxu0 0.0
    %598 = vmatmul.mubr.f32.gmra.mxu0 %v242
    %v599 = vpop.f32.mrf.mxu0
    %v600 = vadd.f32 0.0, %v599
    %v601 = vpop.f32.mrf.mxu0
    %602 = vmatprep.mubr.f32.mxu0 0.0
    %603 = vmatmul.mubr.f32.gmra.mxu0 %v245
    %v604 = vpop.f32.mrf.mxu0
    %v605 = vadd.f32 0.0, %v604
    %v606 = vpop.f32.mrf.mxu0
    %607 = vmatprep.mubr.f32.mxu0 0.0
    %608 = vmatmul.mubr.f32.gmra.mxu0 %v248
    %v609 = vpop.f32.mrf.mxu0
    %v610 = vadd.f32 0.0, %v609
    %v611 = vpop.f32.mrf.mxu0
    %612 = vmatprep.mubr.f32.mxu0 0.0
    %613 = vmatmul.mubr.f32.gmra.mxu0 %v251
    %v614 = vpop.f32.mrf.mxu0
    %v615 = vadd.f32 0.0, %v614
    %v616 = vpop.f32.mrf.mxu0
    %617 = vmatprep.mubr.f32.mxu0 0.0
    %618 = vmatmul.mubr.f32.gmra.mxu0 %v254
    %v619 = vpop.f32.mrf.mxu0
    %v620 = vadd.f32 0.0, %v619
    %v621 = vpop.f32.mrf.mxu0
    %622 = vmatprep.mubr.f32.mxu0 0.0
    %623 = vmatmul.mubr.f32.gmra.mxu0 %v257
    %v624 = vpop.f32.mrf.mxu0
    %v625 = vadd.f32 0.0, %v624
    %v626 = vpop.f32.mrf.mxu0
    %627 = vmatprep.mubr.f32.mxu0 0.0
    %628 = vmatmul.mubr.f32.gmra.mxu0 %v260
    %v629 = vpop.f32.mrf.mxu0
    %v630 = vadd.f32 0.0, %v629
    %v631 = vpop.f32.mrf.mxu0
    %632 = vmatprep.mubr.f32.mxu0 0.0
    %633 = vmatmul.mubr.f32.gmra.mxu0 %v263
    %v634 = vpop.f32.mrf.mxu0
    %v635 = vadd.f32 0.0, %v634
    %v636 = vpop.f32.mrf.mxu0
    %637 = vmatprep.mubr.f32.mxu0 0.0
    %638 = vmatmul.mubr.f32.gmra.mxu0 %v266
    %v639 = vpop.f32.mrf.mxu0
    %v640 = vadd.f32 0.0, %v639
    %v641 = vpop.f32.mrf.mxu0
    %642 = vmatprep.mubr.f32.mxu0 0.0
    %643 = vmatmul.mubr.f32.gmra.mxu0 %v269
    %v644 = vpop.f32.mrf.mxu0
    %v645 = vadd.f32 0.0, %v644
    %v646 = vpop.f32.mrf.mxu0
    %647 = vmatprep.mubr.f32.mxu0 0.0
    %648 = vmatmul.mubr.f32.gmra.mxu0 %v272
    %v649 = vpop.f32.mrf.mxu0
    %v650 = vadd.f32 0.0, %v649
    %v651 = vpop.f32.mrf.mxu0
    %652 = vmatprep.mubr.f32.mxu0 0.0
    %653 = vmatmul.mubr.f32.gmra.mxu0 %v275
    %v654 = vpop.f32.mrf.mxu0
    %v655 = vadd.f32 0.0, %v654
    %v656 = vpop.f32.mrf.mxu0
    %657 = vmatprep.mubr.f32.mxu0 0.0
    %658 = vmatmul.mubr.f32.gmra.mxu0 %v278
    %v659 = vpop.f32.mrf.mxu0
    %v660 = vadd.f32 0.0, %v659
    %v661 = vpop.f32.mrf.mxu0
    %662 = vmatprep.mubr.f32.mxu0 0.0
    %663 = vmatmul.mubr.f32.gmra.mxu0 %v281
    %v664 = vpop.f32.mrf.mxu0
    %v665 = vadd.f32 0.0, %v664
    %v666 = vpop.f32.mrf.mxu0
    %667 = vmatprep.mubr.f32.mxu0 0.0
    %668 = vmatmul.mubr.f32.gmra.mxu0 %v284
    %v669 = vpop.f32.mrf.mxu0
    %v670 = vadd.f32 0.0, %v669
    %v671 = vpop.f32.mrf.mxu0
    %672 = vmatprep.mubr.f32.mxu0 0.0
    %673 = vmatmul.mubr.f32.gmra.mxu0 %v287
    %v674 = vpop.f32.mrf.mxu0
    %v675 = vadd.f32 0.0, %v674
    %v676 = vpop.f32.mrf.mxu0
    %677 = vdwg.mxu0
    %vm678 = vcmask 64512
    %v679 = vsel %vm678, %v360, 0.0
    %v680 = vsel %vm678, %v365, 0.0
    %v681 = vadd.f32 %v679, %v680
    %v682 = vsel %vm678, %v370, 0.0
    %v683 = vadd.f32 %v681, %v682
    %v684 = vsel %vm678, %v375, 0.0
    %v685 = vadd.f32 %v683, %v684
    %v686 = vsel %vm678, %v380, 0.0
    %v687 = vadd.f32 %v685, %v686
    %v688 = vsel %vm678, %v385, 0.0
    %v689 = vadd.f32 %v687, %v688
    %v690 = vsel %vm678, %v390, 0.0
    %v691 = vadd.f32 %v689, %v690
    %v692 = vsel %vm678, %v395, 0.0
    %v693 = vadd.f32 %v691, %v692
    %v694 = vsel %vm678, %v400, 0.0
    %v695 = vadd.f32 %v693, %v694
    %v696 = vsel %vm678, %v405, 0.0
    %v697 = vadd.f32 %v695, %v696
    %v698 = vsel %vm678, %v410, 0.0
    %v699 = vadd.f32 %v697, %v698
    %v700 = vsel %vm678, %v415, 0.0
    %v701 = vadd.f32 %v699, %v700
    %v702 = vsel %vm678, %v420, 0.0
    %v703 = vadd.f32 %v701, %v702
    %v704 = vsel %vm678, %v425, 0.0
    %v705 = vadd.f32 %v703, %v704
    %v706 = vsel %vm678, %v430, 0.0
    %v707 = vadd.f32 %v705, %v706
    %v708 = vsel %vm678, %v435, 0.0
    %v709 = vadd.f32 %v707, %v708
    %v710 = vsel %vm678, %v440, 0.0
    %v711 = vadd.f32 %v709, %v710
    %v712 = vsel %vm678, %v445, 0.0
    %v713 = vadd.f32 %v711, %v712
    %v714 = vsel %vm678, %v450, 0.0
    %v715 = vadd.f32 %v713, %v714
    %v716 = vsel %vm678, %v455, 0.0
    %v717 = vadd.f32 %v715, %v716
    %v718 = vsel %vm678, %v460, 0.0
    %v719 = vadd.f32 %v717, %v718
    %v720 = vsel %vm678, %v465, 0.0
    %v721 = vadd.f32 %v719, %v720
    %v722 = vsel %vm678, %v470, 0.0
    %v723 = vadd.f32 %v721, %v722
    %v724 = vsel %vm678, %v475, 0.0
    %v725 = vadd.f32 %v723, %v724
    %v726 = vsel %vm678, %v480, 0.0
    %v727 = vadd.f32 %v725, %v726
    %v728 = vsel %vm678, %v485, 0.0
    %v729 = vadd.f32 %v727, %v728
    %v730 = vsel %vm678, %v490, 0.0
    %v731 = vadd.f32 %v729, %v730
    %v732 = vsel %vm678, %v495, 0.0
    %v733 = vadd.f32 %v731, %v732
    %v734 = vsel %vm678, %v500, 0.0
    %v735 = vadd.f32 %v733, %v734
    %v736 = vsel %vm678, %v505, 0.0
    %v737 = vadd.f32 %v735, %v736
    %v738 = vsel %vm678, %v510, 0.0
    %v739 = vadd.f32 %v737, %v738
    %v740 = vsel %vm678, %v515, 0.0
    %v741 = vadd.f32 %v739, %v740
    %v742 = vsel %vm678, %v520, 0.0
    %v743 = vadd.f32 %v741, %v742
    %v744 = vsel %vm678, %v525, 0.0
    %v745 = vadd.f32 %v743, %v744
    %v746 = vsel %vm678, %v530, 0.0
    %v747 = vadd.f32 %v745, %v746
    %v748 = vsel %vm678, %v535, 0.0
    %v749 = vadd.f32 %v747, %v748
    %v750 = vsel %vm678, %v540, 0.0
    %v751 = vadd.f32 %v749, %v750
    %v752 = vsel %vm678, %v545, 0.0
    %v753 = vadd.f32 %v751, %v752
    %v754 = vsel %vm678, %v550, 0.0
    %v755 = vadd.f32 %v753, %v754
    %v756 = vsel %vm678, %v555, 0.0
    %v757 = vadd.f32 %v755, %v756
    %v758 = vsel %vm678, %v560, 0.0
    %v759 = vadd.f32 %v757, %v758
    %v760 = vsel %vm678, %v565, 0.0
    %v761 = vadd.f32 %v759, %v760
    %v762 = vsel %vm678, %v570, 0.0
    %v763 = vadd.f32 %v761, %v762
    %v764 = vsel %vm678, %v575, 0.0
    %v765 = vadd.f32 %v763, %v764
    %v766 = vsel %vm678, %v580, 0.0
    %v767 = vadd.f32 %v765, %v766
    %v768 = vsel %vm678, %v585, 0.0
    %v769 = vadd.f32 %v767, %v768
    %v770 = vsel %vm678, %v590, 0.0
    %v771 = vadd.f32 %v769, %v770
    %v772 = vsel %vm678, %v595, 0.0
    %v773 = vadd.f32 %v771, %v772
    %v774 = vsel %vm678, %v600, 0.0
    %v775 = vadd.f32 %v773, %v774
    %v776 = vsel %vm678, %v605, 0.0
    %v777 = vadd.f32 %v775, %v776
    %v778 = vsel %vm678, %v610, 0.0
    %v779 = vadd.f32 %v777, %v778
    %v780 = vsel %vm678, %v615, 0.0
    %v781 = vadd.f32 %v779, %v780
    %v782 = vsel %vm678, %v620, 0.0
    %v783 = vadd.f32 %v781, %v782
    %v784 = vsel %vm678, %v625, 0.0
    %v785 = vadd.f32 %v783, %v784
    %v786 = vsel %vm678, %v630, 0.0
    %v787 = vadd.f32 %v785, %v786
    %v788 = vsel %vm678, %v635, 0.0
    %v789 = vadd.f32 %v787, %v788
    %v790 = vsel %vm678, %v640, 0.0
    %v791 = vadd.f32 %v789, %v790
    %v792 = vsel %vm678, %v645, 0.0
    %v793 = vadd.f32 %v791, %v792
    %v794 = vsel %vm678, %v650, 0.0
    %v795 = vadd.f32 %v793, %v794
    %v796 = vsel %vm678, %v655, 0.0
    %v797 = vadd.f32 %v795, %v796
    %v798 = vsel %vm678, %v660, 0.0
    %v799 = vadd.f32 %v797, %v798
    %v800 = vsel %vm678, %v665, 0.0
    %v801 = vadd.f32 %v799, %v800
    %v802 = vsel %vm678, %v670, 0.0
    %v803 = vadd.f32 %v801, %v802
    %v804 = vsel %vm678, %v675, 0.0
    %v805 = vadd.f32 %v803, %v804
    %v806 = vrot.slane %v805, 4
    %v807 = vadd.f32 %v805, %v806
    %v808 = vrot.slane %v807, 2
    %v809 = vadd.f32 %v807, %v808
    %v810 = vrot.slane %v809, 1
    %v811 = vadd.f32 %v809, %v810
    %v812 = vmul.f32 %v811, 0.001953125
    %v813 = vmul.f32 %v360, %v360
    %v814 = vmul.f32 %v365, %v365
    %v815 = vmul.f32 %v370, %v370
    %v816 = vmul.f32 %v375, %v375
    %v817 = vmul.f32 %v380, %v380
    %v818 = vmul.f32 %v385, %v385
    %v819 = vmul.f32 %v390, %v390
    %v820 = vmul.f32 %v395, %v395
    %v821 = vmul.f32 %v400, %v400
    %v822 = vmul.f32 %v405, %v405
    %v823 = vmul.f32 %v410, %v410
    %v824 = vmul.f32 %v415, %v415
    %v825 = vmul.f32 %v420, %v420
    %v826 = vmul.f32 %v425, %v425
    %v827 = vmul.f32 %v430, %v430
    %v828 = vmul.f32 %v435, %v435
    %v829 = vmul.f32 %v440, %v440
    %v830 = vmul.f32 %v445, %v445
    %v831 = vmul.f32 %v450, %v450
    %v832 = vmul.f32 %v455, %v455
    %v833 = vmul.f32 %v460, %v460
    %v834 = vmul.f32 %v465, %v465
    %v835 = vmul.f32 %v470, %v470
    %v836 = vmul.f32 %v475, %v475
    %v837 = vmul.f32 %v480, %v480
    %v838 = vmul.f32 %v485, %v485
    %v839 = vmul.f32 %v490, %v490
    %v840 = vmul.f32 %v495, %v495
    %v841 = vmul.f32 %v500, %v500
    %v842 = vmul.f32 %v505, %v505
    %v843 = vmul.f32 %v510, %v510
    %v844 = vmul.f32 %v515, %v515
    %v845 = vmul.f32 %v520, %v520
    %v846 = vmul.f32 %v525, %v525
    %v847 = vmul.f32 %v530, %v530
    %v848 = vmul.f32 %v535, %v535
    %v849 = vmul.f32 %v540, %v540
    %v850 = vmul.f32 %v545, %v545
    %v851 = vmul.f32 %v550, %v550
    %v852 = vmul.f32 %v555, %v555
    %v853 = vmul.f32 %v560, %v560
    %v854 = vmul.f32 %v565, %v565
    %v855 = vmul.f32 %v570, %v570
    %v856 = vmul.f32 %v575, %v575
    %v857 = vmul.f32 %v580, %v580
    %v858 = vmul.f32 %v585, %v585
    %v859 = vmul.f32 %v590, %v590
    %v860 = vmul.f32 %v595, %v595
    %v861 = vmul.f32 %v600, %v600
    %v862 = vmul.f32 %v605, %v605
    %v863 = vmul.f32 %v610, %v610
    %v864 = vmul.f32 %v615, %v615
    %v865 = vmul.f32 %v620, %v620
    %v866 = vmul.f32 %v625, %v625
    %v867 = vmul.f32 %v630, %v630
    %v868 = vmul.f32 %v635, %v635
    %v869 = vmul.f32 %v640, %v640
    %v870 = vmul.f32 %v645, %v645
    %v871 = vmul.f32 %v650, %v650
    %v872 = vmul.f32 %v655, %v655
    %v873 = vmul.f32 %v660, %v660
    %v874 = vmul.f32 %v665, %v665
    %v875 = vmul.f32 %v670, %v670
    %v876 = vmul.f32 %v675, %v675
    %v877 = vsel %vm678, %v813, 0.0
    %v878 = vsel %vm678, %v814, 0.0
    %v879 = vadd.f32 %v877, %v878
    %v880 = vsel %vm678, %v815, 0.0
    %v881 = vadd.f32 %v879, %v880
    %v882 = vsel %vm678, %v816, 0.0
    %v883 = vadd.f32 %v881, %v882
    %v884 = vsel %vm678, %v817, 0.0
    %v885 = vadd.f32 %v883, %v884
    %v886 = vsel %vm678, %v818, 0.0
    %v887 = vadd.f32 %v885, %v886
    %v888 = vsel %vm678, %v819, 0.0
    %v889 = vadd.f32 %v887, %v888
    %v890 = vsel %vm678, %v820, 0.0
    %v891 = vadd.f32 %v889, %v890
    %v892 = vsel %vm678, %v821, 0.0
    %v893 = vadd.f32 %v891, %v892
    %v894 = vsel %vm678, %v822, 0.0
    %v895 = vadd.f32 %v893, %v894
    %v896 = vsel %vm678, %v823, 0.0
    %v897 = vadd.f32 %v895, %v896
    %v898 = vsel %vm678, %v824, 0.0
    %v899 = vadd.f32 %v897, %v898
    %v900 = vsel %vm678, %v825, 0.0
    %v901 = vadd.f32 %v899, %v900
    %v902 = vsel %vm678, %v826, 0.0
    %v903 = vadd.f32 %v901, %v902
    %v904 = vsel %vm678, %v827, 0.0
    %v905 = vadd.f32 %v903, %v904
    %v906 = vsel %vm678, %v828, 0.0
    %v907 = vadd.f32 %v905, %v906
    %v908 = vsel %vm678, %v829, 0.0
    %v909 = vadd.f32 %v907, %v908
    %v910 = vsel %vm678, %v830, 0.0
    %v911 = vadd.f32 %v909, %v910
    %v912 = vsel %vm678, %v831, 0.0
    %v913 = vadd.f32 %v911, %v912
    %v914 = vsel %vm678, %v832, 0.0
    %v915 = vadd.f32 %v913, %v914
    %v916 = vsel %vm678, %v833, 0.0
    %v917 = vadd.f32 %v915, %v916
    %v918 = vsel %vm678, %v834, 0.0
    %v919 = vadd.f32 %v917, %v918
    %v920 = vsel %vm678, %v835, 0.0
    %v921 = vadd.f32 %v919, %v920
    %v922 = vsel %vm678, %v836, 0.0
    %v923 = vadd.f32 %v921, %v922
    %v924 = vsel %vm678, %v837, 0.0
    %v925 = vadd.f32 %v923, %v924
    %v926 = vsel %vm678, %v838, 0.0
    %v927 = vadd.f32 %v925, %v926
    %v928 = vsel %vm678, %v839, 0.0
    %v929 = vadd.f32 %v927, %v928
    %v930 = vsel %vm678, %v840, 0.0
    %v931 = vadd.f32 %v929, %v930
    %v932 = vsel %vm678, %v841, 0.0
    %v933 = vadd.f32 %v931, %v932
    %v934 = vsel %vm678, %v842, 0.0
    %v935 = vadd.f32 %v933, %v934
    %v936 = vsel %vm678, %v843, 0.0
    %v937 = vadd.f32 %v935, %v936
    %v938 = vsel %vm678, %v844, 0.0
    %v939 = vadd.f32 %v937, %v938
    %v940 = vsel %vm678, %v845, 0.0
    %v941 = vadd.f32 %v939, %v940
    %v942 = vsel %vm678, %v846, 0.0
    %v943 = vadd.f32 %v941, %v942
    %v944 = vsel %vm678, %v847, 0.0
    %v945 = vadd.f32 %v943, %v944
    %v946 = vsel %vm678, %v848, 0.0
    %v947 = vadd.f32 %v945, %v946
    %v948 = vsel %vm678, %v849, 0.0
    %v949 = vadd.f32 %v947, %v948
    %v950 = vsel %vm678, %v850, 0.0
    %v951 = vadd.f32 %v949, %v950
    %v952 = vsel %vm678, %v851, 0.0
    %v953 = vadd.f32 %v951, %v952
    %v954 = vsel %vm678, %v852, 0.0
    %v955 = vadd.f32 %v953, %v954
    %v956 = vsel %vm678, %v853, 0.0
    %v957 = vadd.f32 %v955, %v956
    %v958 = vsel %vm678, %v854, 0.0
    %v959 = vadd.f32 %v957, %v958
    %v960 = vsel %vm678, %v855, 0.0
    %v961 = vadd.f32 %v959, %v960
    %v962 = vsel %vm678, %v856, 0.0
    %v963 = vadd.f32 %v961, %v962
    %v964 = vsel %vm678, %v857, 0.0
    %v965 = vadd.f32 %v963, %v964
    %v966 = vsel %vm678, %v858, 0.0
    %v967 = vadd.f32 %v965, %v966
    %v968 = vsel %vm678, %v859, 0.0
    %v969 = vadd.f32 %v967, %v968
    %v970 = vsel %vm678, %v860, 0.0
    %v971 = vadd.f32 %v969, %v970
    %v972 = vsel %vm678, %v861, 0.0
    %v973 = vadd.f32 %v971, %v972
    %v974 = vsel %vm678, %v862, 0.0
    %v975 = vadd.f32 %v973, %v974
    %v976 = vsel %vm678, %v863, 0.0
    %v977 = vadd.f32 %v975, %v976
    %v978 = vsel %vm678, %v864, 0.0
    %v979 = vadd.f32 %v977, %v978
    %v980 = vsel %vm678, %v865, 0.0
    %v981 = vadd.f32 %v979, %v980
    %v982 = vsel %vm678, %v866, 0.0
    %v983 = vadd.f32 %v981, %v982
    %v984 = vsel %vm678, %v867, 0.0
    %v985 = vadd.f32 %v983, %v984
    %v986 = vsel %vm678, %v868, 0.0
    %v987 = vadd.f32 %v985, %v986
    %v988 = vsel %vm678, %v869, 0.0
    %v989 = vadd.f32 %v987, %v988
    %v990 = vsel %vm678, %v870, 0.0
    %v991 = vadd.f32 %v989, %v990
    %v992 = vsel %vm678, %v871, 0.0
    %v993 = vadd.f32 %v991, %v992
    %v994 = vsel %vm678, %v872, 0.0
    %v995 = vadd.f32 %v993, %v994
    %v996 = vsel %vm678, %v873, 0.0
    %v997 = vadd.f32 %v995, %v996
    %v998 = vsel %vm678, %v874, 0.0
    %v999 = vadd.f32 %v997, %v998
    %v1000 = vsel %vm678, %v875, 0.0
    %v1001 = vadd.f32 %v999, %v1000
    %v1002 = vsel %vm678, %v876, 0.0
    %v1003 = vadd.f32 %v1001, %v1002
    %v1004 = vrot.slane %v1003, 4
    %v1005 = vadd.f32 %v1003, %v1004
    %v1006 = vrot.slane %v1005, 2
    %v1007 = vadd.f32 %v1005, %v1006
    %v1008 = vrot.slane %v1007, 1
    %v1009 = vadd.f32 %v1007, %v1008
    %v1010 = vmul.f32 %v1009, 0.001953125
    %v1011 = vmul.f32 %v812, %v812
    %v1012 = vsub.f32 %v1010, %v1011
    %v1013 = vmax.f32 %v1012, 0.0
    %v1014 = vsub.f32 %v360, %v812
    %v1015 = vsub.f32 %v365, %v812
    %v1016 = vsub.f32 %v370, %v812
    %v1017 = vsub.f32 %v375, %v812
    %v1018 = vsub.f32 %v380, %v812
    %v1019 = vsub.f32 %v385, %v812
    %v1020 = vsub.f32 %v390, %v812
    %v1021 = vsub.f32 %v395, %v812
    %v1022 = vsub.f32 %v400, %v812
    %v1023 = vsub.f32 %v405, %v812
    %v1024 = vsub.f32 %v410, %v812
    %v1025 = vsub.f32 %v415, %v812
    %v1026 = vsub.f32 %v420, %v812
    %v1027 = vsub.f32 %v425, %v812
    %v1028 = vsub.f32 %v430, %v812
    %v1029 = vsub.f32 %v435, %v812
    %v1030 = vsub.f32 %v440, %v812
    %v1031 = vsub.f32 %v445, %v812
    %v1032 = vsub.f32 %v450, %v812
    %v1033 = vsub.f32 %v455, %v812
    %v1034 = vsub.f32 %v460, %v812
    %v1035 = vsub.f32 %v465, %v812
    %v1036 = vsub.f32 %v470, %v812
    %v1037 = vsub.f32 %v475, %v812
    %v1038 = vsub.f32 %v480, %v812
    %v1039 = vsub.f32 %v485, %v812
    %v1040 = vsub.f32 %v490, %v812
    %v1041 = vsub.f32 %v495, %v812
    %v1042 = vsub.f32 %v500, %v812
    %v1043 = vsub.f32 %v505, %v812
    %v1044 = vsub.f32 %v510, %v812
    %v1045 = vsub.f32 %v515, %v812
    %v1046 = vsub.f32 %v520, %v812
    %v1047 = vsub.f32 %v525, %v812
    %v1048 = vsub.f32 %v530, %v812
    %v1049 = vsub.f32 %v535, %v812
    %v1050 = vsub.f32 %v540, %v812
    %v1051 = vsub.f32 %v545, %v812
    %v1052 = vsub.f32 %v550, %v812
    %v1053 = vsub.f32 %v555, %v812
    %v1054 = vsub.f32 %v560, %v812
    %v1055 = vsub.f32 %v565, %v812
    %v1056 = vsub.f32 %v570, %v812
    %v1057 = vsub.f32 %v575, %v812
    %v1058 = vsub.f32 %v580, %v812
    %v1059 = vsub.f32 %v585, %v812
    %v1060 = vsub.f32 %v590, %v812
    %v1061 = vsub.f32 %v595, %v812
    %v1062 = vsub.f32 %v600, %v812
    %v1063 = vsub.f32 %v605, %v812
    %v1064 = vsub.f32 %v610, %v812
    %v1065 = vsub.f32 %v615, %v812
    %v1066 = vsub.f32 %v620, %v812
    %v1067 = vsub.f32 %v625, %v812
    %v1068 = vsub.f32 %v630, %v812
    %v1069 = vsub.f32 %v635, %v812
    %v1070 = vsub.f32 %v640, %v812
    %v1071 = vsub.f32 %v645, %v812
    %v1072 = vsub.f32 %v650, %v812
    %v1073 = vsub.f32 %v655, %v812
    %v1074 = vsub.f32 %v660, %v812
    %v1075 = vsub.f32 %v665, %v812
    %v1076 = vsub.f32 %v670, %v812
    %v1077 = vsub.f32 %v675, %v812
    %v1078 = vadd.f32 %v1013, 1e-05
    %v1079 = vrsqrt.pop %v1078
    %v1080 = vmul.f32 %v1014, %v1079
    %v1081 = vmul.f32 %v1015, %v1079
    %v1082 = vmul.f32 %v1016, %v1079
    %v1083 = vmul.f32 %v1017, %v1079
    %v1084 = vmul.f32 %v1018, %v1079
    %v1085 = vmul.f32 %v1019, %v1079
    %v1086 = vmul.f32 %v1020, %v1079
    %v1087 = vmul.f32 %v1021, %v1079
    %v1088 = vmul.f32 %v1022, %v1079
    %v1089 = vmul.f32 %v1023, %v1079
    %v1090 = vmul.f32 %v1024, %v1079
    %v1091 = vmul.f32 %v1025, %v1079
    %v1092 = vmul.f32 %v1026, %v1079
    %v1093 = vmul.f32 %v1027, %v1079
    %v1094 = vmul.f32 %v1028, %v1079
    %v1095 = vmul.f32 %v1029, %v1079
    %v1096 = vmul.f32 %v1030, %v1079
    %v1097 = vmul.f32 %v1031, %v1079
    %v1098 = vmul.f32 %v1032, %v1079
    %v1099 = vmul.f32 %v1033, %v1079
    %v1100 = vmul.f32 %v1034, %v1079
    %v1101 = vmul.f32 %v1035, %v1079
    %v1102 = vmul.f32 %v1036, %v1079
    %v1103 = vmul.f32 %v1037, %v1079
    %v1104 = vmul.f32 %v1038, %v1079
    %v1105 = vmul.f32 %v1039, %v1079
    %v1106 = vmul.f32 %v1040, %v1079
    %v1107 = vmul.f32 %v1041, %v1079
    %v1108 = vmul.f32 %v1042, %v1079
    %v1109 = vmul.f32 %v1043, %v1079
    %v1110 = vmul.f32 %v1044, %v1079
    %v1111 = vmul.f32 %v1045, %v1079
    %v1112 = vmul.f32 %v1046, %v1079
    %v1113 = vmul.f32 %v1047, %v1079
    %v1114 = vmul.f32 %v1048, %v1079
    %v1115 = vmul.f32 %v1049, %v1079
    %v1116 = vmul.f32 %v1050, %v1079
    %v1117 = vmul.f32 %v1051, %v1079
    %v1118 = vmul.f32 %v1052, %v1079
    %v1119 = vmul.f32 %v1053, %v1079
    %v1120 = vmul.f32 %v1054, %v1079
    %v1121 = vmul.f32 %v1055, %v1079
    %v1122 = vmul.f32 %v1056, %v1079
    %v1123 = vmul.f32 %v1057, %v1079
    %v1124 = vmul.f32 %v1058, %v1079
    %v1125 = vmul.f32 %v1059, %v1079
    %v1126 = vmul.f32 %v1060, %v1079
    %v1127 = vmul.f32 %v1061, %v1079
    %v1128 = vmul.f32 %v1062, %v1079
    %v1129 = vmul.f32 %v1063, %v1079
    %v1130 = vmul.f32 %v1064, %v1079
    %v1131 = vmul.f32 %v1065, %v1079
    %v1132 = vmul.f32 %v1066, %v1079
    %v1133 = vmul.f32 %v1067, %v1079
    %v1134 = vmul.f32 %v1068, %v1079
    %v1135 = vmul.f32 %v1069, %v1079
    %v1136 = vmul.f32 %v1070, %v1079
    %v1137 = vmul.f32 %v1071, %v1079
    %v1138 = vmul.f32 %v1072, %v1079
    %v1139 = vmul.f32 %v1073, %v1079
    %v1140 = vmul.f32 %v1074, %v1079
    %v1141 = vmul.f32 %v1075, %v1079
    %v1142 = vmul.f32 %v1076, %v1079
    %v1143 = vmul.f32 %v1077, %v1079
    %v1144 = vld [vmem:[%s2] sm:$0x1]
    %v1146 = vlaneseq
    %v1147 = vshrl.u32 %v1146, 7
    %v1148 = vsub.s32 0, %v1147
    %v1149 = vrot.slane %v1144, %v1148
    %v1151 = vmul.f32 %v1080, %v1149
    %v1152 = vmul.f32 %v1081, %v1149
    %v1153 = vmul.f32 %v1082, %v1149
    %v1154 = vmul.f32 %v1083, %v1149
    %v1155 = vmul.f32 %v1084, %v1149
    %v1156 = vmul.f32 %v1085, %v1149
    %v1157 = vmul.f32 %v1086, %v1149
    %v1158 = vmul.f32 %v1087, %v1149
    %v1159 = vmul.f32 %v1088, %v1149
    %v1160 = vmul.f32 %v1089, %v1149
    %v1161 = vmul.f32 %v1090, %v1149
    %v1162 = vmul.f32 %v1091, %v1149
    %v1163 = vmul.f32 %v1092, %v1149
    %v1164 = vmul.f32 %v1093, %v1149
    %v1165 = vmul.f32 %v1094, %v1149
    %v1166 = vmul.f32 %v1095, %v1149
    %v1167 = vmul.f32 %v1096, %v1149
    %v1168 = vmul.f32 %v1097, %v1149
    %v1169 = vmul.f32 %v1098, %v1149
    %v1170 = vmul.f32 %v1099, %v1149
    %v1171 = vmul.f32 %v1100, %v1149
    %v1172 = vmul.f32 %v1101, %v1149
    %v1173 = vmul.f32 %v1102, %v1149
    %v1174 = vmul.f32 %v1103, %v1149
    %v1175 = vmul.f32 %v1104, %v1149
    %v1176 = vmul.f32 %v1105, %v1149
    %v1177 = vmul.f32 %v1106, %v1149
    %v1178 = vmul.f32 %v1107, %v1149
    %v1179 = vmul.f32 %v1108, %v1149
    %v1180 = vmul.f32 %v1109, %v1149
    %v1181 = vmul.f32 %v1110, %v1149
    %v1182 = vmul.f32 %v1111, %v1149
    %v1183 = vmul.f32 %v1112, %v1149
    %v1184 = vmul.f32 %v1113, %v1149
    %v1185 = vmul.f32 %v1114, %v1149
    %v1186 = vmul.f32 %v1115, %v1149
    %v1187 = vmul.f32 %v1116, %v1149
    %v1188 = vmul.f32 %v1117, %v1149
    %v1189 = vmul.f32 %v1118, %v1149
    %v1190 = vmul.f32 %v1119, %v1149
    %v1191 = vmul.f32 %v1120, %v1149
    %v1192 = vmul.f32 %v1121, %v1149
    %v1193 = vmul.f32 %v1122, %v1149
    %v1194 = vmul.f32 %v1123, %v1149
    %v1195 = vmul.f32 %v1124, %v1149
    %v1196 = vmul.f32 %v1125, %v1149
    %v1197 = vmul.f32 %v1126, %v1149
    %v1198 = vmul.f32 %v1127, %v1149
    %v1199 = vmul.f32 %v1128, %v1149
    %v1200 = vmul.f32 %v1129, %v1149
    %v1201 = vmul.f32 %v1130, %v1149
    %v1202 = vmul.f32 %v1131, %v1149
    %v1203 = vmul.f32 %v1132, %v1149
    %v1204 = vmul.f32 %v1133, %v1149
    %v1205 = vmul.f32 %v1134, %v1149
    %v1206 = vmul.f32 %v1135, %v1149
    %v1207 = vmul.f32 %v1136, %v1149
    %v1208 = vmul.f32 %v1137, %v1149
    %v1209 = vmul.f32 %v1138, %v1149
    %v1210 = vmul.f32 %v1139, %v1149
    %v1211 = vmul.f32 %v1140, %v1149
    %v1212 = vmul.f32 %v1141, %v1149
    %v1213 = vmul.f32 %v1142, %v1149
    %v1214 = vmul.f32 %v1143, %v1149
    %v1215 = vld [vmem:[%s3] sm:$0x1]
    %v1217 = vlaneseq
    %v1218 = vshrl.u32 %v1217, 7
    %v1219 = vsub.s32 0, %v1218
    %v1220 = vrot.slane %v1215, %v1219
    %v1222 = vadd.f32 %v1151, %v1220
    %v1223 = vadd.f32 %v1152, %v1220
    %v1224 = vadd.f32 %v1153, %v1220
    %v1225 = vadd.f32 %v1154, %v1220
    %v1226 = vadd.f32 %v1155, %v1220
    %v1227 = vadd.f32 %v1156, %v1220
    %v1228 = vadd.f32 %v1157, %v1220
    %v1229 = vadd.f32 %v1158, %v1220
    %v1230 = vadd.f32 %v1159, %v1220
    %v1231 = vadd.f32 %v1160, %v1220
    %v1232 = vadd.f32 %v1161, %v1220
    %v1233 = vadd.f32 %v1162, %v1220
    %v1234 = vadd.f32 %v1163, %v1220
    %v1235 = vadd.f32 %v1164, %v1220
    %v1236 = vadd.f32 %v1165, %v1220
    %v1237 = vadd.f32 %v1166, %v1220
    %v1238 = vadd.f32 %v1167, %v1220
    %v1239 = vadd.f32 %v1168, %v1220
    %v1240 = vadd.f32 %v1169, %v1220
    %v1241 = vadd.f32 %v1170, %v1220
    %v1242 = vadd.f32 %v1171, %v1220
    %v1243 = vadd.f32 %v1172, %v1220
    %v1244 = vadd.f32 %v1173, %v1220
    %v1245 = vadd.f32 %v1174, %v1220
    %v1246 = vadd.f32 %v1175, %v1220
    %v1247 = vadd.f32 %v1176, %v1220
    %v1248 = vadd.f32 %v1177, %v1220
    %v1249 = vadd.f32 %v1178, %v1220
    %v1250 = vadd.f32 %v1179, %v1220
    %v1251 = vadd.f32 %v1180, %v1220
    %v1252 = vadd.f32 %v1181, %v1220
    %v1253 = vadd.f32 %v1182, %v1220
    %v1254 = vadd.f32 %v1183, %v1220
    %v1255 = vadd.f32 %v1184, %v1220
    %v1256 = vadd.f32 %v1185, %v1220
    %v1257 = vadd.f32 %v1186, %v1220
    %v1258 = vadd.f32 %v1187, %v1220
    %v1259 = vadd.f32 %v1188, %v1220
    %v1260 = vadd.f32 %v1189, %v1220
    %v1261 = vadd.f32 %v1190, %v1220
    %v1262 = vadd.f32 %v1191, %v1220
    %v1263 = vadd.f32 %v1192, %v1220
    %v1264 = vadd.f32 %v1193, %v1220
    %v1265 = vadd.f32 %v1194, %v1220
    %v1266 = vadd.f32 %v1195, %v1220
    %v1267 = vadd.f32 %v1196, %v1220
    %v1268 = vadd.f32 %v1197, %v1220
    %v1269 = vadd.f32 %v1198, %v1220
    %v1270 = vadd.f32 %v1199, %v1220
    %v1271 = vadd.f32 %v1200, %v1220
    %v1272 = vadd.f32 %v1201, %v1220
    %v1273 = vadd.f32 %v1202, %v1220
    %v1274 = vadd.f32 %v1203, %v1220
    %v1275 = vadd.f32 %v1204, %v1220
    %v1276 = vadd.f32 %v1205, %v1220
    %v1277 = vadd.f32 %v1206, %v1220
    %v1278 = vadd.f32 %v1207, %v1220
    %v1279 = vadd.f32 %v1208, %v1220
    %v1280 = vadd.f32 %v1209, %v1220
    %v1281 = vadd.f32 %v1210, %v1220
    %v1282 = vadd.f32 %v1211, %v1220
    %v1283 = vadd.f32 %v1212, %v1220
    %v1284 = vadd.f32 %v1213, %v1220
    %v1285 = vadd.f32 %v1214, %v1220
    %v1286 = vmax.f32 %v1222, 0.0
    %v1287 = vmax.f32 %v1223, 0.0
    %v1288 = vmax.f32 %v1224, 0.0
    %v1289 = vmax.f32 %v1225, 0.0
    %v1290 = vmax.f32 %v1226, 0.0
    %v1291 = vmax.f32 %v1227, 0.0
    %v1292 = vmax.f32 %v1228, 0.0
    %v1293 = vmax.f32 %v1229, 0.0
    %v1294 = vmax.f32 %v1230, 0.0
    %v1295 = vmax.f32 %v1231, 0.0
    %v1296 = vmax.f32 %v1232, 0.0
    %v1297 = vmax.f32 %v1233, 0.0
    %v1298 = vmax.f32 %v1234, 0.0
    %v1299 = vmax.f32 %v1235, 0.0
    %v1300 = vmax.f32 %v1236, 0.0
    %v1301 = vmax.f32 %v1237, 0.0
    %v1302 = vmax.f32 %v1238, 0.0
    %v1303 = vmax.f32 %v1239, 0.0
    %v1304 = vmax.f32 %v1240, 0.0
    %v1305 = vmax.f32 %v1241, 0.0
    %v1306 = vmax.f32 %v1242, 0.0
    %v1307 = vmax.f32 %v1243, 0.0
    %v1308 = vmax.f32 %v1244, 0.0
    %v1309 = vmax.f32 %v1245, 0.0
    %v1310 = vmax.f32 %v1246, 0.0
    %v1311 = vmax.f32 %v1247, 0.0
    %v1312 = vmax.f32 %v1248, 0.0
    %v1313 = vmax.f32 %v1249, 0.0
    %v1314 = vmax.f32 %v1250, 0.0
    %v1315 = vmax.f32 %v1251, 0.0
    %v1316 = vmax.f32 %v1252, 0.0
    %v1317 = vmax.f32 %v1253, 0.0
    %v1318 = vmax.f32 %v1254, 0.0
    %v1319 = vmax.f32 %v1255, 0.0
    %v1320 = vmax.f32 %v1256, 0.0
    %v1321 = vmax.f32 %v1257, 0.0
    %v1322 = vmax.f32 %v1258, 0.0
    %v1323 = vmax.f32 %v1259, 0.0
    %v1324 = vmax.f32 %v1260, 0.0
    %v1325 = vmax.f32 %v1261, 0.0
    %v1326 = vmax.f32 %v1262, 0.0
    %v1327 = vmax.f32 %v1263, 0.0
    %v1328 = vmax.f32 %v1264, 0.0
    %v1329 = vmax.f32 %v1265, 0.0
    %v1330 = vmax.f32 %v1266, 0.0
    %v1331 = vmax.f32 %v1267, 0.0
    %v1332 = vmax.f32 %v1268, 0.0
    %v1333 = vmax.f32 %v1269, 0.0
    %v1334 = vmax.f32 %v1270, 0.0
    %v1335 = vmax.f32 %v1271, 0.0
    %v1336 = vmax.f32 %v1272, 0.0
    %v1337 = vmax.f32 %v1273, 0.0
    %v1338 = vmax.f32 %v1274, 0.0
    %v1339 = vmax.f32 %v1275, 0.0
    %v1340 = vmax.f32 %v1276, 0.0
    %v1341 = vmax.f32 %v1277, 0.0
    %v1342 = vmax.f32 %v1278, 0.0
    %v1343 = vmax.f32 %v1279, 0.0
    %v1344 = vmax.f32 %v1280, 0.0
    %v1345 = vmax.f32 %v1281, 0.0
    %v1346 = vmax.f32 %v1282, 0.0
    %v1347 = vmax.f32 %v1283, 0.0
    %v1348 = vmax.f32 %v1284, 0.0
    %v1349 = vmax.f32 %v1285, 0.0
    %1350 = vst.msk [vmem:[#allocation2] sm:$0xff] %vm678, 0.0
    %1351 = vst.msk [vmem:[#allocation2 + $0x8] sm:$0xff] %vm678, 0.0
    %vm1352 = vcmask 58368
    %1353 = vst.msk [vmem:[#allocation2 + $0x10] sm:$0x3] %vm1352, 0.0
    %1354 = vst.msk [vmem:[#allocation2 + $0x18] sm:$0xff] %vm678, 0.0
    %1355 = vst.msk [vmem:[#allocation2 + $0x20] sm:$0xff] %vm678, 0.0
    %1356 = vst.msk [vmem:[#allocation2 + $0x28] sm:$0x3] %vm1352, 0.0
    %1357 = vst.msk [vmem:[#allocation2 + $0x30] sm:$0xff] %vm678, 0.0
    %1358 = vst.msk [vmem:[#allocation2 + $0x38] sm:$0xff] %vm678, 0.0
    %1359 = vst.msk [vmem:[#allocation2 + $0x40] sm:$0x3] %vm1352, 0.0
    %1360 = vst.msk [vmem:[#allocation2 + $0x48] sm:$0xff] %vm678, 0.0
    %1361 = vst.msk [vmem:[#allocation2 + $0x50] sm:$0xff] %vm678, 0.0
    %1362 = vst.msk [vmem:[#allocation2 + $0x58] sm:$0x3] %vm1352, 0.0
    %1363 = vst.msk [vmem:[#allocation2 + $0x60] sm:$0xff] %vm678, 0.0
    %1364 = vst.msk [vmem:[#allocation2 + $0x68] sm:$0xff] %vm678, 0.0
    %1365 = vst.msk [vmem:[#allocation2 + $0x70] sm:$0x3] %vm1352, 0.0
    %1366 = vst.msk [vmem:[#allocation2 + $0x78] sm:$0xff] %vm678, 0.0
    %1367 = vst.msk [vmem:[#allocation2 + $0x80] sm:$0xff] %vm678, 0.0
    %1368 = vst.msk [vmem:[#allocation2 + $0x88] sm:$0x3] %vm1352, 0.0
    %1369 = vst.msk [vmem:[#allocation2 + $0x90] sm:$0xff] %vm678, 0.0
    %1370 = vst.msk [vmem:[#allocation2 + $0x98] sm:$0xff] %vm678, 0.0
    %1371 = vst.msk [vmem:[#allocation2 + $0xa0] sm:$0x3] %vm1352, 0.0
    %1372 = vst.msk [vmem:[#allocation2 + $0xa8] sm:$0xff] %vm678, 0.0
    %1373 = vst.msk [vmem:[#allocation2 + $0xb0] sm:$0xff] %vm678, 0.0
    %1374 = vst.msk [vmem:[#allocation2 + $0xb8] sm:$0x3] %vm1352, 0.0
    %1375 = vst.msk [vmem:[#allocation2 + $0xc0] sm:$0xff] %vm678, 0.0
    %1376 = vst.msk [vmem:[#allocation2 + $0xc8] sm:$0xff] %vm678, 0.0
    %1377 = vst.msk [vmem:[#allocation2 + $0xd0] sm:$0x3] %vm1352, 0.0
    %1378 = vst.msk [vmem:[#allocation2 + $0xd8] sm:$0xff] %vm678, 0.0
    %1379 = vst.msk [vmem:[#allocation2 + $0xe0] sm:$0xff] %vm678, 0.0
    %1380 = vst.msk [vmem:[#allocation2 + $0xe8] sm:$0x3] %vm1352, 0.0
    %1381 = vst.msk [vmem:[#allocation2 + $0xf0] sm:$0xff] %vm678, 0.0
    %1382 = vst.msk [vmem:[#allocation2 + $0xf8] sm:$0xff] %vm678, 0.0
    %1383 = vst.msk [vmem:[#allocation2 + $0x100] sm:$0x3] %vm1352, 0.0
    %1384 = vst.msk [vmem:[#allocation2 + $0x108] sm:$0xff] %vm678, 0.0
    %1385 = vst.msk [vmem:[#allocation2 + $0x110] sm:$0xff] %vm678, 0.0
    %1386 = vst.msk [vmem:[#allocation2 + $0x118] sm:$0x3] %vm1352, 0.0
    %1387 = vst.msk [vmem:[#allocation2 + $0x120] sm:$0xff] %vm678, 0.0
    %1388 = vst.msk [vmem:[#allocation2 + $0x128] sm:$0xff] %vm678, 0.0
    %1389 = vst.msk [vmem:[#allocation2 + $0x130] sm:$0x3] %vm1352, 0.0
    %1390 = vst.msk [vmem:[#allocation2 + $0x138] sm:$0xff] %vm678, 0.0
    %1391 = vst.msk [vmem:[#allocation2 + $0x140] sm:$0xff] %vm678, 0.0
    %1392 = vst.msk [vmem:[#allocation2 + $0x148] sm:$0x3] %vm1352, 0.0
    %1393 = vst.msk [vmem:[#allocation2 + $0x150] sm:$0xff] %vm678, 0.0
    %1394 = vst.msk [vmem:[#allocation2 + $0x158] sm:$0xff] %vm678, 0.0
    %1395 = vst.msk [vmem:[#allocation2 + $0x160] sm:$0x3] %vm1352, 0.0
    %1396 = vst.msk [vmem:[#allocation2 + $0x168] sm:$0xff] %vm678, 0.0
    %1397 = vst.msk [vmem:[#allocation2 + $0x170] sm:$0xff] %vm678, 0.0
    %1398 = vst.msk [vmem:[#allocation2 + $0x178] sm:$0x3] %vm1352, 0.0
    %1399 = vst.msk [vmem:[#allocation2 + $0x180] sm:$0xff] %vm678, 0.0
    %1400 = vst.msk [vmem:[#allocation2 + $0x188] sm:$0xff] %vm678, 0.0
    %1401 = vst.msk [vmem:[#allocation2 + $0x190] sm:$0x3] %vm1352, 0.0
    %1402 = vst.msk [vmem:[#allocation2 + $0x198] sm:$0xff] %vm678, 0.0
    %1403 = vst.msk [vmem:[#allocation2 + $0x1a0] sm:$0xff] %vm678, 0.0
    %1404 = vst.msk [vmem:[#allocation2 + $0x1a8] sm:$0x3] %vm1352, 0.0
    %1405 = vst.msk [vmem:[#allocation2 + $0x1b0] sm:$0xff] %vm678, 0.0
    %1406 = vst.msk [vmem:[#allocation2 + $0x1b8] sm:$0xff] %vm678, 0.0
    %1407 = vst.msk [vmem:[#allocation2 + $0x1c0] sm:$0x3] %vm1352, 0.0
    %1408 = vst.msk [vmem:[#allocation2 + $0x1c8] sm:$0xff] %vm678, 0.0
    %1409 = vst.msk [vmem:[#allocation2 + $0x1d0] sm:$0xff] %vm678, 0.0
    %1410 = vst.msk [vmem:[#allocation2 + $0x1d8] sm:$0x3] %vm1352, 0.0
    %1411 = vst.msk [vmem:[#allocation2 + $0x1e0] sm:$0xff] %vm678, 0.0
    %1412 = vst.msk [vmem:[#allocation2 + $0x1e8] sm:$0xff] %vm678, 0.0
    %1413 = vst.msk [vmem:[#allocation2 + $0x1f0] sm:$0x3] %vm1352, 0.0
    %1414 = vst.msk [vmem:[#allocation2 + $0x1f8] sm:$0xff] %vm678, 0.0
    %1415 = vst.msk [vmem:[#allocation2 + $0x200] sm:$0xff] %vm678, 0.0
    %1416 = vst.msk [vmem:[#allocation2 + $0x208] sm:$0x3] %vm1352, 0.0
    %1417 = vst.msk [vmem:[#allocation2 + $0x210] sm:$0xff] %vm678, 0.0
    %1418 = vst.msk [vmem:[#allocation2 + $0x218] sm:$0xff] %vm678, 0.0
    %1419 = vst.msk [vmem:[#allocation2 + $0x220] sm:$0x3] %vm1352, 0.0
    %1420 = vst.msk [vmem:[#allocation2 + $0x228] sm:$0xff] %vm678, 0.0
    %1421 = vst.msk [vmem:[#allocation2 + $0x230] sm:$0xff] %vm678, 0.0
    %1422 = vst.msk [vmem:[#allocation2 + $0x238] sm:$0x3] %vm1352, 0.0
    %1423 = vst.msk [vmem:[#allocation2 + $0x240] sm:$0xff] %vm678, 0.0
    %1424 = vst.msk [vmem:[#allocation2 + $0x248] sm:$0xff] %vm678, 0.0
    %1425 = vst.msk [vmem:[#allocation2 + $0x250] sm:$0x3] %vm1352, 0.0
    %1426 = vst.msk [vmem:[#allocation2 + $0x258] sm:$0xff] %vm678, 0.0
    %1427 = vst.msk [vmem:[#allocation2 + $0x260] sm:$0xff] %vm678, 0.0
    %1428 = vst.msk [vmem:[#allocation2 + $0x268] sm:$0x3] %vm1352, 0.0
    %1429 = vst.msk [vmem:[#allocation2 + $0x270] sm:$0xff] %vm678, 0.0
    %1430 = vst.msk [vmem:[#allocation2 + $0x278] sm:$0xff] %vm678, 0.0
    %1431 = vst.msk [vmem:[#allocation2 + $0x280] sm:$0x3] %vm1352, 0.0
    %1432 = vst.msk [vmem:[#allocation2 + $0x288] sm:$0xff] %vm678, 0.0
    %1433 = vst.msk [vmem:[#allocation2 + $0x290] sm:$0xff] %vm678, 0.0
    %1434 = vst.msk [vmem:[#allocation2 + $0x298] sm:$0x3] %vm1352, 0.0
    %1435 = vst.msk [vmem:[#allocation2 + $0x2a0] sm:$0xff] %vm678, 0.0
    %1436 = vst.msk [vmem:[#allocation2 + $0x2a8] sm:$0xff] %vm678, 0.0
    %1437 = vst.msk [vmem:[#allocation2 + $0x2b0] sm:$0x3] %vm1352, 0.0
    %1438 = vst.msk [vmem:[#allocation2 + $0x2b8] sm:$0xff] %vm678, 0.0
    %1439 = vst.msk [vmem:[#allocation2 + $0x2c0] sm:$0xff] %vm678, 0.0
    %1440 = vst.msk [vmem:[#allocation2 + $0x2c8] sm:$0x3] %vm1352, 0.0
    %1441 = vst.msk [vmem:[#allocation2 + $0x2d0] sm:$0xff] %vm678, 0.0
    %1442 = vst.msk [vmem:[#allocation2 + $0x2d8] sm:$0xff] %vm678, 0.0
    %1443 = vst.msk [vmem:[#allocation2 + $0x2e0] sm:$0x3] %vm1352, 0.0
    %1444 = vst.msk [vmem:[#allocation2 + $0x2e8] sm:$0xff] %vm678, 0.0
    %1445 = vst.msk [vmem:[#allocation2 + $0x2f0] sm:$0xff] %vm678, 0.0
    %1446 = vst.msk [vmem:[#allocation2 + $0x2f8] sm:$0x3] %vm1352, 0.0
    %1447 = vst.msk [vmem:[#allocation2 + $0x300] sm:$0xff] %vm678, 0.0
    %1448 = vst.msk [vmem:[#allocation2 + $0x308] sm:$0xff] %vm678, 0.0
    %1449 = vst.msk [vmem:[#allocation2 + $0x310] sm:$0x3] %vm1352, 0.0
    %1450 = vst.msk [vmem:[#allocation2 + $0x318] sm:$0xff] %vm678, 0.0
    %1451 = vst.msk [vmem:[#allocation2 + $0x320] sm:$0xff] %vm678, 0.0
    %1452 = vst.msk [vmem:[#allocation2 + $0x328] sm:$0x3] %vm1352, 0.0
    %1453 = vst.msk [vmem:[#allocation2 + $0x330] sm:$0xff] %vm678, 0.0
    %1454 = vst.msk [vmem:[#allocation2 + $0x338] sm:$0xff] %vm678, 0.0
    %1455 = vst.msk [vmem:[#allocation2 + $0x340] sm:$0x3] %vm1352, 0.0
    %1456 = vst.msk [vmem:[#allocation2 + $0x348] sm:$0xff] %vm678, 0.0
    %1457 = vst.msk [vmem:[#allocation2 + $0x350] sm:$0xff] %vm678, 0.0
    %1458 = vst.msk [vmem:[#allocation2 + $0x358] sm:$0x3] %vm1352, 0.0
    %s1459 = scalar_lea.vmem [#allocation2], 24
    %1460 = vst.msk [vmem:[%s1459 + $0x1] sm:$0xff] %vm678, %v1286
    %1461 = vst.msk [vmem:[%s1459 + $0x9] sm:$0xff] %vm678, %v1287
    %1462 = vst.msk [vmem:[%s1459 + $0x19] sm:$0xff] %vm678, %v1288
    %1463 = vst.msk [vmem:[%s1459 + $0x21] sm:$0xff] %vm678, %v1289
    %1464 = vst.msk [vmem:[%s1459 + $0x31] sm:$0xff] %vm678, %v1290
    %1465 = vst.msk [vmem:[%s1459 + $0x39] sm:$0xff] %vm678, %v1291
    %1466 = vst.msk [vmem:[%s1459 + $0x49] sm:$0xff] %vm678, %v1292
    %1467 = vst.msk [vmem:[%s1459 + $0x51] sm:$0xff] %vm678, %v1293
    %1468 = vst.msk [vmem:[%s1459 + $0x61] sm:$0xff] %vm678, %v1294
    %1469 = vst.msk [vmem:[%s1459 + $0x69] sm:$0xff] %vm678, %v1295
    %1470 = vst.msk [vmem:[%s1459 + $0x79] sm:$0xff] %vm678, %v1296
    %1471 = vst.msk [vmem:[%s1459 + $0x81] sm:$0xff] %vm678, %v1297
    %1472 = vst.msk [vmem:[%s1459 + $0x91] sm:$0xff] %vm678, %v1298
    %1473 = vst.msk [vmem:[%s1459 + $0x99] sm:$0xff] %vm678, %v1299
    %1474 = vst.msk [vmem:[%s1459 + $0xa9] sm:$0xff] %vm678, %v1300
    %1475 = vst.msk [vmem:[%s1459 + $0xb1] sm:$0xff] %vm678, %v1301
    %1476 = vst.msk [vmem:[%s1459 + $0xc1] sm:$0xff] %vm678, %v1302
    %1477 = vst.msk [vmem:[%s1459 + $0xc9] sm:$0xff] %vm678, %v1303
    %1478 = vst.msk [vmem:[%s1459 + $0xd9] sm:$0xff] %vm678, %v1304
    %1479 = vst.msk [vmem:[%s1459 + $0xe1] sm:$0xff] %vm678, %v1305
    %1480 = vst.msk [vmem:[%s1459 + $0xf1] sm:$0xff] %vm678, %v1306
    %1481 = vst.msk [vmem:[%s1459 + $0xf9] sm:$0xff] %vm678, %v1307
    %1482 = vst.msk [vmem:[%s1459 + $0x109] sm:$0xff] %vm678, %v1308
    %1483 = vst.msk [vmem:[%s1459 + $0x111] sm:$0xff] %vm678, %v1309
    %1484 = vst.msk [vmem:[%s1459 + $0x121] sm:$0xff] %vm678, %v1310
    %1485 = vst.msk [vmem:[%s1459 + $0x129] sm:$0xff] %vm678, %v1311
    %1486 = vst.msk [vmem:[%s1459 + $0x139] sm:$0xff] %vm678, %v1312
    %1487 = vst.msk [vmem:[%s1459 + $0x141] sm:$0xff] %vm678, %v1313
    %1488 = vst.msk [vmem:[%s1459 + $0x151] sm:$0xff] %vm678, %v1314
    %1489 = vst.msk [vmem:[%s1459 + $0x159] sm:$0xff] %vm678, %v1315
    %1490 = vst.msk [vmem:[%s1459 + $0x169] sm:$0xff] %vm678, %v1316
    %1491 = vst.msk [vmem:[%s1459 + $0x171] sm:$0xff] %vm678, %v1317
    %1492 = vst.msk [vmem:[%s1459 + $0x1b1] sm:$0xff] %vm678, %v1318
    %1493 = vst.msk [vmem:[%s1459 + $0x1b9] sm:$0xff] %vm678, %v1319
    %1494 = vst.msk [vmem:[%s1459 + $0x1c9] sm:$0xff] %vm678, %v1320
    %1495 = vst.msk [vmem:[%s1459 + $0x1d1] sm:$0xff] %vm678, %v1321
    %1496 = vst.msk [vmem:[%s1459 + $0x1e1] sm:$0xff] %vm678, %v1322
    %1497 = vst.msk [vmem:[%s1459 + $0x1e9] sm:$0xff] %vm678, %v1323
    %1498 = vst.msk [vmem:[%s1459 + $0x1f9] sm:$0xff] %vm678, %v1324
    %1499 = vst.msk [vmem:[%s1459 + $0x201] sm:$0xff] %vm678, %v1325
    %1500 = vst.msk [vmem:[%s1459 + $0x211] sm:$0xff] %vm678, %v1326
    %1501 = vst.msk [vmem:[%s1459 + $0x219] sm:$0xff] %vm678, %v1327
    %1502 = vst.msk [vmem:[%s1459 + $0x229] sm:$0xff] %vm678, %v1328
    %1503 = vst.msk [vmem:[%s1459 + $0x231] sm:$0xff] %vm678, %v1329
    %1504 = vst.msk [vmem:[%s1459 + $0x241] sm:$0xff] %vm678, %v1330
    %1505 = vst.msk [vmem:[%s1459 + $0x249] sm:$0xff] %vm678, %v1331
    %1506 = vst.msk [vmem:[%s1459 + $0x259] sm:$0xff] %vm678, %v1332
    %1507 = vst.msk [vmem:[%s1459 + $0x261] sm:$0xff] %vm678, %v1333
    %1508 = vst.msk [vmem:[%s1459 + $0x271] sm:$0xff] %vm678, %v1334
    %1509 = vst.msk [vmem:[%s1459 + $0x279] sm:$0xff] %vm678, %v1335
    %1510 = vst.msk [vmem:[%s1459 + $0x289] sm:$0xff] %vm678, %v1336
    %1511 = vst.msk [vmem:[%s1459 + $0x291] sm:$0xff] %vm678, %v1337
    %1512 = vst.msk [vmem:[%s1459 + $0x2a1] sm:$0xff] %vm678, %v1338
    %1513 = vst.msk [vmem:[%s1459 + $0x2a9] sm:$0xff] %vm678, %v1339
    %1514 = vst.msk [vmem:[%s1459 + $0x2b9] sm:$0xff] %vm678, %v1340
    %1515 = vst.msk [vmem:[%s1459 + $0x2c1] sm:$0xff] %vm678, %v1341
    %1516 = vst.msk [vmem:[%s1459 + $0x2d1] sm:$0xff] %vm678, %v1342
    %1517 = vst.msk [vmem:[%s1459 + $0x2d9] sm:$0xff] %vm678, %v1343
    %1518 = vst.msk [vmem:[%s1459 + $0x2e9] sm:$0xff] %vm678, %v1344
    %1519 = vst.msk [vmem:[%s1459 + $0x2f1] sm:$0xff] %vm678, %v1345
    %1520 = vst.msk [vmem:[%s1459 + $0x301] sm:$0xff] %vm678, %v1346
    %1521 = vst.msk [vmem:[%s1459 + $0x309] sm:$0xff] %vm678, %v1347
    %1522 = vst.msk [vmem:[%s1459 + $0x319] sm:$0xff] %vm678, %v1348
    %1523 = vst.msk [vmem:[%s1459 + $0x321] sm:$0xff] %vm678, %v1349
    %v1524 = vld [vmem:[#allocation2] sm:$0xff]
    %v1525 = vld [vmem:[#allocation2 + $0x8] sm:$0xff]
    %v1526 = vld [vmem:[#allocation2 + $0x18] sm:$0xff]
    %v1527 = vld [vmem:[#allocation2 + $0x20] sm:$0xff]
    %v1528 = vld [vmem:[#allocation2 + $0x30] sm:$0xff]
    %v1529 = vld [vmem:[#allocation2 + $0x38] sm:$0xff]
    %v1530 = vld [vmem:[#allocation2 + $0x48] sm:$0xff]
    %v1531 = vld [vmem:[#allocation2 + $0x50] sm:$0xff]
    %v1532 = vld [vmem:[#allocation2 + $0x60] sm:$0xff]
    %v1533 = vld [vmem:[#allocation2 + $0x68] sm:$0xff]
    %v1534 = vld [vmem:[#allocation2 + $0x78] sm:$0xff]
    %v1535 = vld [vmem:[#allocation2 + $0x80] sm:$0xff]
    %v1536 = vld [vmem:[#allocation2 + $0x90] sm:$0xff]
    %v1537 = vld [vmem:[#allocation2 + $0x98] sm:$0xff]
    %v1538 = vld [vmem:[#allocation2 + $0xa8] sm:$0xff]
    %v1539 = vld [vmem:[#allocation2 + $0xb0] sm:$0xff]
    %v1540 = vld [vmem:[#allocation2 + $0xc0] sm:$0xff]
    %v1541 = vld [vmem:[#allocation2 + $0xc8] sm:$0xff]
    %v1542 = vld [vmem:[#allocation2 + $0xd8] sm:$0xff]
    %v1543 = vld [vmem:[#allocation2 + $0xe0] sm:$0xff]
    %v1544 = vld [vmem:[#allocation2 + $0xf0] sm:$0xff]
    %v1545 = vld [vmem:[#allocation2 + $0xf8] sm:$0xff]
    %v1546 = vld [vmem:[#allocation2 + $0x108] sm:$0xff]
    %v1547 = vld [vmem:[#allocation2 + $0x110] sm:$0xff]
    %v1548 = vld [vmem:[#allocation2 + $0x120] sm:$0xff]
    %v1549 = vld [vmem:[#allocation2 + $0x128] sm:$0xff]
    %v1550 = vld [vmem:[#allocation2 + $0x138] sm:$0xff]
    %v1551 = vld [vmem:[#allocation2 + $0x140] sm:$0xff]
    %v1552 = vld [vmem:[#allocation2 + $0x150] sm:$0xff]
    %v1553 = vld [vmem:[#allocation2 + $0x158] sm:$0xff]
    %v1554 = vld [vmem:[#allocation2 + $0x168] sm:$0xff]
    %v1555 = vld [vmem:[#allocation2 + $0x170] sm:$0xff]
    %v1556 = vld [vmem:[#allocation2 + $0x1b0] sm:$0xff]
    %v1557 = vld [vmem:[#allocation2 + $0x1b8] sm:$0xff]
    %v1558 = vld [vmem:[#allocation2 + $0x1c8] sm:$0xff]
    %v1559 = vld [vmem:[#allocation2 + $0x1d0] sm:$0xff]
    %v1560 = vld [vmem:[#allocation2 + $0x1e0] sm:$0xff]
    %v1561 = vld [vmem:[#allocation2 + $0x1e8] sm:$0xff]
    %v1562 = vld [vmem:[#allocation2 + $0x1f8] sm:$0xff]
    %v1563 = vld [vmem:[#allocation2 + $0x200] sm:$0xff]
    %v1564 = vld [vmem:[#allocation2 + $0x210] sm:$0xff]
    %v1565 = vld [vmem:[#allocation2 + $0x218] sm:$0xff]
    %v1566 = vld [vmem:[#allocation2 + $0x228] sm:$0xff]
    %v1567 = vld [vmem:[#allocation2 + $0x230] sm:$0xff]
    %v1568 = vld [vmem:[#allocation2 + $0x240] sm:$0xff]
    %v1569 = vld [vmem:[#allocation2 + $0x248] sm:$0xff]
    %v1570 = vld [vmem:[#allocation2 + $0x258] sm:$0xff]
    %v1571 = vld [vmem:[#allocation2 + $0x260] sm:$0xff]
    %v1572 = vld [vmem:[#allocation2 + $0x270] sm:$0xff]
    %v1573 = vld [vmem:[#allocation2 + $0x278] sm:$0xff]
    %v1574 = vld [vmem:[#allocation2 + $0x288] sm:$0xff]
    %v1575 = vld [vmem:[#allocation2 + $0x290] sm:$0xff]
    %v1576 = vld [vmem:[#allocation2 + $0x2a0] sm:$0xff]
    %v1577 = vld [vmem:[#allocation2 + $0x2a8] sm:$0xff]
    %v1578 = vld [vmem:[#allocation2 + $0x2b8] sm:$0xff]
    %v1579 = vld [vmem:[#allocation2 + $0x2c0] sm:$0xff]
    %v1580 = vld [vmem:[#allocation2 + $0x2d0] sm:$0xff]
    %v1581 = vld [vmem:[#allocation2 + $0x2d8] sm:$0xff]
    %v1582 = vld [vmem:[#allocation2 + $0x2e8] sm:$0xff]
    %v1583 = vld [vmem:[#allocation2 + $0x2f0] sm:$0xff]
    %v1584 = vld [vmem:[#allocation2 + $0x300] sm:$0xff]
    %v1585 = vld [vmem:[#allocation2 + $0x308] sm:$0xff]
    %v1586 = vld [vmem:[#allocation2 + $0x318] sm:$0xff]
    %v1587 = vld [vmem:[#allocation2 + $0x320] sm:$0xff]
    %1588 = vst.msk [vmem:[#allocation3] sm:$0xff] %vm678, %v1524
    %1589 = vst.msk [vmem:[#allocation3 + $0x8] sm:$0xff] %vm678, %v1525
    %1590 = vst.msk [vmem:[#allocation3 + $0x10] sm:$0xff] %vm678, %v1526
    %1591 = vst.msk [vmem:[#allocation3 + $0x18] sm:$0xff] %vm678, %v1527
    %1592 = vst.msk [vmem:[#allocation3 + $0x20] sm:$0xff] %vm678, %v1528
    %1593 = vst.msk [vmem:[#allocation3 + $0x28] sm:$0xff] %vm678, %v1529
    %1594 = vst.msk [vmem:[#allocation3 + $0x30] sm:$0xff] %vm678, %v1530
    %1595 = vst.msk [vmem:[#allocation3 + $0x38] sm:$0xff] %vm678, %v1531
    %1596 = vst.msk [vmem:[#allocation3 + $0x40] sm:$0xff] %vm678, %v1532
    %1597 = vst.msk [vmem:[#allocation3 + $0x48] sm:$0xff] %vm678, %v1533
    %1598 = vst.msk [vmem:[#allocation3 + $0x50] sm:$0xff] %vm678, %v1534
    %1599 = vst.msk [vmem:[#allocation3 + $0x58] sm:$0xff] %vm678, %v1535
    %1600 = vst.msk [vmem:[#allocation3 + $0x60] sm:$0xff] %vm678, %v1536
    %1601 = vst.msk [vmem:[#allocation3 + $0x68] sm:$0xff] %vm678, %v1537
    %1602 = vst.msk [vmem:[#allocation3 + $0x70] sm:$0xff] %vm678, %v1538
    %1603 = vst.msk [vmem:[#allocation3 + $0x78] sm:$0xff] %vm678, %v1539
    %1604 = vst.msk [vmem:[#allocation3 + $0x80] sm:$0xff] %vm678, %v1540
    %1605 = vst.msk [vmem:[#allocation3 + $0x88] sm:$0xff] %vm678, %v1541
    %1606 = vst.msk [vmem:[#allocation3 + $0x90] sm:$0xff] %vm678, %v1542
    %1607 = vst.msk [vmem:[#allocation3 + $0x98] sm:$0xff] %vm678, %v1543
    %1608 = vst.msk [vmem:[#allocation3 + $0xa0] sm:$0xff] %vm678, %v1544
    %1609 = vst.msk [vmem:[#allocation3 + $0xa8] sm:$0xff] %vm678, %v1545
    %1610 = vst.msk [vmem:[#allocation3 + $0xb0] sm:$0xff] %vm678, %v1546
    %1611 = vst.msk [vmem:[#allocation3 + $0xb8] sm:$0xff] %vm678, %v1547
    %1612 = vst.msk [vmem:[#allocation3 + $0xc0] sm:$0xff] %vm678, %v1548
    %1613 = vst.msk [vmem:[#allocation3 + $0xc8] sm:$0xff] %vm678, %v1549
    %1614 = vst.msk [vmem:[#allocation3 + $0xd0] sm:$0xff] %vm678, %v1550
    %1615 = vst.msk [vmem:[#allocation3 + $0xd8] sm:$0xff] %vm678, %v1551
    %1616 = vst.msk [vmem:[#allocation3 + $0xe0] sm:$0xff] %vm678, %v1552
    %1617 = vst.msk [vmem:[#allocation3 + $0xe8] sm:$0xff] %vm678, %v1553
    %1618 = vst.msk [vmem:[#allocation3 + $0xf0] sm:$0xff] %vm678, %v1554
    %1619 = vst.msk [vmem:[#allocation3 + $0xf8] sm:$0xff] %vm678, %v1555
    %1620 = vst.msk [vmem:[#allocation3 + $0x100] sm:$0xff] %vm678, %v1556
    %1621 = vst.msk [vmem:[#allocation3 + $0x108] sm:$0xff] %vm678, %v1557
    %1622 = vst.msk [vmem:[#allocation3 + $0x110] sm:$0xff] %vm678, %v1558
    %1623 = vst.msk [vmem:[#allocation3 + $0x118] sm:$0xff] %vm678, %v1559
    %1624 = vst.msk [vmem:[#allocation3 + $0x120] sm:$0xff] %vm678, %v1560
    %1625 = vst.msk [vmem:[#allocation3 + $0x128] sm:$0xff] %vm678, %v1561
    %1626 = vst.msk [vmem:[#allocation3 + $0x130] sm:$0xff] %vm678, %v1562
    %1627 = vst.msk [vmem:[#allocation3 + $0x138] sm:$0xff] %vm678, %v1563
    %1628 = vst.msk [vmem:[#allocation3 + $0x140] sm:$0xff] %vm678, %v1564
    %1629 = vst.msk [vmem:[#allocation3 + $0x148] sm:$0xff] %vm678, %v1565
    %1630 = vst.msk [vmem:[#allocation3 + $0x150] sm:$0xff] %vm678, %v1566
    %1631 = vst.msk [vmem:[#allocation3 + $0x158] sm:$0xff] %vm678, %v1567
    %1632 = vst.msk [vmem:[#allocation3 + $0x160] sm:$0xff] %vm678, %v1568
    %1633 = vst.msk [vmem:[#allocation3 + $0x168] sm:$0xff] %vm678, %v1569
    %1634 = vst.msk [vmem:[#allocation3 + $0x170] sm:$0xff] %vm678, %v1570
    %1635 = vst.msk [vmem:[#allocation3 + $0x178] sm:$0xff] %vm678, %v1571
    %1636 = vst.msk [vmem:[#allocation3 + $0x180] sm:$0xff] %vm678, %v1572
    %1637 = vst.msk [vmem:[#allocation3 + $0x188] sm:$0xff] %vm678, %v1573
    %1638 = vst.msk [vmem:[#allocation3 + $0x190] sm:$0xff] %vm678, %v1574
    %1639 = vst.msk [vmem:[#allocation3 + $0x198] sm:$0xff] %vm678, %v1575
    %1640 = vst.msk [vmem:[#allocation3 + $0x1a0] sm:$0xff] %vm678, %v1576
    %1641 = vst.msk [vmem:[#allocation3 + $0x1a8] sm:$0xff] %vm678, %v1577
    %1642 = vst.msk [vmem:[#allocation3 + $0x1b0] sm:$0xff] %vm678, %v1578
    %1643 = vst.msk [vmem:[#allocation3 + $0x1b8] sm:$0xff] %vm678, %v1579
    %1644 = vst.msk [vmem:[#allocation3 + $0x1c0] sm:$0xff] %vm678, %v1580
    %1645 = vst.msk [vmem:[#allocation3 + $0x1c8] sm:$0xff] %vm678, %v1581
    %1646 = vst.msk [vmem:[#allocation3 + $0x1d0] sm:$0xff] %vm678, %v1582
    %1647 = vst.msk [vmem:[#allocation3 + $0x1d8] sm:$0xff] %vm678, %v1583
    %1648 = vst.msk [vmem:[#allocation3 + $0x1e0] sm:$0xff] %vm678, %v1584
    %1649 = vst.msk [vmem:[#allocation3 + $0x1e8] sm:$0xff] %vm678, %v1585
    %1650 = vst.msk [vmem:[#allocation3 + $0x1f0] sm:$0xff] %vm678, %v1586
    %1651 = vst.msk [vmem:[#allocation3 + $0x1f8] sm:$0xff] %vm678, %v1587
    %v1652 = vld [vmem:[#allocation2 + $0x1] sm:$0xff]
    %v1653 = vld [vmem:[#allocation2 + $0x9] sm:$0xff]
    %v1654 = vld [vmem:[#allocation2 + $0x19] sm:$0xff]
    %v1655 = vld [vmem:[#allocation2 + $0x21] sm:$0xff]
    %v1656 = vld [vmem:[#allocation2 + $0x31] sm:$0xff]
    %v1657 = vld [vmem:[#allocation2 + $0x39] sm:$0xff]
    %v1658 = vld [vmem:[#allocation2 + $0x49] sm:$0xff]
    %v1659 = vld [vmem:[#allocation2 + $0x51] sm:$0xff]
    %v1660 = vld [vmem:[#allocation2 + $0x61] sm:$0xff]
    %v1661 = vld [vmem:[#allocation2 + $0x69] sm:$0xff]
    %v1662 = vld [vmem:[#allocation2 + $0x79] sm:$0xff]
    %v1663 = vld [vmem:[#allocation2 + $0x81] sm:$0xff]
    %v1664 = vld [vmem:[#allocation2 + $0x91] sm:$0xff]
    %v1665 = vld [vmem:[#allocation2 + $0x99] sm:$0xff]
    %v1666 = vld [vmem:[#allocation2 + $0xa9] sm:$0xff]
    %v1667 = vld [vmem:[#allocation2 + $0xb1] sm:$0xff]
    %v1668 = vld [vmem:[#allocation2 + $0xc1] sm:$0xff]
    %v1669 = vld [vmem:[#allocation2 + $0xc9] sm:$0xff]
    %v1670 = vld [vmem:[#allocation2 + $0xd9] sm:$0xff]
    %v1671 = vld [vmem:[#allocation2 + $0xe1] sm:$0xff]
    %v1672 = vld [vmem:[#allocation2 + $0xf1] sm:$0xff]
    %v1673 = vld [vmem:[#allocation2 + $0xf9] sm:$0xff]
    %v1674 = vld [vmem:[#allocation2 + $0x109] sm:$0xff]
    %v1675 = vld [vmem:[#allocation2 + $0x111] sm:$0xff]
    %v1676 = vld [vmem:[#allocation2 + $0x121] sm:$0xff]
    %v1677 = vld [vmem:[#allocation2 + $0x129] sm:$0xff]
    %v1678 = vld [vmem:[#allocation2 + $0x139] sm:$0xff]
    %v1679 = vld [vmem:[#allocation2 + $0x141] sm:$0xff]
    %v1680 = vld [vmem:[#allocation2 + $0x151] sm:$0xff]
    %v1681 = vld [vmem:[#allocation2 + $0x159] sm:$0xff]
    %v1682 = vld [vmem:[#allocation2 + $0x169] sm:$0xff]
    %v1683 = vld [vmem:[#allocation2 + $0x171] sm:$0xff]
    %v1684 = vld [vmem:[#allocation2 + $0x1b1] sm:$0xff]
    %v1685 = vld [vmem:[#allocation2 + $0x1b9] sm:$0xff]
    %v1686 = vld [vmem:[#allocation2 + $0x1c9] sm:$0xff]
    %v1687 = vld [vmem:[#allocation2 + $0x1d1] sm:$0xff]
    %v1688 = vld [vmem:[#allocation2 + $0x1e1] sm:$0xff]
    %v1689 = vld [vmem:[#allocation2 + $0x1e9] sm:$0xff]
    %v1690 = vld [vmem:[#allocation2 + $0x1f9] sm:$0xff]
    %v1691 = vld [vmem:[#allocation2 + $0x201] sm:$0xff]
    %v1692 = vld [vmem:[#allocation2 + $0x211] sm:$0xff]
    %v1693 = vld [vmem:[#allocation2 + $0x219] sm:$0xff]
    %v1694 = vld [vmem:[#allocation2 + $0x229] sm:$0xff]
    %v1695 = vld [vmem:[#allocation2 + $0x231] sm:$0xff]
    %v1696 = vld [vmem:[#allocation2 + $0x241] sm:$0xff]
    %v1697 = vld [vmem:[#allocation2 + $0x249] sm:$0xff]
    %v1698 = vld [vmem:[#allocation2 + $0x259] sm:$0xff]
    %v1699 = vld [vmem:[#allocation2 + $0x261] sm:$0xff]
    %v1700 = vld [vmem:[#allocation2 + $0x271] sm:$0xff]
    %v1701 = vld [vmem:[#allocation2 + $0x279] sm:$0xff]
    %v1702 = vld [vmem:[#allocation2 + $0x289] sm:$0xff]
    %v1703 = vld [vmem:[#allocation2 + $0x291] sm:$0xff]
    %v1704 = vld [vmem:[#allocation2 + $0x2a1] sm:$0xff]
    %v1705 = vld [vmem:[#allocation2 + $0x2a9] sm:$0xff]
    %v1706 = vld [vmem:[#allocation2 + $0x2b9] sm:$0xff]
    %v1707 = vld [vmem:[#allocation2 + $0x2c1] sm:$0xff]
    %v1708 = vld [vmem:[#allocation2 + $0x2d1] sm:$0xff]
    %v1709 = vld [vmem:[#allocation2 + $0x2d9] sm:$0xff]
    %v1710 = vld [vmem:[#allocation2 + $0x2e9] sm:$0xff]
    %v1711 = vld [vmem:[#allocation2 + $0x2f1] sm:$0xff]
    %v1712 = vld [vmem:[#allocation2 + $0x301] sm:$0xff]
    %v1713 = vld [vmem:[#allocation2 + $0x309] sm:$0xff]
    %v1714 = vld [vmem:[#allocation2 + $0x319] sm:$0xff]
    %v1715 = vld [vmem:[#allocation2 + $0x321] sm:$0xff]
    %1780 = vrot.lane.b32.xlu0 %v1652, 8
    %v1781 = vpop.permute.xlu0 %1780
    %1782 = vrot.lane.b32.xlu0 %v1653, 8
    %v1783 = vpop.permute.xlu0 %1782
    %1784 = vrot.lane.b32.xlu0 %v1654, 8
    %v1785 = vpop.permute.xlu0 %1784
    %1786 = vrot.lane.b32.xlu0 %v1655, 8
    %v1787 = vpop.permute.xlu0 %1786
    %1788 = vrot.lane.b32.xlu0 %v1656, 8
    %v1789 = vpop.permute.xlu0 %1788
    %1790 = vrot.lane.b32.xlu0 %v1657, 8
    %v1791 = vpop.permute.xlu0 %1790
    %1792 = vrot.lane.b32.xlu0 %v1658, 8
    %v1793 = vpop.permute.xlu0 %1792
    %1794 = vrot.lane.b32.xlu0 %v1659, 8
    %v1795 = vpop.permute.xlu0 %1794
    %1796 = vrot.lane.b32.xlu0 %v1660, 8
    %v1797 = vpop.permute.xlu0 %1796
    %1798 = vrot.lane.b32.xlu0 %v1661, 8
    %v1799 = vpop.permute.xlu0 %1798
    %1800 = vrot.lane.b32.xlu0 %v1662, 8
    %v1801 = vpop.permute.xlu0 %1800
    %1802 = vrot.lane.b32.xlu0 %v1663, 8
    %v1803 = vpop.permute.xlu0 %1802
    %1804 = vrot.lane.b32.xlu0 %v1664, 8
    %v1805 = vpop.permute.xlu0 %1804
    %1806 = vrot.lane.b32.xlu0 %v1665, 8
    %v1807 = vpop.permute.xlu0 %1806
    %1808 = vrot.lane.b32.xlu0 %v1666, 8
    %v1809 = vpop.permute.xlu0 %1808
    %1810 = vrot.lane.b32.xlu0 %v1667, 8
    %v1811 = vpop.permute.xlu0 %1810
    %1812 = vrot.lane.b32.xlu0 %v1668, 8
    %v1813 = vpop.permute.xlu0 %1812
    %1814 = vrot.lane.b32.xlu0 %v1669, 8
    %v1815 = vpop.permute.xlu0 %1814
    %1816 = vrot.lane.b32.xlu0 %v1670, 8
    %v1817 = vpop.permute.xlu0 %1816
    %1818 = vrot.lane.b32.xlu0 %v1671, 8
    %v1819 = vpop.permute.xlu0 %1818
    %1820 = vrot.lane.b32.xlu0 %v1672, 8
    %v1821 = vpop.permute.xlu0 %1820
    %1822 = vrot.lane.b32.xlu0 %v1673, 8
    %v1823 = vpop.permute.xlu0 %1822
    %1824 = vrot.lane.b32.xlu0 %v1674, 8
    %v1825 = vpop.permute.xlu0 %1824
    %1826 = vrot.lane.b32.xlu0 %v1675, 8
    %v1827 = vpop.permute.xlu0 %1826
    %1828 = vrot.lane.b32.xlu0 %v1676, 8
    %v1829 = vpop.permute.xlu0 %1828
    %1830 = vrot.lane.b32.xlu0 %v1677, 8
    %v1831 = vpop.permute.xlu0 %1830
    %1832 = vrot.lane.b32.xlu0 %v1678, 8
    %v1833 = vpop.permute.xlu0 %1832
    %1834 = vrot.lane.b32.xlu0 %v1679, 8
    %v1835 = vpop.permute.xlu0 %1834
    %1836 = vrot.lane.b32.xlu0 %v1680, 8
    %v1837 = vpop.permute.xlu0 %1836
    %1838 = vrot.lane.b32.xlu0 %v1681, 8
    %v1839 = vpop.permute.xlu0 %1838
    %1840 = vrot.lane.b32.xlu0 %v1682, 8
    %v1841 = vpop.permute.xlu0 %1840
    %1842 = vrot.lane.b32.xlu0 %v1683, 8
    %v1843 = vpop.permute.xlu0 %1842
    %1844 = vrot.lane.b32.xlu0 %v1684, 8
    %v1845 = vpop.permute.xlu0 %1844
    %1846 = vrot.lane.b32.xlu0 %v1685, 8
    %v1847 = vpop.permute.xlu0 %1846
    %1848 = vrot.lane.b32.xlu0 %v1686, 8
    %v1849 = vpop.permute.xlu0 %1848
    %1850 = vrot.lane.b32.xlu0 %v1687, 8
    %v1851 = vpop.permute.xlu0 %1850
    %1852 = vrot.lane.b32.xlu0 %v1688, 8
    %v1853 = vpop.permute.xlu0 %1852
    %1854 = vrot.lane.b32.xlu0 %v1689, 8
    %v1855 = vpop.permute.xlu0 %1854
    %1856 = vrot.lane.b32.xlu0 %v1690, 8
    %v1857 = vpop.permute.xlu0 %1856
    %1858 = vrot.lane.b32.xlu0 %v1691, 8
    %v1859 = vpop.permute.xlu0 %1858
    %1860 = vrot.lane.b32.xlu0 %v1692, 8
    %v1861 = vpop.permute.xlu0 %1860
    %1862 = vrot.lane.b32.xlu0 %v1693, 8
    %v1863 = vpop.permute.xlu0 %1862
    %1864 = vrot.lane.b32.xlu0 %v1694, 8
    %v1865 = vpop.permute.xlu0 %1864
    %1866 = vrot.lane.b32.xlu0 %v1695, 8
    %v1867 = vpop.permute.xlu0 %1866
    %1868 = vrot.lane.b32.xlu0 %v1696, 8
    %v1869 = vpop.permute.xlu0 %1868
    %1870 = vrot.lane.b32.xlu0 %v1697, 8
    %v1871 = vpop.permute.xlu0 %1870
    %1872 = vrot.lane.b32.xlu0 %v1698, 8
    %v1873 = vpop.permute.xlu0 %1872
    %1874 = vrot.lane.b32.xlu0 %v1699, 8
    %v1875 = vpop.permute.xlu0 %1874
    %1876 = vrot.lane.b32.xlu0 %v1700, 8
    %v1877 = vpop.permute.xlu0 %1876
    %1878 = vrot.lane.b32.xlu0 %v1701, 8
    %v1879 = vpop.permute.xlu0 %1878
    %1880 = vrot.lane.b32.xlu0 %v1702, 8
    %v1881 = vpop.permute.xlu0 %1880
    %1882 = vrot.lane.b32.xlu0 %v1703, 8
    %v1883 = vpop.permute.xlu0 %1882
    %1884 = vrot.lane.b32.xlu0 %v1704, 8
    %v1885 = vpop.permute.xlu0 %1884
    %1886 = vrot.lane.b32.xlu0 %v1705, 8
    %v1887 = vpop.permute.xlu0 %1886
    %1888 = vrot.lane.b32.xlu0 %v1706, 8
    %v1889 = vpop.permute.xlu0 %1888
    %1890 = vrot.lane.b32.xlu0 %v1707, 8
    %v1891 = vpop.permute.xlu0 %1890
    %1892 = vrot.lane.b32.xlu0 %v1708, 8
    %v1893 = vpop.permute.xlu0 %1892
    %1894 = vrot.lane.b32.xlu0 %v1709, 8
    %v1895 = vpop.permute.xlu0 %1894
    %1896 = vrot.lane.b32.xlu0 %v1710, 8
    %v1897 = vpop.permute.xlu0 %1896
    %1898 = vrot.lane.b32.xlu0 %v1711, 8
    %v1899 = vpop.permute.xlu0 %1898
    %1900 = vrot.lane.b32.xlu0 %v1712, 8
    %v1901 = vpop.permute.xlu0 %1900
    %1902 = vrot.lane.b32.xlu0 %v1713, 8
    %v1903 = vpop.permute.xlu0 %1902
    %1904 = vrot.lane.b32.xlu0 %v1714, 8
    %v1905 = vpop.permute.xlu0 %1904
    %1906 = vrot.lane.b32.xlu0 %v1715, 8
    %v1907 = vpop.permute.xlu0 %1906
    %vm1972 = vcmask 130112
    %1973 = vst.msk [vmem:[#allocation3] sm:$0xff] %vm1972, %v1781
    %1974 = vst.msk [vmem:[#allocation3 + $0x8] sm:$0xff] %vm1972, %v1783
    %1975 = vst.msk [vmem:[#allocation3 + $0x10] sm:$0xff] %vm1972, %v1785
    %1976 = vst.msk [vmem:[#allocation3 + $0x18] sm:$0xff] %vm1972, %v1787
    %1977 = vst.msk [vmem:[#allocation3 + $0x20] sm:$0xff] %vm1972, %v1789
    %1978 = vst.msk [vmem:[#allocation3 + $0x28] sm:$0xff] %vm1972, %v1791
    %1979 = vst.msk [vmem:[#allocation3 + $0x30] sm:$0xff] %vm1972, %v1793
    %1980 = vst.msk [vmem:[#allocation3 + $0x38] sm:$0xff] %vm1972, %v1795
    %1981 = vst.msk [vmem:[#allocation3 + $0x40] sm:$0xff] %vm1972, %v1797
    %1982 = vst.msk [vmem:[#allocation3 + $0x48] sm:$0xff] %vm1972, %v1799
    %1983 = vst.msk [vmem:[#allocation3 + $0x50] sm:$0xff] %vm1972, %v1801
    %1984 = vst.msk [vmem:[#allocation3 + $0x58] sm:$0xff] %vm1972, %v1803
    %1985 = vst.msk [vmem:[#allocation3 + $0x60] sm:$0xff] %vm1972, %v1805
    %1986 = vst.msk [vmem:[#allocation3 + $0x68] sm:$0xff] %vm1972, %v1807
    %1987 = vst.msk [vmem:[#allocation3 + $0x70] sm:$0xff] %vm1972, %v1809
    %1988 = vst.msk [vmem:[#allocation3 + $0x78] sm:$0xff] %vm1972, %v1811
    %1989 = vst.msk [vmem:[#allocation3 + $0x80] sm:$0xff] %vm1972, %v1813
    %1990 = vst.msk [vmem:[#allocation3 + $0x88] sm:$0xff] %vm1972, %v1815
    %1991 = vst.msk [vmem:[#allocation3 + $0x90] sm:$0xff] %vm1972, %v1817
    %1992 = vst.msk [vmem:[#allocation3 + $0x98] sm:$0xff] %vm1972, %v1819
    %1993 = vst.msk [vmem:[#allocation3 + $0xa0] sm:$0xff] %vm1972, %v1821
    %1994 = vst.msk [vmem:[#allocation3 + $0xa8] sm:$0xff] %vm1972, %v1823
    %1995 = vst.msk [vmem:[#allocation3 + $0xb0] sm:$0xff] %vm1972, %v1825
    %1996 = vst.msk [vmem:[#allocation3 + $0xb8] sm:$0xff] %vm1972, %v1827
    %1997 = vst.msk [vmem:[#allocation3 + $0xc0] sm:$0xff] %vm1972, %v1829
    %1998 = vst.msk [vmem:[#allocation3 + $0xc8] sm:$0xff] %vm1972, %v1831
    %1999 = vst.msk [vmem:[#allocation3 + $0xd0] sm:$0xff] %vm1972, %v1833
    %2000 = vst.msk [vmem:[#allocation3 + $0xd8] sm:$0xff] %vm1972, %v1835
    %2001 = vst.msk [vmem:[#allocation3 + $0xe0] sm:$0xff] %vm1972, %v1837
    %2002 = vst.msk [vmem:[#allocation3 + $0xe8] sm:$0xff] %vm1972, %v1839
    %2003 = vst.msk [vmem:[#allocation3 + $0xf0] sm:$0xff] %vm1972, %v1841
    %2004 = vst.msk [vmem:[#allocation3 + $0xf8] sm:$0xff] %vm1972, %v1843
    %2005 = vst.msk [vmem:[#allocation3 + $0x100] sm:$0xff] %vm1972, %v1845
    %2006 = vst.msk [vmem:[#allocation3 + $0x108] sm:$0xff] %vm1972, %v1847
    %2007 = vst.msk [vmem:[#allocation3 + $0x110] sm:$0xff] %vm1972, %v1849
    %2008 = vst.msk [vmem:[#allocation3 + $0x118] sm:$0xff] %vm1972, %v1851
    %2009 = vst.msk [vmem:[#allocation3 + $0x120] sm:$0xff] %vm1972, %v1853
    %2010 = vst.msk [vmem:[#allocation3 + $0x128] sm:$0xff] %vm1972, %v1855
    %2011 = vst.msk [vmem:[#allocation3 + $0x130] sm:$0xff] %vm1972, %v1857
    %2012 = vst.msk [vmem:[#allocation3 + $0x138] sm:$0xff] %vm1972, %v1859
    %2013 = vst.msk [vmem:[#allocation3 + $0x140] sm:$0xff] %vm1972, %v1861
    %2014 = vst.msk [vmem:[#allocation3 + $0x148] sm:$0xff] %vm1972, %v1863
    %2015 = vst.msk [vmem:[#allocation3 + $0x150] sm:$0xff] %vm1972, %v1865
    %2016 = vst.msk [vmem:[#allocation3 + $0x158] sm:$0xff] %vm1972, %v1867
    %2017 = vst.msk [vmem:[#allocation3 + $0x160] sm:$0xff] %vm1972, %v1869
    %2018 = vst.msk [vmem:[#allocation3 + $0x168] sm:$0xff] %vm1972, %v1871
    %2019 = vst.msk [vmem:[#allocation3 + $0x170] sm:$0xff] %vm1972, %v1873
    %2020 = vst.msk [vmem:[#allocation3 + $0x178] sm:$0xff] %vm1972, %v1875
    %2021 = vst.msk [vmem:[#allocation3 + $0x180] sm:$0xff] %vm1972, %v1877
    %2022 = vst.msk [vmem:[#allocation3 + $0x188] sm:$0xff] %vm1972, %v1879
    %2023 = vst.msk [vmem:[#allocation3 + $0x190] sm:$0xff] %vm1972, %v1881
    %2024 = vst.msk [vmem:[#allocation3 + $0x198] sm:$0xff] %vm1972, %v1883
    %2025 = vst.msk [vmem:[#allocation3 + $0x1a0] sm:$0xff] %vm1972, %v1885
    %2026 = vst.msk [vmem:[#allocation3 + $0x1a8] sm:$0xff] %vm1972, %v1887
    %2027 = vst.msk [vmem:[#allocation3 + $0x1b0] sm:$0xff] %vm1972, %v1889
    %2028 = vst.msk [vmem:[#allocation3 + $0x1b8] sm:$0xff] %vm1972, %v1891
    %2029 = vst.msk [vmem:[#allocation3 + $0x1c0] sm:$0xff] %vm1972, %v1893
    %2030 = vst.msk [vmem:[#allocation3 + $0x1c8] sm:$0xff] %vm1972, %v1895
    %2031 = vst.msk [vmem:[#allocation3 + $0x1d0] sm:$0xff] %vm1972, %v1897
    %2032 = vst.msk [vmem:[#allocation3 + $0x1d8] sm:$0xff] %vm1972, %v1899
    %2033 = vst.msk [vmem:[#allocation3 + $0x1e0] sm:$0xff] %vm1972, %v1901
    %2034 = vst.msk [vmem:[#allocation3 + $0x1e8] sm:$0xff] %vm1972, %v1903
    %2035 = vst.msk [vmem:[#allocation3 + $0x1f0] sm:$0xff] %vm1972, %v1905
    %2036 = vst.msk [vmem:[#allocation3 + $0x1f8] sm:$0xff] %vm1972, %v1907
    %v2037 = vld [vmem:[#allocation2 + $0x2] sm:$0xff]
    %v2038 = vld [vmem:[#allocation2 + $0xa] sm:$0xff]
    %v2039 = vld [vmem:[#allocation2 + $0x1a] sm:$0xff]
    %v2040 = vld [vmem:[#allocation2 + $0x22] sm:$0xff]
    %v2041 = vld [vmem:[#allocation2 + $0x32] sm:$0xff]
    %v2042 = vld [vmem:[#allocation2 + $0x3a] sm:$0xff]
    %v2043 = vld [vmem:[#allocation2 + $0x4a] sm:$0xff]
    %v2044 = vld [vmem:[#allocation2 + $0x52] sm:$0xff]
    %v2045 = vld [vmem:[#allocation2 + $0x62] sm:$0xff]
    %v2046 = vld [vmem:[#allocation2 + $0x6a] sm:$0xff]
    %v2047 = vld [vmem:[#allocation2 + $0x7a] sm:$0xff]
    %v2048 = vld [vmem:[#allocation2 + $0x82] sm:$0xff]
    %v2049 = vld [vmem:[#allocation2 + $0x92] sm:$0xff]
    %v2050 = vld [vmem:[#allocation2 + $0x9a] sm:$0xff]
    %v2051 = vld [vmem:[#allocation2 + $0xaa] sm:$0xff]
    %v2052 = vld [vmem:[#allocation2 + $0xb2] sm:$0xff]
    %v2053 = vld [vmem:[#allocation2 + $0xc2] sm:$0xff]
    %v2054 = vld [vmem:[#allocation2 + $0xca] sm:$0xff]
    %v2055 = vld [vmem:[#allocation2 + $0xda] sm:$0xff]
    %v2056 = vld [vmem:[#allocation2 + $0xe2] sm:$0xff]
    %v2057 = vld [vmem:[#allocation2 + $0xf2] sm:$0xff]
    %v2058 = vld [vmem:[#allocation2 + $0xfa] sm:$0xff]
    %v2059 = vld [vmem:[#allocation2 + $0x10a] sm:$0xff]
    %v2060 = vld [vmem:[#allocation2 + $0x112] sm:$0xff]
    %v2061 = vld [vmem:[#allocation2 + $0x122] sm:$0xff]
    %v2062 = vld [vmem:[#allocation2 + $0x12a] sm:$0xff]
    %v2063 = vld [vmem:[#allocation2 + $0x13a] sm:$0xff]
    %v2064 = vld [vmem:[#allocation2 + $0x142] sm:$0xff]
    %v2065 = vld [vmem:[#allocation2 + $0x152] sm:$0xff]
    %v2066 = vld [vmem:[#allocation2 + $0x15a] sm:$0xff]
    %v2067 = vld [vmem:[#allocation2 + $0x16a] sm:$0xff]
    %v2068 = vld [vmem:[#allocation2 + $0x172] sm:$0xff]
    %v2069 = vld [vmem:[#allocation2 + $0x1b2] sm:$0xff]
    %v2070 = vld [vmem:[#allocation2 + $0x1ba] sm:$0xff]
    %v2071 = vld [vmem:[#allocation2 + $0x1ca] sm:$0xff]
    %v2072 = vld [vmem:[#allocation2 + $0x1d2] sm:$0xff]
    %v2073 = vld [vmem:[#allocation2 + $0x1e2] sm:$0xff]
    %v2074 = vld [vmem:[#allocation2 + $0x1ea] sm:$0xff]
    %v2075 = vld [vmem:[#allocation2 + $0x1fa] sm:$0xff]
    %v2076 = vld [vmem:[#allocation2 + $0x202] sm:$0xff]
    %v2077 = vld [vmem:[#allocation2 + $0x212] sm:$0xff]
    %v2078 = vld [vmem:[#allocation2 + $0x21a] sm:$0xff]
    %v2079 = vld [vmem:[#allocation2 + $0x22a] sm:$0xff]
    %v2080 = vld [vmem:[#allocation2 + $0x232] sm:$0xff]
    %v2081 = vld [vmem:[#allocation2 + $0x242] sm:$0xff]
    %v2082 = vld [vmem:[#allocation2 + $0x24a] sm:$0xff]
    %v2083 = vld [vmem:[#allocation2 + $0x25a] sm:$0xff]
    %v2084 = vld [vmem:[#allocation2 + $0x262] sm:$0xff]
    %v2085 = vld [vmem:[#allocation2 + $0x272] sm:$0xff]
    %v2086 = vld [vmem:[#allocation2 + $0x27a] sm:$0xff]
    %v2087 = vld [vmem:[#allocation2 + $0x28a] sm:$0xff]
    %v2088 = vld [vmem:[#allocation2 + $0x292] sm:$0xff]
    %v2089 = vld [vmem:[#allocation2 + $0x2a2] sm:$0xff]
    %v2090 = vld [vmem:[#allocation2 + $0x2aa] sm:$0xff]
    %v2091 = vld [vmem:[#allocation2 + $0x2ba] sm:$0xff]
    %v2092 = vld [vmem:[#allocation2 + $0x2c2] sm:$0xff]
    %v2093 = vld [vmem:[#allocation2 + $0x2d2] sm:$0xff]
    %v2094 = vld [vmem:[#allocation2 + $0x2da] sm:$0xff]
    %v2095 = vld [vmem:[#allocation2 + $0x2ea] sm:$0xff]
    %v2096 = vld [vmem:[#allocation2 + $0x2f2] sm:$0xff]
    %v2097 = vld [vmem:[#allocation2 + $0x302] sm:$0xff]
    %v2098 = vld [vmem:[#allocation2 + $0x30a] sm:$0xff]
    %v2099 = vld [vmem:[#allocation2 + $0x31a] sm:$0xff]
    %v2100 = vld [vmem:[#allocation2 + $0x322] sm:$0xff]
    %2165 = vrot.lane.b32.xlu0 %v2037, 16
    %v2166 = vpop.permute.xlu0 %2165
    %2167 = vrot.lane.b32.xlu0 %v2038, 16
    %v2168 = vpop.permute.xlu0 %2167
    %2169 = vrot.lane.b32.xlu0 %v2039, 16
    %v2170 = vpop.permute.xlu0 %2169
    %2171 = vrot.lane.b32.xlu0 %v2040, 16
    %v2172 = vpop.permute.xlu0 %2171
    %2173 = vrot.lane.b32.xlu0 %v2041, 16
    %v2174 = vpop.permute.xlu0 %2173
    %2175 = vrot.lane.b32.xlu0 %v2042, 16
    %v2176 = vpop.permute.xlu0 %2175
    %2177 = vrot.lane.b32.xlu0 %v2043, 16
    %v2178 = vpop.permute.xlu0 %2177
    %2179 = vrot.lane.b32.xlu0 %v2044, 16
    %v2180 = vpop.permute.xlu0 %2179
    %2181 = vrot.lane.b32.xlu0 %v2045, 16
    %v2182 = vpop.permute.xlu0 %2181
    %2183 = vrot.lane.b32.xlu0 %v2046, 16
    %v2184 = vpop.permute.xlu0 %2183
    %2185 = vrot.lane.b32.xlu0 %v2047, 16
    %v2186 = vpop.permute.xlu0 %2185
    %2187 = vrot.lane.b32.xlu0 %v2048, 16
    %v2188 = vpop.permute.xlu0 %2187
    %2189 = vrot.lane.b32.xlu0 %v2049, 16
    %v2190 = vpop.permute.xlu0 %2189
    %2191 = vrot.lane.b32.xlu0 %v2050, 16
    %v2192 = vpop.permute.xlu0 %2191
    %2193 = vrot.lane.b32.xlu0 %v2051, 16
    %v2194 = vpop.permute.xlu0 %2193
    %2195 = vrot.lane.b32.xlu0 %v2052, 16
    %v2196 = vpop.permute.xlu0 %2195
    %2197 = vrot.lane.b32.xlu0 %v2053, 16
    %v2198 = vpop.permute.xlu0 %2197
    %2199 = vrot.lane.b32.xlu0 %v2054, 16
    %v2200 = vpop.permute.xlu0 %2199
    %2201 = vrot.lane.b32.xlu0 %v2055, 16
    %v2202 = vpop.permute.xlu0 %2201
    %2203 = vrot.lane.b32.xlu0 %v2056, 16
    %v2204 = vpop.permute.xlu0 %2203
    %2205 = vrot.lane.b32.xlu0 %v2057, 16
    %v2206 = vpop.permute.xlu0 %2205
    %2207 = vrot.lane.b32.xlu0 %v2058, 16
    %v2208 = vpop.permute.xlu0 %2207
    %2209 = vrot.lane.b32.xlu0 %v2059, 16
    %v2210 = vpop.permute.xlu0 %2209
    %2211 = vrot.lane.b32.xlu0 %v2060, 16
    %v2212 = vpop.permute.xlu0 %2211
    %2213 = vrot.lane.b32.xlu0 %v2061, 16
    %v2214 = vpop.permute.xlu0 %2213
    %2215 = vrot.lane.b32.xlu0 %v2062, 16
    %v2216 = vpop.permute.xlu0 %2215
    %2217 = vrot.lane.b32.xlu0 %v2063, 16
    %v2218 = vpop.permute.xlu0 %2217
    %2219 = vrot.lane.b32.xlu0 %v2064, 16
    %v2220 = vpop.permute.xlu0 %2219
    %2221 = vrot.lane.b32.xlu0 %v2065, 16
    %v2222 = vpop.permute.xlu0 %2221
    %2223 = vrot.lane.b32.xlu0 %v2066, 16
    %v2224 = vpop.permute.xlu0 %2223
    %2225 = vrot.lane.b32.xlu0 %v2067, 16
    %v2226 = vpop.permute.xlu0 %2225
    %2227 = vrot.lane.b32.xlu0 %v2068, 16
    %v2228 = vpop.permute.xlu0 %2227
    %2229 = vrot.lane.b32.xlu0 %v2069, 16
    %v2230 = vpop.permute.xlu0 %2229
    %2231 = vrot.lane.b32.xlu0 %v2070, 16
    %v2232 = vpop.permute.xlu0 %2231
    %2233 = vrot.lane.b32.xlu0 %v2071, 16
    %v2234 = vpop.permute.xlu0 %2233
    %2235 = vrot.lane.b32.xlu0 %v2072, 16
    %v2236 = vpop.permute.xlu0 %2235
    %2237 = vrot.lane.b32.xlu0 %v2073, 16
    %v2238 = vpop.permute.xlu0 %2237
    %2239 = vrot.lane.b32.xlu0 %v2074, 16
    %v2240 = vpop.permute.xlu0 %2239
    %2241 = vrot.lane.b32.xlu0 %v2075, 16
    %v2242 = vpop.permute.xlu0 %2241
    %2243 = vrot.lane.b32.xlu0 %v2076, 16
    %v2244 = vpop.permute.xlu0 %2243
    %2245 = vrot.lane.b32.xlu0 %v2077, 16
    %v2246 = vpop.permute.xlu0 %2245
    %2247 = vrot.lane.b32.xlu0 %v2078, 16
    %v2248 = vpop.permute.xlu0 %2247
    %2249 = vrot.lane.b32.xlu0 %v2079, 16
    %v2250 = vpop.permute.xlu0 %2249
    %2251 = vrot.lane.b32.xlu0 %v2080, 16
    %v2252 = vpop.permute.xlu0 %2251
    %2253 = vrot.lane.b32.xlu0 %v2081, 16
    %v2254 = vpop.permute.xlu0 %2253
    %2255 = vrot.lane.b32.xlu0 %v2082, 16
    %v2256 = vpop.permute.xlu0 %2255
    %2257 = vrot.lane.b32.xlu0 %v2083, 16
    %v2258 = vpop.permute.xlu0 %2257
    %2259 = vrot.lane.b32.xlu0 %v2084, 16
    %v2260 = vpop.permute.xlu0 %2259
    %2261 = vrot.lane.b32.xlu0 %v2085, 16
    %v2262 = vpop.permute.xlu0 %2261
    %2263 = vrot.lane.b32.xlu0 %v2086, 16
    %v2264 = vpop.permute.xlu0 %2263
    %2265 = vrot.lane.b32.xlu0 %v2087, 16
    %v2266 = vpop.permute.xlu0 %2265
    %2267 = vrot.lane.b32.xlu0 %v2088, 16
    %v2268 = vpop.permute.xlu0 %2267
    %2269 = vrot.lane.b32.xlu0 %v2089, 16
    %v2270 = vpop.permute.xlu0 %2269
    %2271 = vrot.lane.b32.xlu0 %v2090, 16
    %v2272 = vpop.permute.xlu0 %2271
    %2273 = vrot.lane.b32.xlu0 %v2091, 16
    %v2274 = vpop.permute.xlu0 %2273
    %2275 = vrot.lane.b32.xlu0 %v2092, 16
    %v2276 = vpop.permute.xlu0 %2275
    %2277 = vrot.lane.b32.xlu0 %v2093, 16
    %v2278 = vpop.permute.xlu0 %2277
    %2279 = vrot.lane.b32.xlu0 %v2094, 16
    %v2280 = vpop.permute.xlu0 %2279
    %2281 = vrot.lane.b32.xlu0 %v2095, 16
    %v2282 = vpop.permute.xlu0 %2281
    %2283 = vrot.lane.b32.xlu0 %v2096, 16
    %v2284 = vpop.permute.xlu0 %2283
    %2285 = vrot.lane.b32.xlu0 %v2097, 16
    %v2286 = vpop.permute.xlu0 %2285
    %2287 = vrot.lane.b32.xlu0 %v2098, 16
    %v2288 = vpop.permute.xlu0 %2287
    %2289 = vrot.lane.b32.xlu0 %v2099, 16
    %v2290 = vpop.permute.xlu0 %2289
    %2291 = vrot.lane.b32.xlu0 %v2100, 16
    %v2292 = vpop.permute.xlu0 %2291
    %vm2357 = vcmask 195712
    %2358 = vst.msk [vmem:[#allocation3] sm:$0xff] %vm2357, %v2166
    %2359 = vst.msk [vmem:[#allocation3 + $0x8] sm:$0xff] %vm2357, %v2168
    %2360 = vst.msk [vmem:[#allocation3 + $0x10] sm:$0xff] %vm2357, %v2170
    %2361 = vst.msk [vmem:[#allocation3 + $0x18] sm:$0xff] %vm2357, %v2172
    %2362 = vst.msk [vmem:[#allocation3 + $0x20] sm:$0xff] %vm2357, %v2174
    %2363 = vst.msk [vmem:[#allocation3 + $0x28] sm:$0xff] %vm2357, %v2176
    %2364 = vst.msk [vmem:[#allocation3 + $0x30] sm:$0xff] %vm2357, %v2178
    %2365 = vst.msk [vmem:[#allocation3 + $0x38] sm:$0xff] %vm2357, %v2180
    %2366 = vst.msk [vmem:[#allocation3 + $0x40] sm:$0xff] %vm2357, %v2182
    %2367 = vst.msk [vmem:[#allocation3 + $0x48] sm:$0xff] %vm2357, %v2184
    %2368 = vst.msk [vmem:[#allocation3 + $0x50] sm:$0xff] %vm2357, %v2186
    %2369 = vst.msk [vmem:[#allocation3 + $0x58] sm:$0xff] %vm2357, %v2188
    %2370 = vst.msk [vmem:[#allocation3 + $0x60] sm:$0xff] %vm2357, %v2190
    %2371 = vst.msk [vmem:[#allocation3 + $0x68] sm:$0xff] %vm2357, %v2192
    %2372 = vst.msk [vmem:[#allocation3 + $0x70] sm:$0xff] %vm2357, %v2194
    %2373 = vst.msk [vmem:[#allocation3 + $0x78] sm:$0xff] %vm2357, %v2196
    %2374 = vst.msk [vmem:[#allocation3 + $0x80] sm:$0xff] %vm2357, %v2198
    %2375 = vst.msk [vmem:[#allocation3 + $0x88] sm:$0xff] %vm2357, %v2200
    %2376 = vst.msk [vmem:[#allocation3 + $0x90] sm:$0xff] %vm2357, %v2202
    %2377 = vst.msk [vmem:[#allocation3 + $0x98] sm:$0xff] %vm2357, %v2204
    %2378 = vst.msk [vmem:[#allocation3 + $0xa0] sm:$0xff] %vm2357, %v2206
    %2379 = vst.msk [vmem:[#allocation3 + $0xa8] sm:$0xff] %vm2357, %v2208
    %2380 = vst.msk [vmem:[#allocation3 + $0xb0] sm:$0xff] %vm2357, %v2210
    %2381 = vst.msk [vmem:[#allocation3 + $0xb8] sm:$0xff] %vm2357, %v2212
    %2382 = vst.msk [vmem:[#allocation3 + $0xc0] sm:$0xff] %vm2357, %v2214
    %2383 = vst.msk [vmem:[#allocation3 + $0xc8] sm:$0xff] %vm2357, %v2216
    %2384 = vst.msk [vmem:[#allocation3 + $0xd0] sm:$0xff] %vm2357, %v2218
    %2385 = vst.msk [vmem:[#allocation3 + $0xd8] sm:$0xff] %vm2357, %v2220
    %2386 = vst.msk [vmem:[#allocation3 + $0xe0] sm:$0xff] %vm2357, %v2222
    %2387 = vst.msk [vmem:[#allocation3 + $0xe8] sm:$0xff] %vm2357, %v2224
    %2388 = vst.msk [vmem:[#allocation3 + $0xf0] sm:$0xff] %vm2357, %v2226
    %2389 = vst.msk [vmem:[#allocation3 + $0xf8] sm:$0xff] %vm2357, %v2228
    %2390 = vst.msk [vmem:[#allocation3 + $0x100] sm:$0xff] %vm2357, %v2230
    %2391 = vst.msk [vmem:[#allocation3 + $0x108] sm:$0xff] %vm2357, %v2232
    %2392 = vst.msk [vmem:[#allocation3 + $0x110] sm:$0xff] %vm2357, %v2234
    %2393 = vst.msk [vmem:[#allocation3 + $0x118] sm:$0xff] %vm2357, %v2236
    %2394 = vst.msk [vmem:[#allocation3 + $0x120] sm:$0xff] %vm2357, %v2238
    %2395 = vst.msk [vmem:[#allocation3 + $0x128] sm:$0xff] %vm2357, %v2240
    %2396 = vst.msk [vmem:[#allocation3 + $0x130] sm:$0xff] %vm2357, %v2242
    %2397 = vst.msk [vmem:[#allocation3 + $0x138] sm:$0xff] %vm2357, %v2244
    %2398 = vst.msk [vmem:[#allocation3 + $0x140] sm:$0xff] %vm2357, %v2246
    %2399 = vst.msk [vmem:[#allocation3 + $0x148] sm:$0xff] %vm2357, %v2248
    %2400 = vst.msk [vmem:[#allocation3 + $0x150] sm:$0xff] %vm2357, %v2250
    %2401 = vst.msk [vmem:[#allocation3 + $0x158] sm:$0xff] %vm2357, %v2252
    %2402 = vst.msk [vmem:[#allocation3 + $0x160] sm:$0xff] %vm2357, %v2254
    %2403 = vst.msk [vmem:[#allocation3 + $0x168] sm:$0xff] %vm2357, %v2256
    %2404 = vst.msk [vmem:[#allocation3 + $0x170] sm:$0xff] %vm2357, %v2258
    %2405 = vst.msk [vmem:[#allocation3 + $0x178] sm:$0xff] %vm2357, %v2260
    %2406 = vst.msk [vmem:[#allocation3 + $0x180] sm:$0xff] %vm2357, %v2262
    %2407 = vst.msk [vmem:[#allocation3 + $0x188] sm:$0xff] %vm2357, %v2264
    %2408 = vst.msk [vmem:[#allocation3 + $0x190] sm:$0xff] %vm2357, %v2266
    %2409 = vst.msk [vmem:[#allocation3 + $0x198] sm:$0xff] %vm2357, %v2268
    %2410 = vst.msk [vmem:[#allocation3 + $0x1a0] sm:$0xff] %vm2357, %v2270
    %2411 = vst.msk [vmem:[#allocation3 + $0x1a8] sm:$0xff] %vm2357, %v2272
    %2412 = vst.msk [vmem:[#allocation3 + $0x1b0] sm:$0xff] %vm2357, %v2274
    %2413 = vst.msk [vmem:[#allocation3 + $0x1b8] sm:$0xff] %vm2357, %v2276
    %2414 = vst.msk [vmem:[#allocation3 + $0x1c0] sm:$0xff] %vm2357, %v2278
    %2415 = vst.msk [vmem:[#allocation3 + $0x1c8] sm:$0xff] %vm2357, %v2280
    %2416 = vst.msk [vmem:[#allocation3 + $0x1d0] sm:$0xff] %vm2357, %v2282
    %2417 = vst.msk [vmem:[#allocation3 + $0x1d8] sm:$0xff] %vm2357, %v2284
    %2418 = vst.msk [vmem:[#allocation3 + $0x1e0] sm:$0xff] %vm2357, %v2286
    %2419 = vst.msk [vmem:[#allocation3 + $0x1e8] sm:$0xff] %vm2357, %v2288
    %2420 = vst.msk [vmem:[#allocation3 + $0x1f0] sm:$0xff] %vm2357, %v2290
    %2421 = vst.msk [vmem:[#allocation3 + $0x1f8] sm:$0xff] %vm2357, %v2292
    %v2422 = vld [vmem:[%s1459] sm:$0xff]
    %v2423 = vld [vmem:[%s1459 + $0x8] sm:$0xff]
    %v2424 = vld [vmem:[%s1459 + $0x18] sm:$0xff]
    %v2425 = vld [vmem:[%s1459 + $0x20] sm:$0xff]
    %v2426 = vld [vmem:[%s1459 + $0x30] sm:$0xff]
    %v2427 = vld [vmem:[%s1459 + $0x38] sm:$0xff]
    %v2428 = vld [vmem:[%s1459 + $0x48] sm:$0xff]
    %v2429 = vld [vmem:[%s1459 + $0x50] sm:$0xff]
    %v2430 = vld [vmem:[%s1459 + $0x60] sm:$0xff]
    %v2431 = vld [vmem:[%s1459 + $0x68] sm:$0xff]
    %v2432 = vld [vmem:[%s1459 + $0x78] sm:$0xff]
    %v2433 = vld [vmem:[%s1459 + $0x80] sm:$0xff]
    %v2434 = vld [vmem:[%s1459 + $0x90] sm:$0xff]
    %v2435 = vld [vmem:[%s1459 + $0x98] sm:$0xff]
    %v2436 = vld [vmem:[%s1459 + $0xa8] sm:$0xff]
    %v2437 = vld [vmem:[%s1459 + $0xb0] sm:$0xff]
    %v2438 = vld [vmem:[%s1459 + $0xc0] sm:$0xff]
    %v2439 = vld [vmem:[%s1459 + $0xc8] sm:$0xff]
    %v2440 = vld [vmem:[%s1459 + $0xd8] sm:$0xff]
    %v2441 = vld [vmem:[%s1459 + $0xe0] sm:$0xff]
    %v2442 = vld [vmem:[%s1459 + $0xf0] sm:$0xff]
    %v2443 = vld [vmem:[%s1459 + $0xf8] sm:$0xff]
    %v2444 = vld [vmem:[%s1459 + $0x108] sm:$0xff]
    %v2445 = vld [vmem:[%s1459 + $0x110] sm:$0xff]
    %v2446 = vld [vmem:[%s1459 + $0x120] sm:$0xff]
    %v2447 = vld [vmem:[%s1459 + $0x128] sm:$0xff]
    %v2448 = vld [vmem:[%s1459 + $0x138] sm:$0xff]
    %v2449 = vld [vmem:[%s1459 + $0x140] sm:$0xff]
    %v2450 = vld [vmem:[%s1459 + $0x150] sm:$0xff]
    %v2451 = vld [vmem:[%s1459 + $0x158] sm:$0xff]
    %v2452 = vld [vmem:[%s1459 + $0x168] sm:$0xff]
    %v2453 = vld [vmem:[%s1459 + $0x170] sm:$0xff]
    %v2454 = vld [vmem:[%s1459 + $0x1b0] sm:$0xff]
    %v2455 = vld [vmem:[%s1459 + $0x1b8] sm:$0xff]
    %v2456 = vld [vmem:[%s1459 + $0x1c8] sm:$0xff]
    %v2457 = vld [vmem:[%s1459 + $0x1d0] sm:$0xff]
    %v2458 = vld [vmem:[%s1459 + $0x1e0] sm:$0xff]
    %v2459 = vld [vmem:[%s1459 + $0x1e8] sm:$0xff]
    %v2460 = vld [vmem:[%s1459 + $0x1f8] sm:$0xff]
    %v2461 = vld [vmem:[%s1459 + $0x200] sm:$0xff]
    %v2462 = vld [vmem:[%s1459 + $0x210] sm:$0xff]
    %v2463 = vld [vmem:[%s1459 + $0x218] sm:$0xff]
    %v2464 = vld [vmem:[%s1459 + $0x228] sm:$0xff]
    %v2465 = vld [vmem:[%s1459 + $0x230] sm:$0xff]
    %v2466 = vld [vmem:[%s1459 + $0x240] sm:$0xff]
    %v2467 = vld [vmem:[%s1459 + $0x248] sm:$0xff]
    %v2468 = vld [vmem:[%s1459 + $0x258] sm:$0xff]
    %v2469 = vld [vmem:[%s1459 + $0x260] sm:$0xff]
    %v2470 = vld [vmem:[%s1459 + $0x270] sm:$0xff]
    %v2471 = vld [vmem:[%s1459 + $0x278] sm:$0xff]
    %v2472 = vld [vmem:[%s1459 + $0x288] sm:$0xff]
    %v2473 = vld [vmem:[%s1459 + $0x290] sm:$0xff]
    %v2474 = vld [vmem:[%s1459 + $0x2a0] sm:$0xff]
    %v2475 = vld [vmem:[%s1459 + $0x2a8] sm:$0xff]
    %v2476 = vld [vmem:[%s1459 + $0x2b8] sm:$0xff]
    %v2477 = vld [vmem:[%s1459 + $0x2c0] sm:$0xff]
    %v2478 = vld [vmem:[%s1459 + $0x2d0] sm:$0xff]
    %v2479 = vld [vmem:[%s1459 + $0x2d8] sm:$0xff]
    %v2480 = vld [vmem:[%s1459 + $0x2e8] sm:$0xff]
    %v2481 = vld [vmem:[%s1459 + $0x2f0] sm:$0xff]
    %v2482 = vld [vmem:[%s1459 + $0x300] sm:$0xff]
    %v2483 = vld [vmem:[%s1459 + $0x308] sm:$0xff]
    %v2484 = vld [vmem:[%s1459 + $0x318] sm:$0xff]
    %v2485 = vld [vmem:[%s1459 + $0x320] sm:$0xff]
    %2550 = vrot.lane.b32.xlu0 %v2422, 24
    %v2551 = vpop.permute.xlu0 %2550
    %2552 = vrot.lane.b32.xlu0 %v2423, 24
    %v2553 = vpop.permute.xlu0 %2552
    %2554 = vrot.lane.b32.xlu0 %v2424, 24
    %v2555 = vpop.permute.xlu0 %2554
    %2556 = vrot.lane.b32.xlu0 %v2425, 24
    %v2557 = vpop.permute.xlu0 %2556
    %2558 = vrot.lane.b32.xlu0 %v2426, 24
    %v2559 = vpop.permute.xlu0 %2558
    %2560 = vrot.lane.b32.xlu0 %v2427, 24
    %v2561 = vpop.permute.xlu0 %2560
    %2562 = vrot.lane.b32.xlu0 %v2428, 24
    %v2563 = vpop.permute.xlu0 %2562
    %2564 = vrot.lane.b32.xlu0 %v2429, 24
    %v2565 = vpop.permute.xlu0 %2564
    %2566 = vrot.lane.b32.xlu0 %v2430, 24
    %v2567 = vpop.permute.xlu0 %2566
    %2568 = vrot.lane.b32.xlu0 %v2431, 24
    %v2569 = vpop.permute.xlu0 %2568
    %2570 = vrot.lane.b32.xlu0 %v2432, 24
    %v2571 = vpop.permute.xlu0 %2570
    %2572 = vrot.lane.b32.xlu0 %v2433, 24
    %v2573 = vpop.permute.xlu0 %2572
    %2574 = vrot.lane.b32.xlu0 %v2434, 24
    %v2575 = vpop.permute.xlu0 %2574
    %2576 = vrot.lane.b32.xlu0 %v2435, 24
    %v2577 = vpop.permute.xlu0 %2576
    %2578 = vrot.lane.b32.xlu0 %v2436, 24
    %v2579 = vpop.permute.xlu0 %2578
    %2580 = vrot.lane.b32.xlu0 %v2437, 24
    %v2581 = vpop.permute.xlu0 %2580
    %2582 = vrot.lane.b32.xlu0 %v2438, 24
    %v2583 = vpop.permute.xlu0 %2582
    %2584 = vrot.lane.b32.xlu0 %v2439, 24
    %v2585 = vpop.permute.xlu0 %2584
    %2586 = vrot.lane.b32.xlu0 %v2440, 24
    %v2587 = vpop.permute.xlu0 %2586
    %2588 = vrot.lane.b32.xlu0 %v2441, 24
    %v2589 = vpop.permute.xlu0 %2588
    %2590 = vrot.lane.b32.xlu0 %v2442, 24
    %v2591 = vpop.permute.xlu0 %2590
    %2592 = vrot.lane.b32.xlu0 %v2443, 24
    %v2593 = vpop.permute.xlu0 %2592
    %2594 = vrot.lane.b32.xlu0 %v2444, 24
    %v2595 = vpop.permute.xlu0 %2594
    %2596 = vrot.lane.b32.xlu0 %v2445, 24
    %v2597 = vpop.permute.xlu0 %2596
    %2598 = vrot.lane.b32.xlu0 %v2446, 24
    %v2599 = vpop.permute.xlu0 %2598
    %2600 = vrot.lane.b32.xlu0 %v2447, 24
    %v2601 = vpop.permute.xlu0 %2600
    %2602 = vrot.lane.b32.xlu0 %v2448, 24
    %v2603 = vpop.permute.xlu0 %2602
    %2604 = vrot.lane.b32.xlu0 %v2449, 24
    %v2605 = vpop.permute.xlu0 %2604
    %2606 = vrot.lane.b32.xlu0 %v2450, 24
    %v2607 = vpop.permute.xlu0 %2606
    %2608 = vrot.lane.b32.xlu0 %v2451, 24
    %v2609 = vpop.permute.xlu0 %2608
    %2610 = vrot.lane.b32.xlu0 %v2452, 24
    %v2611 = vpop.permute.xlu0 %2610
    %2612 = vrot.lane.b32.xlu0 %v2453, 24
    %v2613 = vpop.permute.xlu0 %2612
    %2614 = vrot.lane.b32.xlu0 %v2454, 24
    %v2615 = vpop.permute.xlu0 %2614
    %2616 = vrot.lane.b32.xlu0 %v2455, 24
    %v2617 = vpop.permute.xlu0 %2616
    %2618 = vrot.lane.b32.xlu0 %v2456, 24
    %v2619 = vpop.permute.xlu0 %2618
    %2620 = vrot.lane.b32.xlu0 %v2457, 24
    %v2621 = vpop.permute.xlu0 %2620
    %2622 = vrot.lane.b32.xlu0 %v2458, 24
    %v2623 = vpop.permute.xlu0 %2622
    %2624 = vrot.lane.b32.xlu0 %v2459, 24
    %v2625 = vpop.permute.xlu0 %2624
    %2626 = vrot.lane.b32.xlu0 %v2460, 24
    %v2627 = vpop.permute.xlu0 %2626
    %2628 = vrot.lane.b32.xlu0 %v2461, 24
    %v2629 = vpop.permute.xlu0 %2628
    %2630 = vrot.lane.b32.xlu0 %v2462, 24
    %v2631 = vpop.permute.xlu0 %2630
    %2632 = vrot.lane.b32.xlu0 %v2463, 24
    %v2633 = vpop.permute.xlu0 %2632
    %2634 = vrot.lane.b32.xlu0 %v2464, 24
    %v2635 = vpop.permute.xlu0 %2634
    %2636 = vrot.lane.b32.xlu0 %v2465, 24
    %v2637 = vpop.permute.xlu0 %2636
    %2638 = vrot.lane.b32.xlu0 %v2466, 24
    %v2639 = vpop.permute.xlu0 %2638
    %2640 = vrot.lane.b32.xlu0 %v2467, 24
    %v2641 = vpop.permute.xlu0 %2640
    %2642 = vrot.lane.b32.xlu0 %v2468, 24
    %v2643 = vpop.permute.xlu0 %2642
    %2644 = vrot.lane.b32.xlu0 %v2469, 24
    %v2645 = vpop.permute.xlu0 %2644
    %2646 = vrot.lane.b32.xlu0 %v2470, 24
    %v2647 = vpop.permute.xlu0 %2646
    %2648 = vrot.lane.b32.xlu0 %v2471, 24
    %v2649 = vpop.permute.xlu0 %2648
    %2650 = vrot.lane.b32.xlu0 %v2472, 24
    %v2651 = vpop.permute.xlu0 %2650
    %2652 = vrot.lane.b32.xlu0 %v2473, 24
    %v2653 = vpop.permute.xlu0 %2652
    %2654 = vrot.lane.b32.xlu0 %v2474, 24
    %v2655 = vpop.permute.xlu0 %2654
    %2656 = vrot.lane.b32.xlu0 %v2475, 24
    %v2657 = vpop.permute.xlu0 %2656
    %2658 = vrot.lane.b32.xlu0 %v2476, 24
    %v2659 = vpop.permute.xlu0 %2658
    %2660 = vrot.lane.b32.xlu0 %v2477, 24
    %v2661 = vpop.permute.xlu0 %2660
    %2662 = vrot.lane.b32.xlu0 %v2478, 24
    %v2663 = vpop.permute.xlu0 %2662
    %2664 = vrot.lane.b32.xlu0 %v2479, 24
    %v2665 = vpop.permute.xlu0 %2664
    %2666 = vrot.lane.b32.xlu0 %v2480, 24
    %v2667 = vpop.permute.xlu0 %2666
    %2668 = vrot.lane.b32.xlu0 %v2481, 24
    %v2669 = vpop.permute.xlu0 %2668
    %2670 = vrot.lane.b32.xlu0 %v2482, 24
    %v2671 = vpop.permute.xlu0 %2670
    %2672 = vrot.lane.b32.xlu0 %v2483, 24
    %v2673 = vpop.permute.xlu0 %2672
    %2674 = vrot.lane.b32.xlu0 %v2484, 24
    %v2675 = vpop.permute.xlu0 %2674
    %2676 = vrot.lane.b32.xlu0 %v2485, 24
    %v2677 = vpop.permute.xlu0 %2676
    %vm2742 = vcmask 261312
    %2743 = vst.msk [vmem:[#allocation3] sm:$0xff] %vm2742, %v2551
    %2744 = vst.msk [vmem:[#allocation3 + $0x8] sm:$0xff] %vm2742, %v2553
    %2745 = vst.msk [vmem:[#allocation3 + $0x10] sm:$0xff] %vm2742, %v2555
    %2746 = vst.msk [vmem:[#allocation3 + $0x18] sm:$0xff] %vm2742, %v2557
    %2747 = vst.msk [vmem:[#allocation3 + $0x20] sm:$0xff] %vm2742, %v2559
    %2748 = vst.msk [vmem:[#allocation3 + $0x28] sm:$0xff] %vm2742, %v2561
    %2749 = vst.msk [vmem:[#allocation3 + $0x30] sm:$0xff] %vm2742, %v2563
    %2750 = vst.msk [vmem:[#allocation3 + $0x38] sm:$0xff] %vm2742, %v2565
    %2751 = vst.msk [vmem:[#allocation3 + $0x40] sm:$0xff] %vm2742, %v2567
    %2752 = vst.msk [vmem:[#allocation3 + $0x48] sm:$0xff] %vm2742, %v2569
    %2753 = vst.msk [vmem:[#allocation3 + $0x50] sm:$0xff] %vm2742, %v2571
    %2754 = vst.msk [vmem:[#allocation3 + $0x58] sm:$0xff] %vm2742, %v2573
    %2755 = vst.msk [vmem:[#allocation3 + $0x60] sm:$0xff] %vm2742, %v2575
    %2756 = vst.msk [vmem:[#allocation3 + $0x68] sm:$0xff] %vm2742, %v2577
    %2757 = vst.msk [vmem:[#allocation3 + $0x70] sm:$0xff] %vm2742, %v2579
    %2758 = vst.msk [vmem:[#allocation3 + $0x78] sm:$0xff] %vm2742, %v2581
    %2759 = vst.msk [vmem:[#allocation3 + $0x80] sm:$0xff] %vm2742, %v2583
    %2760 = vst.msk [vmem:[#allocation3 + $0x88] sm:$0xff] %vm2742, %v2585
    %2761 = vst.msk [vmem:[#allocation3 + $0x90] sm:$0xff] %vm2742, %v2587
    %2762 = vst.msk [vmem:[#allocation3 + $0x98] sm:$0xff] %vm2742, %v2589
    %2763 = vst.msk [vmem:[#allocation3 + $0xa0] sm:$0xff] %vm2742, %v2591
    %2764 = vst.msk [vmem:[#allocation3 + $0xa8] sm:$0xff] %vm2742, %v2593
    %2765 = vst.msk [vmem:[#allocation3 + $0xb0] sm:$0xff] %vm2742, %v2595
    %2766 = vst.msk [vmem:[#allocation3 + $0xb8] sm:$0xff] %vm2742, %v2597
    %2767 = vst.msk [vmem:[#allocation3 + $0xc0] sm:$0xff] %vm2742, %v2599
    %2768 = vst.msk [vmem:[#allocation3 + $0xc8] sm:$0xff] %vm2742, %v2601
    %2769 = vst.msk [vmem:[#allocation3 + $0xd0] sm:$0xff] %vm2742, %v2603
    %2770 = vst.msk [vmem:[#allocation3 + $0xd8] sm:$0xff] %vm2742, %v2605
    %2771 = vst.msk [vmem:[#allocation3 + $0xe0] sm:$0xff] %vm2742, %v2607
    %2772 = vst.msk [vmem:[#allocation3 + $0xe8] sm:$0xff] %vm2742, %v2609
    %2773 = vst.msk [vmem:[#allocation3 + $0xf0] sm:$0xff] %vm2742, %v2611
    %2774 = vst.msk [vmem:[#allocation3 + $0xf8] sm:$0xff] %vm2742, %v2613
    %2775 = vst.msk [vmem:[#allocation3 + $0x100] sm:$0xff] %vm2742, %v2615
    %2776 = vst.msk [vmem:[#allocation3 + $0x108] sm:$0xff] %vm2742, %v2617
    %2777 = vst.msk [vmem:[#allocation3 + $0x110] sm:$0xff] %vm2742, %v2619
    %2778 = vst.msk [vmem:[#allocation3 + $0x118] sm:$0xff] %vm2742, %v2621
    %2779 = vst.msk [vmem:[#allocation3 + $0x120] sm:$0xff] %vm2742, %v2623
    %2780 = vst.msk [vmem:[#allocation3 + $0x128] sm:$0xff] %vm2742, %v2625
    %2781 = vst.msk [vmem:[#allocation3 + $0x130] sm:$0xff] %vm2742, %v2627
    %2782 = vst.msk [vmem:[#allocation3 + $0x138] sm:$0xff] %vm2742, %v2629
    %2783 = vst.msk [vmem:[#allocation3 + $0x140] sm:$0xff] %vm2742, %v2631
    %2784 = vst.msk [vmem:[#allocation3 + $0x148] sm:$0xff] %vm2742, %v2633
    %2785 = vst.msk [vmem:[#allocation3 + $0x150] sm:$0xff] %vm2742, %v2635
    %2786 = vst.msk [vmem:[#allocation3 + $0x158] sm:$0xff] %vm2742, %v2637
    %2787 = vst.msk [vmem:[#allocation3 + $0x160] sm:$0xff] %vm2742, %v2639
    %2788 = vst.msk [vmem:[#allocation3 + $0x168] sm:$0xff] %vm2742, %v2641
    %2789 = vst.msk [vmem:[#allocation3 + $0x170] sm:$0xff] %vm2742, %v2643
    %2790 = vst.msk [vmem:[#allocation3 + $0x178] sm:$0xff] %vm2742, %v2645
    %2791 = vst.msk [vmem:[#allocation3 + $0x180] sm:$0xff] %vm2742, %v2647
    %2792 = vst.msk [vmem:[#allocation3 + $0x188] sm:$0xff] %vm2742, %v2649
    %2793 = vst.msk [vmem:[#allocation3 + $0x190] sm:$0xff] %vm2742, %v2651
    %2794 = vst.msk [vmem:[#allocation3 + $0x198] sm:$0xff] %vm2742, %v2653
    %2795 = vst.msk [vmem:[#allocation3 + $0x1a0] sm:$0xff] %vm2742, %v2655
    %2796 = vst.msk [vmem:[#allocation3 + $0x1a8] sm:$0xff] %vm2742, %v2657
    %2797 = vst.msk [vmem:[#allocation3 + $0x1b0] sm:$0xff] %vm2742, %v2659
    %2798 = vst.msk [vmem:[#allocation3 + $0x1b8] sm:$0xff] %vm2742, %v2661
    %2799 = vst.msk [vmem:[#allocation3 + $0x1c0] sm:$0xff] %vm2742, %v2663
    %2800 = vst.msk [vmem:[#allocation3 + $0x1c8] sm:$0xff] %vm2742, %v2665
    %2801 = vst.msk [vmem:[#allocation3 + $0x1d0] sm:$0xff] %vm2742, %v2667
    %2802 = vst.msk [vmem:[#allocation3 + $0x1d8] sm:$0xff] %vm2742, %v2669
    %2803 = vst.msk [vmem:[#allocation3 + $0x1e0] sm:$0xff] %vm2742, %v2671
    %2804 = vst.msk [vmem:[#allocation3 + $0x1e8] sm:$0xff] %vm2742, %v2673
    %2805 = vst.msk [vmem:[#allocation3 + $0x1f0] sm:$0xff] %vm2742, %v2675
    %2806 = vst.msk [vmem:[#allocation3 + $0x1f8] sm:$0xff] %vm2742, %v2677
    %v2807 = vld [vmem:[%s1459 + $0x1] sm:$0xff]
    %v2808 = vld [vmem:[%s1459 + $0x9] sm:$0xff]
    %v2809 = vld [vmem:[%s1459 + $0x19] sm:$0xff]
    %v2810 = vld [vmem:[%s1459 + $0x21] sm:$0xff]
    %v2811 = vld [vmem:[%s1459 + $0x31] sm:$0xff]
    %v2812 = vld [vmem:[%s1459 + $0x39] sm:$0xff]
    %v2813 = vld [vmem:[%s1459 + $0x49] sm:$0xff]
    %v2814 = vld [vmem:[%s1459 + $0x51] sm:$0xff]
    %v2815 = vld [vmem:[%s1459 + $0x61] sm:$0xff]
    %v2816 = vld [vmem:[%s1459 + $0x69] sm:$0xff]
    %v2817 = vld [vmem:[%s1459 + $0x79] sm:$0xff]
    %v2818 = vld [vmem:[%s1459 + $0x81] sm:$0xff]
    %v2819 = vld [vmem:[%s1459 + $0x91] sm:$0xff]
    %v2820 = vld [vmem:[%s1459 + $0x99] sm:$0xff]
    %v2821 = vld [vmem:[%s1459 + $0xa9] sm:$0xff]
    %v2822 = vld [vmem:[%s1459 + $0xb1] sm:$0xff]
    %v2823 = vld [vmem:[%s1459 + $0xc1] sm:$0xff]
    %v2824 = vld [vmem:[%s1459 + $0xc9] sm:$0xff]
    %v2825 = vld [vmem:[%s1459 + $0xd9] sm:$0xff]
    %v2826 = vld [vmem:[%s1459 + $0xe1] sm:$0xff]
    %v2827 = vld [vmem:[%s1459 + $0xf1] sm:$0xff]
    %v2828 = vld [vmem:[%s1459 + $0xf9] sm:$0xff]
    %v2829 = vld [vmem:[%s1459 + $0x109] sm:$0xff]
    %v2830 = vld [vmem:[%s1459 + $0x111] sm:$0xff]
    %v2831 = vld [vmem:[%s1459 + $0x121] sm:$0xff]
    %v2832 = vld [vmem:[%s1459 + $0x129] sm:$0xff]
    %v2833 = vld [vmem:[%s1459 + $0x139] sm:$0xff]
    %v2834 = vld [vmem:[%s1459 + $0x141] sm:$0xff]
    %v2835 = vld [vmem:[%s1459 + $0x151] sm:$0xff]
    %v2836 = vld [vmem:[%s1459 + $0x159] sm:$0xff]
    %v2837 = vld [vmem:[%s1459 + $0x169] sm:$0xff]
    %v2838 = vld [vmem:[%s1459 + $0x171] sm:$0xff]
    %v2839 = vld [vmem:[%s1459 + $0x1b1] sm:$0xff]
    %v2840 = vld [vmem:[%s1459 + $0x1b9] sm:$0xff]
    %v2841 = vld [vmem:[%s1459 + $0x1c9] sm:$0xff]
    %v2842 = vld [vmem:[%s1459 + $0x1d1] sm:$0xff]
    %v2843 = vld [vmem:[%s1459 + $0x1e1] sm:$0xff]
    %v2844 = vld [vmem:[%s1459 + $0x1e9] sm:$0xff]
    %v2845 = vld [vmem:[%s1459 + $0x1f9] sm:$0xff]
    %v2846 = vld [vmem:[%s1459 + $0x201] sm:$0xff]
    %v2847 = vld [vmem:[%s1459 + $0x211] sm:$0xff]
    %v2848 = vld [vmem:[%s1459 + $0x219] sm:$0xff]
    %v2849 = vld [vmem:[%s1459 + $0x229] sm:$0xff]
    %v2850 = vld [vmem:[%s1459 + $0x231] sm:$0xff]
    %v2851 = vld [vmem:[%s1459 + $0x241] sm:$0xff]
    %v2852 = vld [vmem:[%s1459 + $0x249] sm:$0xff]
    %v2853 = vld [vmem:[%s1459 + $0x259] sm:$0xff]
    %v2854 = vld [vmem:[%s1459 + $0x261] sm:$0xff]
    %v2855 = vld [vmem:[%s1459 + $0x271] sm:$0xff]
    %v2856 = vld [vmem:[%s1459 + $0x279] sm:$0xff]
    %v2857 = vld [vmem:[%s1459 + $0x289] sm:$0xff]
    %v2858 = vld [vmem:[%s1459 + $0x291] sm:$0xff]
    %v2859 = vld [vmem:[%s1459 + $0x2a1] sm:$0xff]
    %v2860 = vld [vmem:[%s1459 + $0x2a9] sm:$0xff]
    %v2861 = vld [vmem:[%s1459 + $0x2b9] sm:$0xff]
    %v2862 = vld [vmem:[%s1459 + $0x2c1] sm:$0xff]
    %v2863 = vld [vmem:[%s1459 + $0x2d1] sm:$0xff]
    %v2864 = vld [vmem:[%s1459 + $0x2d9] sm:$0xff]
    %v2865 = vld [vmem:[%s1459 + $0x2e9] sm:$0xff]
    %v2866 = vld [vmem:[%s1459 + $0x2f1] sm:$0xff]
    %v2867 = vld [vmem:[%s1459 + $0x301] sm:$0xff]
    %v2868 = vld [vmem:[%s1459 + $0x309] sm:$0xff]
    %v2869 = vld [vmem:[%s1459 + $0x319] sm:$0xff]
    %v2870 = vld [vmem:[%s1459 + $0x321] sm:$0xff]
    %2935 = vrot.lane.b32.xlu0 %v2807, 32
    %v2936 = vpop.permute.xlu0 %2935
    %2937 = vrot.lane.b32.xlu0 %v2808, 32
    %v2938 = vpop.permute.xlu0 %2937
    %2939 = vrot.lane.b32.xlu0 %v2809, 32
    %v2940 = vpop.permute.xlu0 %2939
    %2941 = vrot.lane.b32.xlu0 %v2810, 32
    %v2942 = vpop.permute.xlu0 %2941
    %2943 = vrot.lane.b32.xlu0 %v2811, 32
    %v2944 = vpop.permute.xlu0 %2943
    %2945 = vrot.lane.b32.xlu0 %v2812, 32
    %v2946 = vpop.permute.xlu0 %2945
    %2947 = vrot.lane.b32.xlu0 %v2813, 32
    %v2948 = vpop.permute.xlu0 %2947
    %2949 = vrot.lane.b32.xlu0 %v2814, 32
    %v2950 = vpop.permute.xlu0 %2949
    %2951 = vrot.lane.b32.xlu0 %v2815, 32
    %v2952 = vpop.permute.xlu0 %2951
    %2953 = vrot.lane.b32.xlu0 %v2816, 32
    %v2954 = vpop.permute.xlu0 %2953
    %2955 = vrot.lane.b32.xlu0 %v2817, 32
    %v2956 = vpop.permute.xlu0 %2955
    %2957 = vrot.lane.b32.xlu0 %v2818, 32
    %v2958 = vpop.permute.xlu0 %2957
    %2959 = vrot.lane.b32.xlu0 %v2819, 32
    %v2960 = vpop.permute.xlu0 %2959
    %2961 = vrot.lane.b32.xlu0 %v2820, 32
    %v2962 = vpop.permute.xlu0 %2961
    %2963 = vrot.lane.b32.xlu0 %v2821, 32
    %v2964 = vpop.permute.xlu0 %2963
    %2965 = vrot.lane.b32.xlu0 %v2822, 32
    %v2966 = vpop.permute.xlu0 %2965
    %2967 = vrot.lane.b32.xlu0 %v2823, 32
    %v2968 = vpop.permute.xlu0 %2967
    %2969 = vrot.lane.b32.xlu0 %v2824, 32
    %v2970 = vpop.permute.xlu0 %2969
    %2971 = vrot.lane.b32.xlu0 %v2825, 32
    %v2972 = vpop.permute.xlu0 %2971
    %2973 = vrot.lane.b32.xlu0 %v2826, 32
    %v2974 = vpop.permute.xlu0 %2973
    %2975 = vrot.lane.b32.xlu0 %v2827, 32
    %v2976 = vpop.permute.xlu0 %2975
    %2977 = vrot.lane.b32.xlu0 %v2828, 32
    %v2978 = vpop.permute.xlu0 %2977
    %2979 = vrot.lane.b32.xlu0 %v2829, 32
    %v2980 = vpop.permute.xlu0 %2979
    %2981 = vrot.lane.b32.xlu0 %v2830, 32
    %v2982 = vpop.permute.xlu0 %2981
    %2983 = vrot.lane.b32.xlu0 %v2831, 32
    %v2984 = vpop.permute.xlu0 %2983
    %2985 = vrot.lane.b32.xlu0 %v2832, 32
    %v2986 = vpop.permute.xlu0 %2985
    %2987 = vrot.lane.b32.xlu0 %v2833, 32
    %v2988 = vpop.permute.xlu0 %2987
    %2989 = vrot.lane.b32.xlu0 %v2834, 32
    %v2990 = vpop.permute.xlu0 %2989
    %2991 = vrot.lane.b32.xlu0 %v2835, 32
    %v2992 = vpop.permute.xlu0 %2991
    %2993 = vrot.lane.b32.xlu0 %v2836, 32
    %v2994 = vpop.permute.xlu0 %2993
    %2995 = vrot.lane.b32.xlu0 %v2837, 32
    %v2996 = vpop.permute.xlu0 %2995
    %2997 = vrot.lane.b32.xlu0 %v2838, 32
    %v2998 = vpop.permute.xlu0 %2997
    %2999 = vrot.lane.b32.xlu0 %v2839, 32
    %v3000 = vpop.permute.xlu0 %2999
    %3001 = vrot.lane.b32.xlu0 %v2840, 32
    %v3002 = vpop.permute.xlu0 %3001
    %3003 = vrot.lane.b32.xlu0 %v2841, 32
    %v3004 = vpop.permute.xlu0 %3003
    %3005 = vrot.lane.b32.xlu0 %v2842, 32
    %v3006 = vpop.permute.xlu0 %3005
    %3007 = vrot.lane.b32.xlu0 %v2843, 32
    %v3008 = vpop.permute.xlu0 %3007
    %3009 = vrot.lane.b32.xlu0 %v2844, 32
    %v3010 = vpop.permute.xlu0 %3009
    %3011 = vrot.lane.b32.xlu0 %v2845, 32
    %v3012 = vpop.permute.xlu0 %3011
    %3013 = vrot.lane.b32.xlu0 %v2846, 32
    %v3014 = vpop.permute.xlu0 %3013
    %3015 = vrot.lane.b32.xlu0 %v2847, 32
    %v3016 = vpop.permute.xlu0 %3015
    %3017 = vrot.lane.b32.xlu0 %v2848, 32
    %v3018 = vpop.permute.xlu0 %3017
    %3019 = vrot.lane.b32.xlu0 %v2849, 32
    %v3020 = vpop.permute.xlu0 %3019
    %3021 = vrot.lane.b32.xlu0 %v2850, 32
    %v3022 = vpop.permute.xlu0 %3021
    %3023 = vrot.lane.b32.xlu0 %v2851, 32
    %v3024 = vpop.permute.xlu0 %3023
    %3025 = vrot.lane.b32.xlu0 %v2852, 32
    %v3026 = vpop.permute.xlu0 %3025
    %3027 = vrot.lane.b32.xlu0 %v2853, 32
    %v3028 = vpop.permute.xlu0 %3027
    %3029 = vrot.lane.b32.xlu0 %v2854, 32
    %v3030 = vpop.permute.xlu0 %3029
    %3031 = vrot.lane.b32.xlu0 %v2855, 32
    %v3032 = vpop.permute.xlu0 %3031
    %3033 = vrot.lane.b32.xlu0 %v2856, 32
    %v3034 = vpop.permute.xlu0 %3033
    %3035 = vrot.lane.b32.xlu0 %v2857, 32
    %v3036 = vpop.permute.xlu0 %3035
    %3037 = vrot.lane.b32.xlu0 %v2858, 32
    %v3038 = vpop.permute.xlu0 %3037
    %3039 = vrot.lane.b32.xlu0 %v2859, 32
    %v3040 = vpop.permute.xlu0 %3039
    %3041 = vrot.lane.b32.xlu0 %v2860, 32
    %v3042 = vpop.permute.xlu0 %3041
    %3043 = vrot.lane.b32.xlu0 %v2861, 32
    %v3044 = vpop.permute.xlu0 %3043
    %3045 = vrot.lane.b32.xlu0 %v2862, 32
    %v3046 = vpop.permute.xlu0 %3045
    %3047 = vrot.lane.b32.xlu0 %v2863, 32
    %v3048 = vpop.permute.xlu0 %3047
    %3049 = vrot.lane.b32.xlu0 %v2864, 32
    %v3050 = vpop.permute.xlu0 %3049
    %3051 = vrot.lane.b32.xlu0 %v2865, 32
    %v3052 = vpop.permute.xlu0 %3051
    %3053 = vrot.lane.b32.xlu0 %v2866, 32
    %v3054 = vpop.permute.xlu0 %3053
    %3055 = vrot.lane.b32.xlu0 %v2867, 32
    %v3056 = vpop.permute.xlu0 %3055
    %3057 = vrot.lane.b32.xlu0 %v2868, 32
    %v3058 = vpop.permute.xlu0 %3057
    %3059 = vrot.lane.b32.xlu0 %v2869, 32
    %v3060 = vpop.permute.xlu0 %3059
    %3061 = vrot.lane.b32.xlu0 %v2870, 32
    %v3062 = vpop.permute.xlu0 %3061
    %vm3127 = vcmask 326912
    %3128 = vst.msk [vmem:[#allocation3] sm:$0xff] %vm3127, %v2936
    %3129 = vst.msk [vmem:[#allocation3 + $0x8] sm:$0xff] %vm3127, %v2938
    %3130 = vst.msk [vmem:[#allocation3 + $0x10] sm:$0xff] %vm3127, %v2940
    %3131 = vst.msk [vmem:[#allocation3 + $0x18] sm:$0xff] %vm3127, %v2942
    %3132 = vst.msk [vmem:[#allocation3 + $0x20] sm:$0xff] %vm3127, %v2944
    %3133 = vst.msk [vmem:[#allocation3 + $0x28] sm:$0xff] %vm3127, %v2946
    %3134 = vst.msk [vmem:[#allocation3 + $0x30] sm:$0xff] %vm3127, %v2948
    %3135 = vst.msk [vmem:[#allocation3 + $0x38] sm:$0xff] %vm3127, %v2950
    %3136 = vst.msk [vmem:[#allocation3 + $0x40] sm:$0xff] %vm3127, %v2952
    %3137 = vst.msk [vmem:[#allocation3 + $0x48] sm:$0xff] %vm3127, %v2954
    %3138 = vst.msk [vmem:[#allocation3 + $0x50] sm:$0xff] %vm3127, %v2956
    %3139 = vst.msk [vmem:[#allocation3 + $0x58] sm:$0xff] %vm3127, %v2958
    %3140 = vst.msk [vmem:[#allocation3 + $0x60] sm:$0xff] %vm3127, %v2960
    %3141 = vst.msk [vmem:[#allocation3 + $0x68] sm:$0xff] %vm3127, %v2962
    %3142 = vst.msk [vmem:[#allocation3 + $0x70] sm:$0xff] %vm3127, %v2964
    %3143 = vst.msk [vmem:[#allocation3 + $0x78] sm:$0xff] %vm3127, %v2966
    %3144 = vst.msk [vmem:[#allocation3 + $0x80] sm:$0xff] %vm3127, %v2968
    %3145 = vst.msk [vmem:[#allocation3 + $0x88] sm:$0xff] %vm3127, %v2970
    %3146 = vst.msk [vmem:[#allocation3 + $0x90] sm:$0xff] %vm3127, %v2972
    %3147 = vst.msk [vmem:[#allocation3 + $0x98] sm:$0xff] %vm3127, %v2974
    %3148 = vst.msk [vmem:[#allocation3 + $0xa0] sm:$0xff] %vm3127, %v2976
    %3149 = vst.msk [vmem:[#allocation3 + $0xa8] sm:$0xff] %vm3127, %v2978
    %3150 = vst.msk [vmem:[#allocation3 + $0xb0] sm:$0xff] %vm3127, %v2980
    %3151 = vst.msk [vmem:[#allocation3 + $0xb8] sm:$0xff] %vm3127, %v2982
    %3152 = vst.msk [vmem:[#allocation3 + $0xc0] sm:$0xff] %vm3127, %v2984
    %3153 = vst.msk [vmem:[#allocation3 + $0xc8] sm:$0xff] %vm3127, %v2986
    %3154 = vst.msk [vmem:[#allocation3 + $0xd0] sm:$0xff] %vm3127, %v2988
    %3155 = vst.msk [vmem:[#allocation3 + $0xd8] sm:$0xff] %vm3127, %v2990
    %3156 = vst.msk [vmem:[#allocation3 + $0xe0] sm:$0xff] %vm3127, %v2992
    %3157 = vst.msk [vmem:[#allocation3 + $0xe8] sm:$0xff] %vm3127, %v2994
    %3158 = vst.msk [vmem:[#allocation3 + $0xf0] sm:$0xff] %vm3127, %v2996
    %3159 = vst.msk [vmem:[#allocation3 + $0xf8] sm:$0xff] %vm3127, %v2998
    %3160 = vst.msk [vmem:[#allocation3 + $0x100] sm:$0xff] %vm3127, %v3000
    %3161 = vst.msk [vmem:[#allocation3 + $0x108] sm:$0xff] %vm3127, %v3002
    %3162 = vst.msk [vmem:[#allocation3 + $0x110] sm:$0xff] %vm3127, %v3004
    %3163 = vst.msk [vmem:[#allocation3 + $0x118] sm:$0xff] %vm3127, %v3006
    %3164 = vst.msk [vmem:[#allocation3 + $0x120] sm:$0xff] %vm3127, %v3008
    %3165 = vst.msk [vmem:[#allocation3 + $0x128] sm:$0xff] %vm3127, %v3010
    %3166 = vst.msk [vmem:[#allocation3 + $0x130] sm:$0xff] %vm3127, %v3012
    %3167 = vst.msk [vmem:[#allocation3 + $0x138] sm:$0xff] %vm3127, %v3014
    %3168 = vst.msk [vmem:[#allocation3 + $0x140] sm:$0xff] %vm3127, %v3016
    %3169 = vst.msk [vmem:[#allocation3 + $0x148] sm:$0xff] %vm3127, %v3018
    %3170 = vst.msk [vmem:[#allocation3 + $0x150] sm:$0xff] %vm3127, %v3020
    %3171 = vst.msk [vmem:[#allocation3 + $0x158] sm:$0xff] %vm3127, %v3022
    %3172 = vst.msk [vmem:[#allocation3 + $0x160] sm:$0xff] %vm3127, %v3024
    %3173 = vst.msk [vmem:[#allocation3 + $0x168] sm:$0xff] %vm3127, %v3026
    %3174 = vst.msk [vmem:[#allocation3 + $0x170] sm:$0xff] %vm3127, %v3028
    %3175 = vst.msk [vmem:[#allocation3 + $0x178] sm:$0xff] %vm3127, %v3030
    %3176 = vst.msk [vmem:[#allocation3 + $0x180] sm:$0xff] %vm3127, %v3032
    %3177 = vst.msk [vmem:[#allocation3 + $0x188] sm:$0xff] %vm3127, %v3034
    %3178 = vst.msk [vmem:[#allocation3 + $0x190] sm:$0xff] %vm3127, %v3036
    %3179 = vst.msk [vmem:[#allocation3 + $0x198] sm:$0xff] %vm3127, %v3038
    %3180 = vst.msk [vmem:[#allocation3 + $0x1a0] sm:$0xff] %vm3127, %v3040
    %3181 = vst.msk [vmem:[#allocation3 + $0x1a8] sm:$0xff] %vm3127, %v3042
    %3182 = vst.msk [vmem:[#allocation3 + $0x1b0] sm:$0xff] %vm3127, %v3044
    %3183 = vst.msk [vmem:[#allocation3 + $0x1b8] sm:$0xff] %vm3127, %v3046
    %3184 = vst.msk [vmem:[#allocation3 + $0x1c0] sm:$0xff] %vm3127, %v3048
    %3185 = vst.msk [vmem:[#allocation3 + $0x1c8] sm:$0xff] %vm3127, %v3050
    %3186 = vst.msk [vmem:[#allocation3 + $0x1d0] sm:$0xff] %vm3127, %v3052
    %3187 = vst.msk [vmem:[#allocation3 + $0x1d8] sm:$0xff] %vm3127, %v3054
    %3188 = vst.msk [vmem:[#allocation3 + $0x1e0] sm:$0xff] %vm3127, %v3056
    %3189 = vst.msk [vmem:[#allocation3 + $0x1e8] sm:$0xff] %vm3127, %v3058
    %3190 = vst.msk [vmem:[#allocation3 + $0x1f0] sm:$0xff] %vm3127, %v3060
    %3191 = vst.msk [vmem:[#allocation3 + $0x1f8] sm:$0xff] %vm3127, %v3062
    %v3192 = vld [vmem:[%s1459 + $0x2] sm:$0xff]
    %v3193 = vld [vmem:[%s1459 + $0xa] sm:$0xff]
    %v3194 = vld [vmem:[%s1459 + $0x1a] sm:$0xff]
    %v3195 = vld [vmem:[%s1459 + $0x22] sm:$0xff]
    %v3196 = vld [vmem:[%s1459 + $0x32] sm:$0xff]
    %v3197 = vld [vmem:[%s1459 + $0x3a] sm:$0xff]
    %v3198 = vld [vmem:[%s1459 + $0x4a] sm:$0xff]
    %v3199 = vld [vmem:[%s1459 + $0x52] sm:$0xff]
    %v3200 = vld [vmem:[%s1459 + $0x62] sm:$0xff]
    %v3201 = vld [vmem:[%s1459 + $0x6a] sm:$0xff]
    %v3202 = vld [vmem:[%s1459 + $0x7a] sm:$0xff]
    %v3203 = vld [vmem:[%s1459 + $0x82] sm:$0xff]
    %v3204 = vld [vmem:[%s1459 + $0x92] sm:$0xff]
    %v3205 = vld [vmem:[%s1459 + $0x9a] sm:$0xff]
    %v3206 = vld [vmem:[%s1459 + $0xaa] sm:$0xff]
    %v3207 = vld [vmem:[%s1459 + $0xb2] sm:$0xff]
    %v3208 = vld [vmem:[%s1459 + $0xc2] sm:$0xff]
    %v3209 = vld [vmem:[%s1459 + $0xca] sm:$0xff]
    %v3210 = vld [vmem:[%s1459 + $0xda] sm:$0xff]
    %v3211 = vld [vmem:[%s1459 + $0xe2] sm:$0xff]
    %v3212 = vld [vmem:[%s1459 + $0xf2] sm:$0xff]
    %v3213 = vld [vmem:[%s1459 + $0xfa] sm:$0xff]
    %v3214 = vld [vmem:[%s1459 + $0x10a] sm:$0xff]
    %v3215 = vld [vmem:[%s1459 + $0x112] sm:$0xff]
    %v3216 = vld [vmem:[%s1459 + $0x122] sm:$0xff]
    %v3217 = vld [vmem:[%s1459 + $0x12a] sm:$0xff]
    %v3218 = vld [vmem:[%s1459 + $0x13a] sm:$0xff]
    %v3219 = vld [vmem:[%s1459 + $0x142] sm:$0xff]
    %v3220 = vld [vmem:[%s1459 + $0x152] sm:$0xff]
    %v3221 = vld [vmem:[%s1459 + $0x15a] sm:$0xff]
    %v3222 = vld [vmem:[%s1459 + $0x16a] sm:$0xff]
    %v3223 = vld [vmem:[%s1459 + $0x172] sm:$0xff]
    %v3224 = vld [vmem:[%s1459 + $0x1b2] sm:$0xff]
    %v3225 = vld [vmem:[%s1459 + $0x1ba] sm:$0xff]
    %v3226 = vld [vmem:[%s1459 + $0x1ca] sm:$0xff]
    %v3227 = vld [vmem:[%s1459 + $0x1d2] sm:$0xff]
    %v3228 = vld [vmem:[%s1459 + $0x1e2] sm:$0xff]
    %v3229 = vld [vmem:[%s1459 + $0x1ea] sm:$0xff]
    %v3230 = vld [vmem:[%s1459 + $0x1fa] sm:$0xff]
    %v3231 = vld [vmem:[%s1459 + $0x202] sm:$0xff]
    %v3232 = vld [vmem:[%s1459 + $0x212] sm:$0xff]
    %v3233 = vld [vmem:[%s1459 + $0x21a] sm:$0xff]
    %v3234 = vld [vmem:[%s1459 + $0x22a] sm:$0xff]
    %v3235 = vld [vmem:[%s1459 + $0x232] sm:$0xff]
    %v3236 = vld [vmem:[%s1459 + $0x242] sm:$0xff]
    %v3237 = vld [vmem:[%s1459 + $0x24a] sm:$0xff]
    %v3238 = vld [vmem:[%s1459 + $0x25a] sm:$0xff]
    %v3239 = vld [vmem:[%s1459 + $0x262] sm:$0xff]
    %v3240 = vld [vmem:[%s1459 + $0x272] sm:$0xff]
    %v3241 = vld [vmem:[%s1459 + $0x27a] sm:$0xff]
    %v3242 = vld [vmem:[%s1459 + $0x28a] sm:$0xff]
    %v3243 = vld [vmem:[%s1459 + $0x292] sm:$0xff]
    %v3244 = vld [vmem:[%s1459 + $0x2a2] sm:$0xff]
    %v3245 = vld [vmem:[%s1459 + $0x2aa] sm:$0xff]
    %v3246 = vld [vmem:[%s1459 + $0x2ba] sm:$0xff]
    %v3247 = vld [vmem:[%s1459 + $0x2c2] sm:$0xff]
    %v3248 = vld [vmem:[%s1459 + $0x2d2] sm:$0xff]
    %v3249 = vld [vmem:[%s1459 + $0x2da] sm:$0xff]
    %v3250 = vld [vmem:[%s1459 + $0x2ea] sm:$0xff]
    %v3251 = vld [vmem:[%s1459 + $0x2f2] sm:$0xff]
    %v3252 = vld [vmem:[%s1459 + $0x302] sm:$0xff]
    %v3253 = vld [vmem:[%s1459 + $0x30a] sm:$0xff]
    %v3254 = vld [vmem:[%s1459 + $0x31a] sm:$0xff]
    %v3255 = vld [vmem:[%s1459 + $0x322] sm:$0xff]
    %3320 = vrot.lane.b32.xlu0 %v3192, 40
    %v3321 = vpop.permute.xlu0 %3320
    %3322 = vrot.lane.b32.xlu0 %v3193, 40
    %v3323 = vpop.permute.xlu0 %3322
    %3324 = vrot.lane.b32.xlu0 %v3194, 40
    %v3325 = vpop.permute.xlu0 %3324
    %3326 = vrot.lane.b32.xlu0 %v3195, 40
    %v3327 = vpop.permute.xlu0 %3326
    %3328 = vrot.lane.b32.xlu0 %v3196, 40
    %v3329 = vpop.permute.xlu0 %3328
    %3330 = vrot.lane.b32.xlu0 %v3197, 40
    %v3331 = vpop.permute.xlu0 %3330
    %3332 = vrot.lane.b32.xlu0 %v3198, 40
    %v3333 = vpop.permute.xlu0 %3332
    %3334 = vrot.lane.b32.xlu0 %v3199, 40
    %v3335 = vpop.permute.xlu0 %3334
    %3336 = vrot.lane.b32.xlu0 %v3200, 40
    %v3337 = vpop.permute.xlu0 %3336
    %3338 = vrot.lane.b32.xlu0 %v3201, 40
    %v3339 = vpop.permute.xlu0 %3338
    %3340 = vrot.lane.b32.xlu0 %v3202, 40
    %v3341 = vpop.permute.xlu0 %3340
    %3342 = vrot.lane.b32.xlu0 %v3203, 40
    %v3343 = vpop.permute.xlu0 %3342
    %3344 = vrot.lane.b32.xlu0 %v3204, 40
    %v3345 = vpop.permute.xlu0 %3344
    %3346 = vrot.lane.b32.xlu0 %v3205, 40
    %v3347 = vpop.permute.xlu0 %3346
    %3348 = vrot.lane.b32.xlu0 %v3206, 40
    %v3349 = vpop.permute.xlu0 %3348
    %3350 = vrot.lane.b32.xlu0 %v3207, 40
    %v3351 = vpop.permute.xlu0 %3350
    %3352 = vrot.lane.b32.xlu0 %v3208, 40
    %v3353 = vpop.permute.xlu0 %3352
    %3354 = vrot.lane.b32.xlu0 %v3209, 40
    %v3355 = vpop.permute.xlu0 %3354
    %3356 = vrot.lane.b32.xlu0 %v3210, 40
    %v3357 = vpop.permute.xlu0 %3356
    %3358 = vrot.lane.b32.xlu0 %v3211, 40
    %v3359 = vpop.permute.xlu0 %3358
    %3360 = vrot.lane.b32.xlu0 %v3212, 40
    %v3361 = vpop.permute.xlu0 %3360
    %3362 = vrot.lane.b32.xlu0 %v3213, 40
    %v3363 = vpop.permute.xlu0 %3362
    %3364 = vrot.lane.b32.xlu0 %v3214, 40
    %v3365 = vpop.permute.xlu0 %3364
    %3366 = vrot.lane.b32.xlu0 %v3215, 40
    %v3367 = vpop.permute.xlu0 %3366
    %3368 = vrot.lane.b32.xlu0 %v3216, 40
    %v3369 = vpop.permute.xlu0 %3368
    %3370 = vrot.lane.b32.xlu0 %v3217, 40
    %v3371 = vpop.permute.xlu0 %3370
    %3372 = vrot.lane.b32.xlu0 %v3218, 40
    %v3373 = vpop.permute.xlu0 %3372
    %3374 = vrot.lane.b32.xlu0 %v3219, 40
    %v3375 = vpop.permute.xlu0 %3374
    %3376 = vrot.lane.b32.xlu0 %v3220, 40
    %v3377 = vpop.permute.xlu0 %3376
    %3378 = vrot.lane.b32.xlu0 %v3221, 40
    %v3379 = vpop.permute.xlu0 %3378
    %3380 = vrot.lane.b32.xlu0 %v3222, 40
    %v3381 = vpop.permute.xlu0 %3380
    %3382 = vrot.lane.b32.xlu0 %v3223, 40
    %v3383 = vpop.permute.xlu0 %3382
    %3384 = vrot.lane.b32.xlu0 %v3224, 40
    %v3385 = vpop.permute.xlu0 %3384
    %3386 = vrot.lane.b32.xlu0 %v3225, 40
    %v3387 = vpop.permute.xlu0 %3386
    %3388 = vrot.lane.b32.xlu0 %v3226, 40
    %v3389 = vpop.permute.xlu0 %3388
    %3390 = vrot.lane.b32.xlu0 %v3227, 40
    %v3391 = vpop.permute.xlu0 %3390
    %3392 = vrot.lane.b32.xlu0 %v3228, 40
    %v3393 = vpop.permute.xlu0 %3392
    %3394 = vrot.lane.b32.xlu0 %v3229, 40
    %v3395 = vpop.permute.xlu0 %3394
    %3396 = vrot.lane.b32.xlu0 %v3230, 40
    %v3397 = vpop.permute.xlu0 %3396
    %3398 = vrot.lane.b32.xlu0 %v3231, 40
    %v3399 = vpop.permute.xlu0 %3398
    %3400 = vrot.lane.b32.xlu0 %v3232, 40
    %v3401 = vpop.permute.xlu0 %3400
    %3402 = vrot.lane.b32.xlu0 %v3233, 40
    %v3403 = vpop.permute.xlu0 %3402
    %3404 = vrot.lane.b32.xlu0 %v3234, 40
    %v3405 = vpop.permute.xlu0 %3404
    %3406 = vrot.lane.b32.xlu0 %v3235, 40
    %v3407 = vpop.permute.xlu0 %3406
    %3408 = vrot.lane.b32.xlu0 %v3236, 40
    %v3409 = vpop.permute.xlu0 %3408
    %3410 = vrot.lane.b32.xlu0 %v3237, 40
    %v3411 = vpop.permute.xlu0 %3410
    %3412 = vrot.lane.b32.xlu0 %v3238, 40
    %v3413 = vpop.permute.xlu0 %3412
    %3414 = vrot.lane.b32.xlu0 %v3239, 40
    %v3415 = vpop.permute.xlu0 %3414
    %3416 = vrot.lane.b32.xlu0 %v3240, 40
    %v3417 = vpop.permute.xlu0 %3416
    %3418 = vrot.lane.b32.xlu0 %v3241, 40
    %v3419 = vpop.permute.xlu0 %3418
    %3420 = vrot.lane.b32.xlu0 %v3242, 40
    %v3421 = vpop.permute.xlu0 %3420
    %3422 = vrot.lane.b32.xlu0 %v3243, 40
    %v3423 = vpop.permute.xlu0 %3422
    %3424 = vrot.lane.b32.xlu0 %v3244, 40
    %v3425 = vpop.permute.xlu0 %3424
    %3426 = vrot.lane.b32.xlu0 %v3245, 40
    %v3427 = vpop.permute.xlu0 %3426
    %3428 = vrot.lane.b32.xlu0 %v3246, 40
    %v3429 = vpop.permute.xlu0 %3428
    %3430 = vrot.lane.b32.xlu0 %v3247, 40
    %v3431 = vpop.permute.xlu0 %3430
    %3432 = vrot.lane.b32.xlu0 %v3248, 40
    %v3433 = vpop.permute.xlu0 %3432
    %3434 = vrot.lane.b32.xlu0 %v3249, 40
    %v3435 = vpop.permute.xlu0 %3434
    %3436 = vrot.lane.b32.xlu0 %v3250, 40
    %v3437 = vpop.permute.xlu0 %3436
    %3438 = vrot.lane.b32.xlu0 %v3251, 40
    %v3439 = vpop.permute.xlu0 %3438
    %3440 = vrot.lane.b32.xlu0 %v3252, 40
    %v3441 = vpop.permute.xlu0 %3440
    %3442 = vrot.lane.b32.xlu0 %v3253, 40
    %v3443 = vpop.permute.xlu0 %3442
    %3444 = vrot.lane.b32.xlu0 %v3254, 40
    %v3445 = vpop.permute.xlu0 %3444
    %3446 = vrot.lane.b32.xlu0 %v3255, 40
    %v3447 = vpop.permute.xlu0 %3446
    %vm3512 = vcmask 392512
    %3513 = vst.msk [vmem:[#allocation3] sm:$0xff] %vm3512, %v3321
    %3514 = vst.msk [vmem:[#allocation3 + $0x8] sm:$0xff] %vm3512, %v3323
    %3515 = vst.msk [vmem:[#allocation3 + $0x10] sm:$0xff] %vm3512, %v3325
    %3516 = vst.msk [vmem:[#allocation3 + $0x18] sm:$0xff] %vm3512, %v3327
    %3517 = vst.msk [vmem:[#allocation3 + $0x20] sm:$0xff] %vm3512, %v3329
    %3518 = vst.msk [vmem:[#allocation3 + $0x28] sm:$0xff] %vm3512, %v3331
    %3519 = vst.msk [vmem:[#allocation3 + $0x30] sm:$0xff] %vm3512, %v3333
    %3520 = vst.msk [vmem:[#allocation3 + $0x38] sm:$0xff] %vm3512, %v3335
    %3521 = vst.msk [vmem:[#allocation3 + $0x40] sm:$0xff] %vm3512, %v3337
    %3522 = vst.msk [vmem:[#allocation3 + $0x48] sm:$0xff] %vm3512, %v3339
    %3523 = vst.msk [vmem:[#allocation3 + $0x50] sm:$0xff] %vm3512, %v3341
    %3524 = vst.msk [vmem:[#allocation3 + $0x58] sm:$0xff] %vm3512, %v3343
    %3525 = vst.msk [vmem:[#allocation3 + $0x60] sm:$0xff] %vm3512, %v3345
    %3526 = vst.msk [vmem:[#allocation3 + $0x68] sm:$0xff] %vm3512, %v3347
    %3527 = vst.msk [vmem:[#allocation3 + $0x70] sm:$0xff] %vm3512, %v3349
    %3528 = vst.msk [vmem:[#allocation3 + $0x78] sm:$0xff] %vm3512, %v3351
    %3529 = vst.msk [vmem:[#allocation3 + $0x80] sm:$0xff] %vm3512, %v3353
    %3530 = vst.msk [vmem:[#allocation3 + $0x88] sm:$0xff] %vm3512, %v3355
    %3531 = vst.msk [vmem:[#allocation3 + $0x90] sm:$0xff] %vm3512, %v3357
    %3532 = vst.msk [vmem:[#allocation3 + $0x98] sm:$0xff] %vm3512, %v3359
    %3533 = vst.msk [vmem:[#allocation3 + $0xa0] sm:$0xff] %vm3512, %v3361
    %3534 = vst.msk [vmem:[#allocation3 + $0xa8] sm:$0xff] %vm3512, %v3363
    %3535 = vst.msk [vmem:[#allocation3 + $0xb0] sm:$0xff] %vm3512, %v3365
    %3536 = vst.msk [vmem:[#allocation3 + $0xb8] sm:$0xff] %vm3512, %v3367
    %3537 = vst.msk [vmem:[#allocation3 + $0xc0] sm:$0xff] %vm3512, %v3369
    %3538 = vst.msk [vmem:[#allocation3 + $0xc8] sm:$0xff] %vm3512, %v3371
    %3539 = vst.msk [vmem:[#allocation3 + $0xd0] sm:$0xff] %vm3512, %v3373
    %3540 = vst.msk [vmem:[#allocation3 + $0xd8] sm:$0xff] %vm3512, %v3375
    %3541 = vst.msk [vmem:[#allocation3 + $0xe0] sm:$0xff] %vm3512, %v3377
    %3542 = vst.msk [vmem:[#allocation3 + $0xe8] sm:$0xff] %vm3512, %v3379
    %3543 = vst.msk [vmem:[#allocation3 + $0xf0] sm:$0xff] %vm3512, %v3381
    %3544 = vst.msk [vmem:[#allocation3 + $0xf8] sm:$0xff] %vm3512, %v3383
    %3545 = vst.msk [vmem:[#allocation3 + $0x100] sm:$0xff] %vm3512, %v3385
    %3546 = vst.msk [vmem:[#allocation3 + $0x108] sm:$0xff] %vm3512, %v3387
    %3547 = vst.msk [vmem:[#allocation3 + $0x110] sm:$0xff] %vm3512, %v3389
    %3548 = vst.msk [vmem:[#allocation3 + $0x118] sm:$0xff] %vm3512, %v3391
    %3549 = vst.msk [vmem:[#allocation3 + $0x120] sm:$0xff] %vm3512, %v3393
    %3550 = vst.msk [vmem:[#allocation3 + $0x128] sm:$0xff] %vm3512, %v3395
    %3551 = vst.msk [vmem:[#allocation3 + $0x130] sm:$0xff] %vm3512, %v3397
    %3552 = vst.msk [vmem:[#allocation3 + $0x138] sm:$0xff] %vm3512, %v3399
    %3553 = vst.msk [vmem:[#allocation3 + $0x140] sm:$0xff] %vm3512, %v3401
    %3554 = vst.msk [vmem:[#allocation3 + $0x148] sm:$0xff] %vm3512, %v3403
    %3555 = vst.msk [vmem:[#allocation3 + $0x150] sm:$0xff] %vm3512, %v3405
    %3556 = vst.msk [vmem:[#allocation3 + $0x158] sm:$0xff] %vm3512, %v3407
    %3557 = vst.msk [vmem:[#allocation3 + $0x160] sm:$0xff] %vm3512, %v3409
    %3558 = vst.msk [vmem:[#allocation3 + $0x168] sm:$0xff] %vm3512, %v3411
    %3559 = vst.msk [vmem:[#allocation3 + $0x170] sm:$0xff] %vm3512, %v3413
    %3560 = vst.msk [vmem:[#allocation3 + $0x178] sm:$0xff] %vm3512, %v3415
    %3561 = vst.msk [vmem:[#allocation3 + $0x180] sm:$0xff] %vm3512, %v3417
    %3562 = vst.msk [vmem:[#allocation3 + $0x188] sm:$0xff] %vm3512, %v3419
    %3563 = vst.msk [vmem:[#allocation3 + $0x190] sm:$0xff] %vm3512, %v3421
    %3564 = vst.msk [vmem:[#allocation3 + $0x198] sm:$0xff] %vm3512, %v3423
    %3565 = vst.msk [vmem:[#allocation3 + $0x1a0] sm:$0xff] %vm3512, %v3425
    %3566 = vst.msk [vmem:[#allocation3 + $0x1a8] sm:$0xff] %vm3512, %v3427
    %3567 = vst.msk [vmem:[#allocation3 + $0x1b0] sm:$0xff] %vm3512, %v3429
    %3568 = vst.msk [vmem:[#allocation3 + $0x1b8] sm:$0xff] %vm3512, %v3431
    %3569 = vst.msk [vmem:[#allocation3 + $0x1c0] sm:$0xff] %vm3512, %v3433
    %3570 = vst.msk [vmem:[#allocation3 + $0x1c8] sm:$0xff] %vm3512, %v3435
    %3571 = vst.msk [vmem:[#allocation3 + $0x1d0] sm:$0xff] %vm3512, %v3437
    %3572 = vst.msk [vmem:[#allocation3 + $0x1d8] sm:$0xff] %vm3512, %v3439
    %3573 = vst.msk [vmem:[#allocation3 + $0x1e0] sm:$0xff] %vm3512, %v3441
    %3574 = vst.msk [vmem:[#allocation3 + $0x1e8] sm:$0xff] %vm3512, %v3443
    %3575 = vst.msk [vmem:[#allocation3 + $0x1f0] sm:$0xff] %vm3512, %v3445
    %3576 = vst.msk [vmem:[#allocation3 + $0x1f8] sm:$0xff] %vm3512, %v3447
    %s3577 = scalar_lea.vmem [#allocation2], 48
    %v3578 = vld [vmem:[%s3577] sm:$0xff]
    %v3579 = vld [vmem:[%s3577 + $0x8] sm:$0xff]
    %v3580 = vld [vmem:[%s3577 + $0x18] sm:$0xff]
    %v3581 = vld [vmem:[%s3577 + $0x20] sm:$0xff]
    %v3582 = vld [vmem:[%s3577 + $0x30] sm:$0xff]
    %v3583 = vld [vmem:[%s3577 + $0x38] sm:$0xff]
    %v3584 = vld [vmem:[%s3577 + $0x48] sm:$0xff]
    %v3585 = vld [vmem:[%s3577 + $0x50] sm:$0xff]
    %v3586 = vld [vmem:[%s3577 + $0x60] sm:$0xff]
    %v3587 = vld [vmem:[%s3577 + $0x68] sm:$0xff]
    %v3588 = vld [vmem:[%s3577 + $0x78] sm:$0xff]
    %v3589 = vld [vmem:[%s3577 + $0x80] sm:$0xff]
    %v3590 = vld [vmem:[%s3577 + $0x90] sm:$0xff]
    %v3591 = vld [vmem:[%s3577 + $0x98] sm:$0xff]
    %v3592 = vld [vmem:[%s3577 + $0xa8] sm:$0xff]
    %v3593 = vld [vmem:[%s3577 + $0xb0] sm:$0xff]
    %v3594 = vld [vmem:[%s3577 + $0xc0] sm:$0xff]
    %v3595 = vld [vmem:[%s3577 + $0xc8] sm:$0xff]
    %v3596 = vld [vmem:[%s3577 + $0xd8] sm:$0xff]
    %v3597 = vld [vmem:[%s3577 + $0xe0] sm:$0xff]
    %v3598 = vld [vmem:[%s3577 + $0xf0] sm:$0xff]
    %v3599 = vld [vmem:[%s3577 + $0xf8] sm:$0xff]
    %v3600 = vld [vmem:[%s3577 + $0x108] sm:$0xff]
    %v3601 = vld [vmem:[%s3577 + $0x110] sm:$0xff]
    %v3602 = vld [vmem:[%s3577 + $0x120] sm:$0xff]
    %v3603 = vld [vmem:[%s3577 + $0x128] sm:$0xff]
    %v3604 = vld [vmem:[%s3577 + $0x138] sm:$0xff]
    %v3605 = vld [vmem:[%s3577 + $0x140] sm:$0xff]
    %v3606 = vld [vmem:[%s3577 + $0x150] sm:$0xff]
    %v3607 = vld [vmem:[%s3577 + $0x158] sm:$0xff]
    %v3608 = vld [vmem:[%s3577 + $0x168] sm:$0xff]
    %v3609 = vld [vmem:[%s3577 + $0x170] sm:$0xff]
    %v3610 = vld [vmem:[%s3577 + $0x1b0] sm:$0xff]
    %v3611 = vld [vmem:[%s3577 + $0x1b8] sm:$0xff]
    %v3612 = vld [vmem:[%s3577 + $0x1c8] sm:$0xff]
    %v3613 = vld [vmem:[%s3577 + $0x1d0] sm:$0xff]
    %v3614 = vld [vmem:[%s3577 + $0x1e0] sm:$0xff]
    %v3615 = vld [vmem:[%s3577 + $0x1e8] sm:$0xff]
    %v3616 = vld [vmem:[%s3577 + $0x1f8] sm:$0xff]
    %v3617 = vld [vmem:[%s3577 + $0x200] sm:$0xff]
    %v3618 = vld [vmem:[%s3577 + $0x210] sm:$0xff]
    %v3619 = vld [vmem:[%s3577 + $0x218] sm:$0xff]
    %v3620 = vld [vmem:[%s3577 + $0x228] sm:$0xff]
    %v3621 = vld [vmem:[%s3577 + $0x230] sm:$0xff]
    %v3622 = vld [vmem:[%s3577 + $0x240] sm:$0xff]
    %v3623 = vld [vmem:[%s3577 + $0x248] sm:$0xff]
    %v3624 = vld [vmem:[%s3577 + $0x258] sm:$0xff]
    %v3625 = vld [vmem:[%s3577 + $0x260] sm:$0xff]
    %v3626 = vld [vmem:[%s3577 + $0x270] sm:$0xff]
    %v3627 = vld [vmem:[%s3577 + $0x278] sm:$0xff]
    %v3628 = vld [vmem:[%s3577 + $0x288] sm:$0xff]
    %v3629 = vld [vmem:[%s3577 + $0x290] sm:$0xff]
    %v3630 = vld [vmem:[%s3577 + $0x2a0] sm:$0xff]
    %v3631 = vld [vmem:[%s3577 + $0x2a8] sm:$0xff]
    %v3632 = vld [vmem:[%s3577 + $0x2b8] sm:$0xff]
    %v3633 = vld [vmem:[%s3577 + $0x2c0] sm:$0xff]
    %v3634 = vld [vmem:[%s3577 + $0x2d0] sm:$0xff]
    %v3635 = vld [vmem:[%s3577 + $0x2d8] sm:$0xff]
    %v3636 = vld [vmem:[%s3577 + $0x2e8] sm:$0xff]
    %v3637 = vld [vmem:[%s3577 + $0x2f0] sm:$0xff]
    %v3638 = vld [vmem:[%s3577 + $0x300] sm:$0xff]
    %v3639 = vld [vmem:[%s3577 + $0x308] sm:$0xff]
    %v3640 = vld [vmem:[%s3577 + $0x318] sm:$0xff]
    %v3641 = vld [vmem:[%s3577 + $0x320] sm:$0xff]
    %3706 = vrot.lane.b32.xlu0 %v3578, 48
    %v3707 = vpop.permute.xlu0 %3706
    %3708 = vrot.lane.b32.xlu0 %v3579, 48
    %v3709 = vpop.permute.xlu0 %3708
    %3710 = vrot.lane.b32.xlu0 %v3580, 48
    %v3711 = vpop.permute.xlu0 %3710
    %3712 = vrot.lane.b32.xlu0 %v3581, 48
    %v3713 = vpop.permute.xlu0 %3712
    %3714 = vrot.lane.b32.xlu0 %v3582, 48
    %v3715 = vpop.permute.xlu0 %3714
    %3716 = vrot.lane.b32.xlu0 %v3583, 48
    %v3717 = vpop.permute.xlu0 %3716
    %3718 = vrot.lane.b32.xlu0 %v3584, 48
    %v3719 = vpop.permute.xlu0 %3718
    %3720 = vrot.lane.b32.xlu0 %v3585, 48
    %v3721 = vpop.permute.xlu0 %3720
    %3722 = vrot.lane.b32.xlu0 %v3586, 48
    %v3723 = vpop.permute.xlu0 %3722
    %3724 = vrot.lane.b32.xlu0 %v3587, 48
    %v3725 = vpop.permute.xlu0 %3724
    %3726 = vrot.lane.b32.xlu0 %v3588, 48
    %v3727 = vpop.permute.xlu0 %3726
    %3728 = vrot.lane.b32.xlu0 %v3589, 48
    %v3729 = vpop.permute.xlu0 %3728
    %3730 = vrot.lane.b32.xlu0 %v3590, 48
    %v3731 = vpop.permute.xlu0 %3730
    %3732 = vrot.lane.b32.xlu0 %v3591, 48
    %v3733 = vpop.permute.xlu0 %3732
    %3734 = vrot.lane.b32.xlu0 %v3592, 48
    %v3735 = vpop.permute.xlu0 %3734
    %3736 = vrot.lane.b32.xlu0 %v3593, 48
    %v3737 = vpop.permute.xlu0 %3736
    %3738 = vrot.lane.b32.xlu0 %v3594, 48
    %v3739 = vpop.permute.xlu0 %3738
    %3740 = vrot.lane.b32.xlu0 %v3595, 48
    %v3741 = vpop.permute.xlu0 %3740
    %3742 = vrot.lane.b32.xlu0 %v3596, 48
    %v3743 = vpop.permute.xlu0 %3742
    %3744 = vrot.lane.b32.xlu0 %v3597, 48
    %v3745 = vpop.permute.xlu0 %3744
    %3746 = vrot.lane.b32.xlu0 %v3598, 48
    %v3747 = vpop.permute.xlu0 %3746
    %3748 = vrot.lane.b32.xlu0 %v3599, 48
    %v3749 = vpop.permute.xlu0 %3748
    %3750 = vrot.lane.b32.xlu0 %v3600, 48
    %v3751 = vpop.permute.xlu0 %3750
    %3752 = vrot.lane.b32.xlu0 %v3601, 48
    %v3753 = vpop.permute.xlu0 %3752
    %3754 = vrot.lane.b32.xlu0 %v3602, 48
    %v3755 = vpop.permute.xlu0 %3754
    %3756 = vrot.lane.b32.xlu0 %v3603, 48
    %v3757 = vpop.permute.xlu0 %3756
    %3758 = vrot.lane.b32.xlu0 %v3604, 48
    %v3759 = vpop.permute.xlu0 %3758
    %3760 = vrot.lane.b32.xlu0 %v3605, 48
    %v3761 = vpop.permute.xlu0 %3760
    %3762 = vrot.lane.b32.xlu0 %v3606, 48
    %v3763 = vpop.permute.xlu0 %3762
    %3764 = vrot.lane.b32.xlu0 %v3607, 48
    %v3765 = vpop.permute.xlu0 %3764
    %3766 = vrot.lane.b32.xlu0 %v3608, 48
    %v3767 = vpop.permute.xlu0 %3766
    %3768 = vrot.lane.b32.xlu0 %v3609, 48
    %v3769 = vpop.permute.xlu0 %3768
    %3770 = vrot.lane.b32.xlu0 %v3610, 48
    %v3771 = vpop.permute.xlu0 %3770
    %3772 = vrot.lane.b32.xlu0 %v3611, 48
    %v3773 = vpop.permute.xlu0 %3772
    %3774 = vrot.lane.b32.xlu0 %v3612, 48
    %v3775 = vpop.permute.xlu0 %3774
    %3776 = vrot.lane.b32.xlu0 %v3613, 48
    %v3777 = vpop.permute.xlu0 %3776
    %3778 = vrot.lane.b32.xlu0 %v3614, 48
    %v3779 = vpop.permute.xlu0 %3778
    %3780 = vrot.lane.b32.xlu0 %v3615, 48
    %v3781 = vpop.permute.xlu0 %3780
    %3782 = vrot.lane.b32.xlu0 %v3616, 48
    %v3783 = vpop.permute.xlu0 %3782
    %3784 = vrot.lane.b32.xlu0 %v3617, 48
    %v3785 = vpop.permute.xlu0 %3784
    %3786 = vrot.lane.b32.xlu0 %v3618, 48
    %v3787 = vpop.permute.xlu0 %3786
    %3788 = vrot.lane.b32.xlu0 %v3619, 48
    %v3789 = vpop.permute.xlu0 %3788
    %3790 = vrot.lane.b32.xlu0 %v3620, 48
    %v3791 = vpop.permute.xlu0 %3790
    %3792 = vrot.lane.b32.xlu0 %v3621, 48
    %v3793 = vpop.permute.xlu0 %3792
    %3794 = vrot.lane.b32.xlu0 %v3622, 48
    %v3795 = vpop.permute.xlu0 %3794
    %3796 = vrot.lane.b32.xlu0 %v3623, 48
    %v3797 = vpop.permute.xlu0 %3796
    %3798 = vrot.lane.b32.xlu0 %v3624, 48
    %v3799 = vpop.permute.xlu0 %3798
    %3800 = vrot.lane.b32.xlu0 %v3625, 48
    %v3801 = vpop.permute.xlu0 %3800
    %3802 = vrot.lane.b32.xlu0 %v3626, 48
    %v3803 = vpop.permute.xlu0 %3802
    %3804 = vrot.lane.b32.xlu0 %v3627, 48
    %v3805 = vpop.permute.xlu0 %3804
    %3806 = vrot.lane.b32.xlu0 %v3628, 48
    %v3807 = vpop.permute.xlu0 %3806
    %3808 = vrot.lane.b32.xlu0 %v3629, 48
    %v3809 = vpop.permute.xlu0 %3808
    %3810 = vrot.lane.b32.xlu0 %v3630, 48
    %v3811 = vpop.permute.xlu0 %3810
    %3812 = vrot.lane.b32.xlu0 %v3631, 48
    %v3813 = vpop.permute.xlu0 %3812
    %3814 = vrot.lane.b32.xlu0 %v3632, 48
    %v3815 = vpop.permute.xlu0 %3814
    %3816 = vrot.lane.b32.xlu0 %v3633, 48
    %v3817 = vpop.permute.xlu0 %3816
    %3818 = vrot.lane.b32.xlu0 %v3634, 48
    %v3819 = vpop.permute.xlu0 %3818
    %3820 = vrot.lane.b32.xlu0 %v3635, 48
    %v3821 = vpop.permute.xlu0 %3820
    %3822 = vrot.lane.b32.xlu0 %v3636, 48
    %v3823 = vpop.permute.xlu0 %3822
    %3824 = vrot.lane.b32.xlu0 %v3637, 48
    %v3825 = vpop.permute.xlu0 %3824
    %3826 = vrot.lane.b32.xlu0 %v3638, 48
    %v3827 = vpop.permute.xlu0 %3826
    %3828 = vrot.lane.b32.xlu0 %v3639, 48
    %v3829 = vpop.permute.xlu0 %3828
    %3830 = vrot.lane.b32.xlu0 %v3640, 48
    %v3831 = vpop.permute.xlu0 %3830
    %3832 = vrot.lane.b32.xlu0 %v3641, 48
    %v3833 = vpop.permute.xlu0 %3832
    %vm3898 = vcmask 458112
    %3899 = vst.msk [vmem:[#allocation3] sm:$0xff] %vm3898, %v3707
    %3900 = vst.msk [vmem:[#allocation3 + $0x8] sm:$0xff] %vm3898, %v3709
    %3901 = vst.msk [vmem:[#allocation3 + $0x10] sm:$0xff] %vm3898, %v3711
    %3902 = vst.msk [vmem:[#allocation3 + $0x18] sm:$0xff] %vm3898, %v3713
    %3903 = vst.msk [vmem:[#allocation3 + $0x20] sm:$0xff] %vm3898, %v3715
    %3904 = vst.msk [vmem:[#allocation3 + $0x28] sm:$0xff] %vm3898, %v3717
    %3905 = vst.msk [vmem:[#allocation3 + $0x30] sm:$0xff] %vm3898, %v3719
    %3906 = vst.msk [vmem:[#allocation3 + $0x38] sm:$0xff] %vm3898, %v3721
    %3907 = vst.msk [vmem:[#allocation3 + $0x40] sm:$0xff] %vm3898, %v3723
    %3908 = vst.msk [vmem:[#allocation3 + $0x48] sm:$0xff] %vm3898, %v3725
    %3909 = vst.msk [vmem:[#allocation3 + $0x50] sm:$0xff] %vm3898, %v3727
    %3910 = vst.msk [vmem:[#allocation3 + $0x58] sm:$0xff] %vm3898, %v3729
    %3911 = vst.msk [vmem:[#allocation3 + $0x60] sm:$0xff] %vm3898, %v3731
    %3912 = vst.msk [vmem:[#allocation3 + $0x68] sm:$0xff] %vm3898, %v3733
    %3913 = vst.msk [vmem:[#allocation3 + $0x70] sm:$0xff] %vm3898, %v3735
    %3914 = vst.msk [vmem:[#allocation3 + $0x78] sm:$0xff] %vm3898, %v3737
    %3915 = vst.msk [vmem:[#allocation3 + $0x80] sm:$0xff] %vm3898, %v3739
    %3916 = vst.msk [vmem:[#allocation3 + $0x88] sm:$0xff] %vm3898, %v3741
    %3917 = vst.msk [vmem:[#allocation3 + $0x90] sm:$0xff] %vm3898, %v3743
    %3918 = vst.msk [vmem:[#allocation3 + $0x98] sm:$0xff] %vm3898, %v3745
    %3919 = vst.msk [vmem:[#allocation3 + $0xa0] sm:$0xff] %vm3898, %v3747
    %3920 = vst.msk [vmem:[#allocation3 + $0xa8] sm:$0xff] %vm3898, %v3749
    %3921 = vst.msk [vmem:[#allocation3 + $0xb0] sm:$0xff] %vm3898, %v3751
    %3922 = vst.msk [vmem:[#allocation3 + $0xb8] sm:$0xff] %vm3898, %v3753
    %3923 = vst.msk [vmem:[#allocation3 + $0xc0] sm:$0xff] %vm3898, %v3755
    %3924 = vst.msk [vmem:[#allocation3 + $0xc8] sm:$0xff] %vm3898, %v3757
    %3925 = vst.msk [vmem:[#allocation3 + $0xd0] sm:$0xff] %vm3898, %v3759
    %3926 = vst.msk [vmem:[#allocation3 + $0xd8] sm:$0xff] %vm3898, %v3761
    %3927 = vst.msk [vmem:[#allocation3 + $0xe0] sm:$0xff] %vm3898, %v3763
    %3928 = vst.msk [vmem:[#allocation3 + $0xe8] sm:$0xff] %vm3898, %v3765
    %3929 = vst.msk [vmem:[#allocation3 + $0xf0] sm:$0xff] %vm3898, %v3767
    %3930 = vst.msk [vmem:[#allocation3 + $0xf8] sm:$0xff] %vm3898, %v3769
    %3931 = vst.msk [vmem:[#allocation3 + $0x100] sm:$0xff] %vm3898, %v3771
    %3932 = vst.msk [vmem:[#allocation3 + $0x108] sm:$0xff] %vm3898, %v3773
    %3933 = vst.msk [vmem:[#allocation3 + $0x110] sm:$0xff] %vm3898, %v3775
    %3934 = vst.msk [vmem:[#allocation3 + $0x118] sm:$0xff] %vm3898, %v3777
    %3935 = vst.msk [vmem:[#allocation3 + $0x120] sm:$0xff] %vm3898, %v3779
    %3936 = vst.msk [vmem:[#allocation3 + $0x128] sm:$0xff] %vm3898, %v3781
    %3937 = vst.msk [vmem:[#allocation3 + $0x130] sm:$0xff] %vm3898, %v3783
    %3938 = vst.msk [vmem:[#allocation3 + $0x138] sm:$0xff] %vm3898, %v3785
    %3939 = vst.msk [vmem:[#allocation3 + $0x140] sm:$0xff] %vm3898, %v3787
    %3940 = vst.msk [vmem:[#allocation3 + $0x148] sm:$0xff] %vm3898, %v3789
    %3941 = vst.msk [vmem:[#allocation3 + $0x150] sm:$0xff] %vm3898, %v3791
    %3942 = vst.msk [vmem:[#allocation3 + $0x158] sm:$0xff] %vm3898, %v3793
    %3943 = vst.msk [vmem:[#allocation3 + $0x160] sm:$0xff] %vm3898, %v3795
    %3944 = vst.msk [vmem:[#allocation3 + $0x168] sm:$0xff] %vm3898, %v3797
    %3945 = vst.msk [vmem:[#allocation3 + $0x170] sm:$0xff] %vm3898, %v3799
    %3946 = vst.msk [vmem:[#allocation3 + $0x178] sm:$0xff] %vm3898, %v3801
    %3947 = vst.msk [vmem:[#allocation3 + $0x180] sm:$0xff] %vm3898, %v3803
    %3948 = vst.msk [vmem:[#allocation3 + $0x188] sm:$0xff] %vm3898, %v3805
    %3949 = vst.msk [vmem:[#allocation3 + $0x190] sm:$0xff] %vm3898, %v3807
    %3950 = vst.msk [vmem:[#allocation3 + $0x198] sm:$0xff] %vm3898, %v3809
    %3951 = vst.msk [vmem:[#allocation3 + $0x1a0] sm:$0xff] %vm3898, %v3811
    %3952 = vst.msk [vmem:[#allocation3 + $0x1a8] sm:$0xff] %vm3898, %v3813
    %3953 = vst.msk [vmem:[#allocation3 + $0x1b0] sm:$0xff] %vm3898, %v3815
    %3954 = vst.msk [vmem:[#allocation3 + $0x1b8] sm:$0xff] %vm3898, %v3817
    %3955 = vst.msk [vmem:[#allocation3 + $0x1c0] sm:$0xff] %vm3898, %v3819
    %3956 = vst.msk [vmem:[#allocation3 + $0x1c8] sm:$0xff] %vm3898, %v3821
    %3957 = vst.msk [vmem:[#allocation3 + $0x1d0] sm:$0xff] %vm3898, %v3823
    %3958 = vst.msk [vmem:[#allocation3 + $0x1d8] sm:$0xff] %vm3898, %v3825
    %3959 = vst.msk [vmem:[#allocation3 + $0x1e0] sm:$0xff] %vm3898, %v3827
    %3960 = vst.msk [vmem:[#allocation3 + $0x1e8] sm:$0xff] %vm3898, %v3829
    %3961 = vst.msk [vmem:[#allocation3 + $0x1f0] sm:$0xff] %vm3898, %v3831
    %3962 = vst.msk [vmem:[#allocation3 + $0x1f8] sm:$0xff] %vm3898, %v3833
    %v3963 = vld [vmem:[%s3577 + $0x1] sm:$0xff]
    %v3964 = vld [vmem:[%s3577 + $0x9] sm:$0xff]
    %v3965 = vld [vmem:[%s3577 + $0x19] sm:$0xff]
    %v3966 = vld [vmem:[%s3577 + $0x21] sm:$0xff]
    %v3967 = vld [vmem:[%s3577 + $0x31] sm:$0xff]
    %v3968 = vld [vmem:[%s3577 + $0x39] sm:$0xff]
    %v3969 = vld [vmem:[%s3577 + $0x49] sm:$0xff]
    %v3970 = vld [vmem:[%s3577 + $0x51] sm:$0xff]
    %v3971 = vld [vmem:[%s3577 + $0x61] sm:$0xff]
    %v3972 = vld [vmem:[%s3577 + $0x69] sm:$0xff]
    %v3973 = vld [vmem:[%s3577 + $0x79] sm:$0xff]
    %v3974 = vld [vmem:[%s3577 + $0x81] sm:$0xff]
    %v3975 = vld [vmem:[%s3577 + $0x91] sm:$0xff]
    %v3976 = vld [vmem:[%s3577 + $0x99] sm:$0xff]
    %v3977 = vld [vmem:[%s3577 + $0xa9] sm:$0xff]
    %v3978 = vld [vmem:[%s3577 + $0xb1] sm:$0xff]
    %v3979 = vld [vmem:[%s3577 + $0xc1] sm:$0xff]
    %v3980 = vld [vmem:[%s3577 + $0xc9] sm:$0xff]
    %v3981 = vld [vmem:[%s3577 + $0xd9] sm:$0xff]
    %v3982 = vld [vmem:[%s3577 + $0xe1] sm:$0xff]
    %v3983 = vld [vmem:[%s3577 + $0xf1] sm:$0xff]
    %v3984 = vld [vmem:[%s3577 + $0xf9] sm:$0xff]
    %v3985 = vld [vmem:[%s3577 + $0x109] sm:$0xff]
    %v3986 = vld [vmem:[%s3577 + $0x111] sm:$0xff]
    %v3987 = vld [vmem:[%s3577 + $0x121] sm:$0xff]
    %v3988 = vld [vmem:[%s3577 + $0x129] sm:$0xff]
    %v3989 = vld [vmem:[%s3577 + $0x139] sm:$0xff]
    %v3990 = vld [vmem:[%s3577 + $0x141] sm:$0xff]
    %v3991 = vld [vmem:[%s3577 + $0x151] sm:$0xff]
    %v3992 = vld [vmem:[%s3577 + $0x159] sm:$0xff]
    %v3993 = vld [vmem:[%s3577 + $0x169] sm:$0xff]
    %v3994 = vld [vmem:[%s3577 + $0x171] sm:$0xff]
    %v3995 = vld [vmem:[%s3577 + $0x1b1] sm:$0xff]
    %v3996 = vld [vmem:[%s3577 + $0x1b9] sm:$0xff]
    %v3997 = vld [vmem:[%s3577 + $0x1c9] sm:$0xff]
    %v3998 = vld [vmem:[%s3577 + $0x1d1] sm:$0xff]
    %v3999 = vld [vmem:[%s3577 + $0x1e1] sm:$0xff]
    %v4000 = vld [vmem:[%s3577 + $0x1e9] sm:$0xff]
    %v4001 = vld [vmem:[%s3577 + $0x1f9] sm:$0xff]
    %v4002 = vld [vmem:[%s3577 + $0x201] sm:$0xff]
    %v4003 = vld [vmem:[%s3577 + $0x211] sm:$0xff]
    %v4004 = vld [vmem:[%s3577 + $0x219] sm:$0xff]
    %v4005 = vld [vmem:[%s3577 + $0x229] sm:$0xff]
    %v4006 = vld [vmem:[%s3577 + $0x231] sm:$0xff]
    %v4007 = vld [vmem:[%s3577 + $0x241] sm:$0xff]
    %v4008 = vld [vmem:[%s3577 + $0x249] sm:$0xff]
    %v4009 = vld [vmem:[%s3577 + $0x259] sm:$0xff]
    %v4010 = vld [vmem:[%s3577 + $0x261] sm:$0xff]
    %v4011 = vld [vmem:[%s3577 + $0x271] sm:$0xff]
    %v4012 = vld [vmem:[%s3577 + $0x279] sm:$0xff]
    %v4013 = vld [vmem:[%s3577 + $0x289] sm:$0xff]
    %v4014 = vld [vmem:[%s3577 + $0x291] sm:$0xff]
    %v4015 = vld [vmem:[%s3577 + $0x2a1] sm:$0xff]
    %v4016 = vld [vmem:[%s3577 + $0x2a9] sm:$0xff]
    %v4017 = vld [vmem:[%s3577 + $0x2b9] sm:$0xff]
    %v4018 = vld [vmem:[%s3577 + $0x2c1] sm:$0xff]
    %v4019 = vld [vmem:[%s3577 + $0x2d1] sm:$0xff]
    %v4020 = vld [vmem:[%s3577 + $0x2d9] sm:$0xff]
    %v4021 = vld [vmem:[%s3577 + $0x2e9] sm:$0xff]
    %v4022 = vld [vmem:[%s3577 + $0x2f1] sm:$0xff]
    %v4023 = vld [vmem:[%s3577 + $0x301] sm:$0xff]
    %v4024 = vld [vmem:[%s3577 + $0x309] sm:$0xff]
    %v4025 = vld [vmem:[%s3577 + $0x319] sm:$0xff]
    %v4026 = vld [vmem:[%s3577 + $0x321] sm:$0xff]
    %4091 = vrot.lane.b32.xlu0 %v3963, 56
    %v4092 = vpop.permute.xlu0 %4091
    %4093 = vrot.lane.b32.xlu0 %v3964, 56
    %v4094 = vpop.permute.xlu0 %4093
    %4095 = vrot.lane.b32.xlu0 %v3965, 56
    %v4096 = vpop.permute.xlu0 %4095
    %4097 = vrot.lane.b32.xlu0 %v3966, 56
    %v4098 = vpop.permute.xlu0 %4097
    %4099 = vrot.lane.b32.xlu0 %v3967, 56
    %v4100 = vpop.permute.xlu0 %4099
    %4101 = vrot.lane.b32.xlu0 %v3968, 56
    %v4102 = vpop.permute.xlu0 %4101
    %4103 = vrot.lane.b32.xlu0 %v3969, 56
    %v4104 = vpop.permute.xlu0 %4103
    %4105 = vrot.lane.b32.xlu0 %v3970, 56
    %v4106 = vpop.permute.xlu0 %4105
    %4107 = vrot.lane.b32.xlu0 %v3971, 56
    %v4108 = vpop.permute.xlu0 %4107
    %4109 = vrot.lane.b32.xlu0 %v3972, 56
    %v4110 = vpop.permute.xlu0 %4109
    %4111 = vrot.lane.b32.xlu0 %v3973, 56
    %v4112 = vpop.permute.xlu0 %4111
    %4113 = vrot.lane.b32.xlu0 %v3974, 56
    %v4114 = vpop.permute.xlu0 %4113
    %4115 = vrot.lane.b32.xlu0 %v3975, 56
    %v4116 = vpop.permute.xlu0 %4115
    %4117 = vrot.lane.b32.xlu0 %v3976, 56
    %v4118 = vpop.permute.xlu0 %4117
    %4119 = vrot.lane.b32.xlu0 %v3977, 56
    %v4120 = vpop.permute.xlu0 %4119
    %4121 = vrot.lane.b32.xlu0 %v3978, 56
    %v4122 = vpop.permute.xlu0 %4121
    %4123 = vrot.lane.b32.xlu0 %v3979, 56
    %v4124 = vpop.permute.xlu0 %4123
    %4125 = vrot.lane.b32.xlu0 %v3980, 56
    %v4126 = vpop.permute.xlu0 %4125
    %4127 = vrot.lane.b32.xlu0 %v3981, 56
    %v4128 = vpop.permute.xlu0 %4127
    %4129 = vrot.lane.b32.xlu0 %v3982, 56
    %v4130 = vpop.permute.xlu0 %4129
    %4131 = vrot.lane.b32.xlu0 %v3983, 56
    %v4132 = vpop.permute.xlu0 %4131
    %4133 = vrot.lane.b32.xlu0 %v3984, 56
    %v4134 = vpop.permute.xlu0 %4133
    %4135 = vrot.lane.b32.xlu0 %v3985, 56
    %v4136 = vpop.permute.xlu0 %4135
    %4137 = vrot.lane.b32.xlu0 %v3986, 56
    %v4138 = vpop.permute.xlu0 %4137
    %4139 = vrot.lane.b32.xlu0 %v3987, 56
    %v4140 = vpop.permute.xlu0 %4139
    %4141 = vrot.lane.b32.xlu0 %v3988, 56
    %v4142 = vpop.permute.xlu0 %4141
    %4143 = vrot.lane.b32.xlu0 %v3989, 56
    %v4144 = vpop.permute.xlu0 %4143
    %4145 = vrot.lane.b32.xlu0 %v3990, 56
    %v4146 = vpop.permute.xlu0 %4145
    %4147 = vrot.lane.b32.xlu0 %v3991, 56
    %v4148 = vpop.permute.xlu0 %4147
    %4149 = vrot.lane.b32.xlu0 %v3992, 56
    %v4150 = vpop.permute.xlu0 %4149
    %4151 = vrot.lane.b32.xlu0 %v3993, 56
    %v4152 = vpop.permute.xlu0 %4151
    %4153 = vrot.lane.b32.xlu0 %v3994, 56
    %v4154 = vpop.permute.xlu0 %4153
    %4155 = vrot.lane.b32.xlu0 %v3995, 56
    %v4156 = vpop.permute.xlu0 %4155
    %4157 = vrot.lane.b32.xlu0 %v3996, 56
    %v4158 = vpop.permute.xlu0 %4157
    %4159 = vrot.lane.b32.xlu0 %v3997, 56
    %v4160 = vpop.permute.xlu0 %4159
    %4161 = vrot.lane.b32.xlu0 %v3998, 56
    %v4162 = vpop.permute.xlu0 %4161
    %4163 = vrot.lane.b32.xlu0 %v3999, 56
    %v4164 = vpop.permute.xlu0 %4163
    %4165 = vrot.lane.b32.xlu0 %v4000, 56
    %v4166 = vpop.permute.xlu0 %4165
    %4167 = vrot.lane.b32.xlu0 %v4001, 56
    %v4168 = vpop.permute.xlu0 %4167
    %4169 = vrot.lane.b32.xlu0 %v4002, 56
    %v4170 = vpop.permute.xlu0 %4169
    %4171 = vrot.lane.b32.xlu0 %v4003, 56
    %v4172 = vpop.permute.xlu0 %4171
    %4173 = vrot.lane.b32.xlu0 %v4004, 56
    %v4174 = vpop.permute.xlu0 %4173
    %4175 = vrot.lane.b32.xlu0 %v4005, 56
    %v4176 = vpop.permute.xlu0 %4175
    %4177 = vrot.lane.b32.xlu0 %v4006, 56
    %v4178 = vpop.permute.xlu0 %4177
    %4179 = vrot.lane.b32.xlu0 %v4007, 56
    %v4180 = vpop.permute.xlu0 %4179
    %4181 = vrot.lane.b32.xlu0 %v4008, 56
    %v4182 = vpop.permute.xlu0 %4181
    %4183 = vrot.lane.b32.xlu0 %v4009, 56
    %v4184 = vpop.permute.xlu0 %4183
    %4185 = vrot.lane.b32.xlu0 %v4010, 56
    %v4186 = vpop.permute.xlu0 %4185
    %4187 = vrot.lane.b32.xlu0 %v4011, 56
    %v4188 = vpop.permute.xlu0 %4187
    %4189 = vrot.lane.b32.xlu0 %v4012, 56
    %v4190 = vpop.permute.xlu0 %4189
    %4191 = vrot.lane.b32.xlu0 %v4013, 56
    %v4192 = vpop.permute.xlu0 %4191
    %4193 = vrot.lane.b32.xlu0 %v4014, 56
    %v4194 = vpop.permute.xlu0 %4193
    %4195 = vrot.lane.b32.xlu0 %v4015, 56
    %v4196 = vpop.permute.xlu0 %4195
    %4197 = vrot.lane.b32.xlu0 %v4016, 56
    %v4198 = vpop.permute.xlu0 %4197
    %4199 = vrot.lane.b32.xlu0 %v4017, 56
    %v4200 = vpop.permute.xlu0 %4199
    %4201 = vrot.lane.b32.xlu0 %v4018, 56
    %v4202 = vpop.permute.xlu0 %4201
    %4203 = vrot.lane.b32.xlu0 %v4019, 56
    %v4204 = vpop.permute.xlu0 %4203
    %4205 = vrot.lane.b32.xlu0 %v4020, 56
    %v4206 = vpop.permute.xlu0 %4205
    %4207 = vrot.lane.b32.xlu0 %v4021, 56
    %v4208 = vpop.permute.xlu0 %4207
    %4209 = vrot.lane.b32.xlu0 %v4022, 56
    %v4210 = vpop.permute.xlu0 %4209
    %4211 = vrot.lane.b32.xlu0 %v4023, 56
    %v4212 = vpop.permute.xlu0 %4211
    %4213 = vrot.lane.b32.xlu0 %v4024, 56
    %v4214 = vpop.permute.xlu0 %4213
    %4215 = vrot.lane.b32.xlu0 %v4025, 56
    %v4216 = vpop.permute.xlu0 %4215
    %4217 = vrot.lane.b32.xlu0 %v4026, 56
    %v4218 = vpop.permute.xlu0 %4217
    %vm4283 = vcmask 523712
    %4284 = vst.msk [vmem:[#allocation3] sm:$0xff] %vm4283, %v4092
    %4285 = vst.msk [vmem:[#allocation3 + $0x8] sm:$0xff] %vm4283, %v4094
    %4286 = vst.msk [vmem:[#allocation3 + $0x10] sm:$0xff] %vm4283, %v4096
    %4287 = vst.msk [vmem:[#allocation3 + $0x18] sm:$0xff] %vm4283, %v4098
    %4288 = vst.msk [vmem:[#allocation3 + $0x20] sm:$0xff] %vm4283, %v4100
    %4289 = vst.msk [vmem:[#allocation3 + $0x28] sm:$0xff] %vm4283, %v4102
    %4290 = vst.msk [vmem:[#allocation3 + $0x30] sm:$0xff] %vm4283, %v4104
    %4291 = vst.msk [vmem:[#allocation3 + $0x38] sm:$0xff] %vm4283, %v4106
    %4292 = vst.msk [vmem:[#allocation3 + $0x40] sm:$0xff] %vm4283, %v4108
    %4293 = vst.msk [vmem:[#allocation3 + $0x48] sm:$0xff] %vm4283, %v4110
    %4294 = vst.msk [vmem:[#allocation3 + $0x50] sm:$0xff] %vm4283, %v4112
    %4295 = vst.msk [vmem:[#allocation3 + $0x58] sm:$0xff] %vm4283, %v4114
    %4296 = vst.msk [vmem:[#allocation3 + $0x60] sm:$0xff] %vm4283, %v4116
    %4297 = vst.msk [vmem:[#allocation3 + $0x68] sm:$0xff] %vm4283, %v4118
    %4298 = vst.msk [vmem:[#allocation3 + $0x70] sm:$0xff] %vm4283, %v4120
    %4299 = vst.msk [vmem:[#allocation3 + $0x78] sm:$0xff] %vm4283, %v4122
    %4300 = vst.msk [vmem:[#allocation3 + $0x80] sm:$0xff] %vm4283, %v4124
    %4301 = vst.msk [vmem:[#allocation3 + $0x88] sm:$0xff] %vm4283, %v4126
    %4302 = vst.msk [vmem:[#allocation3 + $0x90] sm:$0xff] %vm4283, %v4128
    %4303 = vst.msk [vmem:[#allocation3 + $0x98] sm:$0xff] %vm4283, %v4130
    %4304 = vst.msk [vmem:[#allocation3 + $0xa0] sm:$0xff] %vm4283, %v4132
    %4305 = vst.msk [vmem:[#allocation3 + $0xa8] sm:$0xff] %vm4283, %v4134
    %4306 = vst.msk [vmem:[#allocation3 + $0xb0] sm:$0xff] %vm4283, %v4136
    %4307 = vst.msk [vmem:[#allocation3 + $0xb8] sm:$0xff] %vm4283, %v4138
    %4308 = vst.msk [vmem:[#allocation3 + $0xc0] sm:$0xff] %vm4283, %v4140
    %4309 = vst.msk [vmem:[#allocation3 + $0xc8] sm:$0xff] %vm4283, %v4142
    %4310 = vst.msk [vmem:[#allocation3 + $0xd0] sm:$0xff] %vm4283, %v4144
    %4311 = vst.msk [vmem:[#allocation3 + $0xd8] sm:$0xff] %vm4283, %v4146
    %4312 = vst.msk [vmem:[#allocation3 + $0xe0] sm:$0xff] %vm4283, %v4148
    %4313 = vst.msk [vmem:[#allocation3 + $0xe8] sm:$0xff] %vm4283, %v4150
    %4314 = vst.msk [vmem:[#allocation3 + $0xf0] sm:$0xff] %vm4283, %v4152
    %4315 = vst.msk [vmem:[#allocation3 + $0xf8] sm:$0xff] %vm4283, %v4154
    %4316 = vst.msk [vmem:[#allocation3 + $0x100] sm:$0xff] %vm4283, %v4156
    %4317 = vst.msk [vmem:[#allocation3 + $0x108] sm:$0xff] %vm4283, %v4158
    %4318 = vst.msk [vmem:[#allocation3 + $0x110] sm:$0xff] %vm4283, %v4160
    %4319 = vst.msk [vmem:[#allocation3 + $0x118] sm:$0xff] %vm4283, %v4162
    %4320 = vst.msk [vmem:[#allocation3 + $0x120] sm:$0xff] %vm4283, %v4164
    %4321 = vst.msk [vmem:[#allocation3 + $0x128] sm:$0xff] %vm4283, %v4166
    %4322 = vst.msk [vmem:[#allocation3 + $0x130] sm:$0xff] %vm4283, %v4168
    %4323 = vst.msk [vmem:[#allocation3 + $0x138] sm:$0xff] %vm4283, %v4170
    %4324 = vst.msk [vmem:[#allocation3 + $0x140] sm:$0xff] %vm4283, %v4172
    %4325 = vst.msk [vmem:[#allocation3 + $0x148] sm:$0xff] %vm4283, %v4174
    %4326 = vst.msk [vmem:[#allocation3 + $0x150] sm:$0xff] %vm4283, %v4176
    %4327 = vst.msk [vmem:[#allocation3 + $0x158] sm:$0xff] %vm4283, %v4178
    %4328 = vst.msk [vmem:[#allocation3 + $0x160] sm:$0xff] %vm4283, %v4180
    %4329 = vst.msk [vmem:[#allocation3 + $0x168] sm:$0xff] %vm4283, %v4182
    %4330 = vst.msk [vmem:[#allocation3 + $0x170] sm:$0xff] %vm4283, %v4184
    %4331 = vst.msk [vmem:[#allocation3 + $0x178] sm:$0xff] %vm4283, %v4186
    %4332 = vst.msk [vmem:[#allocation3 + $0x180] sm:$0xff] %vm4283, %v4188
    %4333 = vst.msk [vmem:[#allocation3 + $0x188] sm:$0xff] %vm4283, %v4190
    %4334 = vst.msk [vmem:[#allocation3 + $0x190] sm:$0xff] %vm4283, %v4192
    %4335 = vst.msk [vmem:[#allocation3 + $0x198] sm:$0xff] %vm4283, %v4194
    %4336 = vst.msk [vmem:[#allocation3 + $0x1a0] sm:$0xff] %vm4283, %v4196
    %4337 = vst.msk [vmem:[#allocation3 + $0x1a8] sm:$0xff] %vm4283, %v4198
    %4338 = vst.msk [vmem:[#allocation3 + $0x1b0] sm:$0xff] %vm4283, %v4200
    %4339 = vst.msk [vmem:[#allocation3 + $0x1b8] sm:$0xff] %vm4283, %v4202
    %4340 = vst.msk [vmem:[#allocation3 + $0x1c0] sm:$0xff] %vm4283, %v4204
    %4341 = vst.msk [vmem:[#allocation3 + $0x1c8] sm:$0xff] %vm4283, %v4206
    %4342 = vst.msk [vmem:[#allocation3 + $0x1d0] sm:$0xff] %vm4283, %v4208
    %4343 = vst.msk [vmem:[#allocation3 + $0x1d8] sm:$0xff] %vm4283, %v4210
    %4344 = vst.msk [vmem:[#allocation3 + $0x1e0] sm:$0xff] %vm4283, %v4212
    %4345 = vst.msk [vmem:[#allocation3 + $0x1e8] sm:$0xff] %vm4283, %v4214
    %4346 = vst.msk [vmem:[#allocation3 + $0x1f0] sm:$0xff] %vm4283, %v4216
    %4347 = vst.msk [vmem:[#allocation3 + $0x1f8] sm:$0xff] %vm4283, %v4218
    %v4348 = vld [vmem:[%s3577 + $0x2] sm:$0xff]
    %v4349 = vld [vmem:[%s3577 + $0xa] sm:$0xff]
    %v4350 = vld [vmem:[%s3577 + $0x1a] sm:$0xff]
    %v4351 = vld [vmem:[%s3577 + $0x22] sm:$0xff]
    %v4352 = vld [vmem:[%s3577 + $0x32] sm:$0xff]
    %v4353 = vld [vmem:[%s3577 + $0x3a] sm:$0xff]
    %v4354 = vld [vmem:[%s3577 + $0x4a] sm:$0xff]
    %v4355 = vld [vmem:[%s3577 + $0x52] sm:$0xff]
    %v4356 = vld [vmem:[%s3577 + $0x62] sm:$0xff]
    %v4357 = vld [vmem:[%s3577 + $0x6a] sm:$0xff]
    %v4358 = vld [vmem:[%s3577 + $0x7a] sm:$0xff]
    %v4359 = vld [vmem:[%s3577 + $0x82] sm:$0xff]
    %v4360 = vld [vmem:[%s3577 + $0x92] sm:$0xff]
    %v4361 = vld [vmem:[%s3577 + $0x9a] sm:$0xff]
    %v4362 = vld [vmem:[%s3577 + $0xaa] sm:$0xff]
    %v4363 = vld [vmem:[%s3577 + $0xb2] sm:$0xff]
    %v4364 = vld [vmem:[%s3577 + $0xc2] sm:$0xff]
    %v4365 = vld [vmem:[%s3577 + $0xca] sm:$0xff]
    %v4366 = vld [vmem:[%s3577 + $0xda] sm:$0xff]
    %v4367 = vld [vmem:[%s3577 + $0xe2] sm:$0xff]
    %v4368 = vld [vmem:[%s3577 + $0xf2] sm:$0xff]
    %v4369 = vld [vmem:[%s3577 + $0xfa] sm:$0xff]
    %v4370 = vld [vmem:[%s3577 + $0x10a] sm:$0xff]
    %v4371 = vld [vmem:[%s3577 + $0x112] sm:$0xff]
    %v4372 = vld [vmem:[%s3577 + $0x122] sm:$0xff]
    %v4373 = vld [vmem:[%s3577 + $0x12a] sm:$0xff]
    %v4374 = vld [vmem:[%s3577 + $0x13a] sm:$0xff]
    %v4375 = vld [vmem:[%s3577 + $0x142] sm:$0xff]
    %v4376 = vld [vmem:[%s3577 + $0x152] sm:$0xff]
    %v4377 = vld [vmem:[%s3577 + $0x15a] sm:$0xff]
    %v4378 = vld [vmem:[%s3577 + $0x16a] sm:$0xff]
    %v4379 = vld [vmem:[%s3577 + $0x172] sm:$0xff]
    %v4380 = vld [vmem:[%s3577 + $0x1b2] sm:$0xff]
    %v4381 = vld [vmem:[%s3577 + $0x1ba] sm:$0xff]
    %v4382 = vld [vmem:[%s3577 + $0x1ca] sm:$0xff]
    %v4383 = vld [vmem:[%s3577 + $0x1d2] sm:$0xff]
    %v4384 = vld [vmem:[%s3577 + $0x1e2] sm:$0xff]
    %v4385 = vld [vmem:[%s3577 + $0x1ea] sm:$0xff]
    %v4386 = vld [vmem:[%s3577 + $0x1fa] sm:$0xff]
    %v4387 = vld [vmem:[%s3577 + $0x202] sm:$0xff]
    %v4388 = vld [vmem:[%s3577 + $0x212] sm:$0xff]
    %v4389 = vld [vmem:[%s3577 + $0x21a] sm:$0xff]
    %v4390 = vld [vmem:[%s3577 + $0x22a] sm:$0xff]
    %v4391 = vld [vmem:[%s3577 + $0x232] sm:$0xff]
    %v4392 = vld [vmem:[%s3577 + $0x242] sm:$0xff]
    %v4393 = vld [vmem:[%s3577 + $0x24a] sm:$0xff]
    %v4394 = vld [vmem:[%s3577 + $0x25a] sm:$0xff]
    %v4395 = vld [vmem:[%s3577 + $0x262] sm:$0xff]
    %v4396 = vld [vmem:[%s3577 + $0x272] sm:$0xff]
    %v4397 = vld [vmem:[%s3577 + $0x27a] sm:$0xff]
    %v4398 = vld [vmem:[%s3577 + $0x28a] sm:$0xff]
    %v4399 = vld [vmem:[%s3577 + $0x292] sm:$0xff]
    %v4400 = vld [vmem:[%s3577 + $0x2a2] sm:$0xff]
    %v4401 = vld [vmem:[%s3577 + $0x2aa] sm:$0xff]
    %v4402 = vld [vmem:[%s3577 + $0x2ba] sm:$0xff]
    %v4403 = vld [vmem:[%s3577 + $0x2c2] sm:$0xff]
    %v4404 = vld [vmem:[%s3577 + $0x2d2] sm:$0xff]
    %v4405 = vld [vmem:[%s3577 + $0x2da] sm:$0xff]
    %v4406 = vld [vmem:[%s3577 + $0x2ea] sm:$0xff]
    %v4407 = vld [vmem:[%s3577 + $0x2f2] sm:$0xff]
    %v4408 = vld [vmem:[%s3577 + $0x302] sm:$0xff]
    %v4409 = vld [vmem:[%s3577 + $0x30a] sm:$0xff]
    %v4410 = vld [vmem:[%s3577 + $0x31a] sm:$0xff]
    %v4411 = vld [vmem:[%s3577 + $0x322] sm:$0xff]
    %4476 = vrot.lane.b32.xlu0 %v4348, 64
    %v4477 = vpop.permute.xlu0 %4476
    %4478 = vrot.lane.b32.xlu0 %v4349, 64
    %v4479 = vpop.permute.xlu0 %4478
    %4480 = vrot.lane.b32.xlu0 %v4350, 64
    %v4481 = vpop.permute.xlu0 %4480
    %4482 = vrot.lane.b32.xlu0 %v4351, 64
    %v4483 = vpop.permute.xlu0 %4482
    %4484 = vrot.lane.b32.xlu0 %v4352, 64
    %v4485 = vpop.permute.xlu0 %4484
    %4486 = vrot.lane.b32.xlu0 %v4353, 64
    %v4487 = vpop.permute.xlu0 %4486
    %4488 = vrot.lane.b32.xlu0 %v4354, 64
    %v4489 = vpop.permute.xlu0 %4488
    %4490 = vrot.lane.b32.xlu0 %v4355, 64
    %v4491 = vpop.permute.xlu0 %4490
    %4492 = vrot.lane.b32.xlu0 %v4356, 64
    %v4493 = vpop.permute.xlu0 %4492
    %4494 = vrot.lane.b32.xlu0 %v4357, 64
    %v4495 = vpop.permute.xlu0 %4494
    %4496 = vrot.lane.b32.xlu0 %v4358, 64
    %v4497 = vpop.permute.xlu0 %4496
    %4498 = vrot.lane.b32.xlu0 %v4359, 64
    %v4499 = vpop.permute.xlu0 %4498
    %4500 = vrot.lane.b32.xlu0 %v4360, 64
    %v4501 = vpop.permute.xlu0 %4500
    %4502 = vrot.lane.b32.xlu0 %v4361, 64
    %v4503 = vpop.permute.xlu0 %4502
    %4504 = vrot.lane.b32.xlu0 %v4362, 64
    %v4505 = vpop.permute.xlu0 %4504
    %4506 = vrot.lane.b32.xlu0 %v4363, 64
    %v4507 = vpop.permute.xlu0 %4506
    %4508 = vrot.lane.b32.xlu0 %v4364, 64
    %v4509 = vpop.permute.xlu0 %4508
    %4510 = vrot.lane.b32.xlu0 %v4365, 64
    %v4511 = vpop.permute.xlu0 %4510
    %4512 = vrot.lane.b32.xlu0 %v4366, 64
    %v4513 = vpop.permute.xlu0 %4512
    %4514 = vrot.lane.b32.xlu0 %v4367, 64
    %v4515 = vpop.permute.xlu0 %4514
    %4516 = vrot.lane.b32.xlu0 %v4368, 64
    %v4517 = vpop.permute.xlu0 %4516
    %4518 = vrot.lane.b32.xlu0 %v4369, 64
    %v4519 = vpop.permute.xlu0 %4518
    %4520 = vrot.lane.b32.xlu0 %v4370, 64
    %v4521 = vpop.permute.xlu0 %4520
    %4522 = vrot.lane.b32.xlu0 %v4371, 64
    %v4523 = vpop.permute.xlu0 %4522
    %4524 = vrot.lane.b32.xlu0 %v4372, 64
    %v4525 = vpop.permute.xlu0 %4524
    %4526 = vrot.lane.b32.xlu0 %v4373, 64
    %v4527 = vpop.permute.xlu0 %4526
    %4528 = vrot.lane.b32.xlu0 %v4374, 64
    %v4529 = vpop.permute.xlu0 %4528
    %4530 = vrot.lane.b32.xlu0 %v4375, 64
    %v4531 = vpop.permute.xlu0 %4530
    %4532 = vrot.lane.b32.xlu0 %v4376, 64
    %v4533 = vpop.permute.xlu0 %4532
    %4534 = vrot.lane.b32.xlu0 %v4377, 64
    %v4535 = vpop.permute.xlu0 %4534
    %4536 = vrot.lane.b32.xlu0 %v4378, 64
    %v4537 = vpop.permute.xlu0 %4536
    %4538 = vrot.lane.b32.xlu0 %v4379, 64
    %v4539 = vpop.permute.xlu0 %4538
    %4540 = vrot.lane.b32.xlu0 %v4380, 64
    %v4541 = vpop.permute.xlu0 %4540
    %4542 = vrot.lane.b32.xlu0 %v4381, 64
    %v4543 = vpop.permute.xlu0 %4542
    %4544 = vrot.lane.b32.xlu0 %v4382, 64
    %v4545 = vpop.permute.xlu0 %4544
    %4546 = vrot.lane.b32.xlu0 %v4383, 64
    %v4547 = vpop.permute.xlu0 %4546
    %4548 = vrot.lane.b32.xlu0 %v4384, 64
    %v4549 = vpop.permute.xlu0 %4548
    %4550 = vrot.lane.b32.xlu0 %v4385, 64
    %v4551 = vpop.permute.xlu0 %4550
    %4552 = vrot.lane.b32.xlu0 %v4386, 64
    %v4553 = vpop.permute.xlu0 %4552
    %4554 = vrot.lane.b32.xlu0 %v4387, 64
    %v4555 = vpop.permute.xlu0 %4554
    %4556 = vrot.lane.b32.xlu0 %v4388, 64
    %v4557 = vpop.permute.xlu0 %4556
    %4558 = vrot.lane.b32.xlu0 %v4389, 64
    %v4559 = vpop.permute.xlu0 %4558
    %4560 = vrot.lane.b32.xlu0 %v4390, 64
    %v4561 = vpop.permute.xlu0 %4560
    %4562 = vrot.lane.b32.xlu0 %v4391, 64
    %v4563 = vpop.permute.xlu0 %4562
    %4564 = vrot.lane.b32.xlu0 %v4392, 64
    %v4565 = vpop.permute.xlu0 %4564
    %4566 = vrot.lane.b32.xlu0 %v4393, 64
    %v4567 = vpop.permute.xlu0 %4566
    %4568 = vrot.lane.b32.xlu0 %v4394, 64
    %v4569 = vpop.permute.xlu0 %4568
    %4570 = vrot.lane.b32.xlu0 %v4395, 64
    %v4571 = vpop.permute.xlu0 %4570
    %4572 = vrot.lane.b32.xlu0 %v4396, 64
    %v4573 = vpop.permute.xlu0 %4572
    %4574 = vrot.lane.b32.xlu0 %v4397, 64
    %v4575 = vpop.permute.xlu0 %4574
    %4576 = vrot.lane.b32.xlu0 %v4398, 64
    %v4577 = vpop.permute.xlu0 %4576
    %4578 = vrot.lane.b32.xlu0 %v4399, 64
    %v4579 = vpop.permute.xlu0 %4578
    %4580 = vrot.lane.b32.xlu0 %v4400, 64
    %v4581 = vpop.permute.xlu0 %4580
    %4582 = vrot.lane.b32.xlu0 %v4401, 64
    %v4583 = vpop.permute.xlu0 %4582
    %4584 = vrot.lane.b32.xlu0 %v4402, 64
    %v4585 = vpop.permute.xlu0 %4584
    %4586 = vrot.lane.b32.xlu0 %v4403, 64
    %v4587 = vpop.permute.xlu0 %4586
    %4588 = vrot.lane.b32.xlu0 %v4404, 64
    %v4589 = vpop.permute.xlu0 %4588
    %4590 = vrot.lane.b32.xlu0 %v4405, 64
    %v4591 = vpop.permute.xlu0 %4590
    %4592 = vrot.lane.b32.xlu0 %v4406, 64
    %v4593 = vpop.permute.xlu0 %4592
    %4594 = vrot.lane.b32.xlu0 %v4407, 64
    %v4595 = vpop.permute.xlu0 %4594
    %4596 = vrot.lane.b32.xlu0 %v4408, 64
    %v4597 = vpop.permute.xlu0 %4596
    %4598 = vrot.lane.b32.xlu0 %v4409, 64
    %v4599 = vpop.permute.xlu0 %4598
    %4600 = vrot.lane.b32.xlu0 %v4410, 64
    %v4601 = vpop.permute.xlu0 %4600
    %4602 = vrot.lane.b32.xlu0 %v4411, 64
    %v4603 = vpop.permute.xlu0 %4602
    %vm4668 = vcmask 589312
    %4669 = vst.msk [vmem:[#allocation3] sm:$0xff] %vm4668, %v4477
    %4670 = vst.msk [vmem:[#allocation3 + $0x8] sm:$0xff] %vm4668, %v4479
    %4671 = vst.msk [vmem:[#allocation3 + $0x10] sm:$0xff] %vm4668, %v4481
    %4672 = vst.msk [vmem:[#allocation3 + $0x18] sm:$0xff] %vm4668, %v4483
    %4673 = vst.msk [vmem:[#allocation3 + $0x20] sm:$0xff] %vm4668, %v4485
    %4674 = vst.msk [vmem:[#allocation3 + $0x28] sm:$0xff] %vm4668, %v4487
    %4675 = vst.msk [vmem:[#allocation3 + $0x30] sm:$0xff] %vm4668, %v4489
    %4676 = vst.msk [vmem:[#allocation3 + $0x38] sm:$0xff] %vm4668, %v4491
    %4677 = vst.msk [vmem:[#allocation3 + $0x40] sm:$0xff] %vm4668, %v4493
    %4678 = vst.msk [vmem:[#allocation3 + $0x48] sm:$0xff] %vm4668, %v4495
    %4679 = vst.msk [vmem:[#allocation3 + $0x50] sm:$0xff] %vm4668, %v4497
    %4680 = vst.msk [vmem:[#allocation3 + $0x58] sm:$0xff] %vm4668, %v4499
    %4681 = vst.msk [vmem:[#allocation3 + $0x60] sm:$0xff] %vm4668, %v4501
    %4682 = vst.msk [vmem:[#allocation3 + $0x68] sm:$0xff] %vm4668, %v4503
    %4683 = vst.msk [vmem:[#allocation3 + $0x70] sm:$0xff] %vm4668, %v4505
    %4684 = vst.msk [vmem:[#allocation3 + $0x78] sm:$0xff] %vm4668, %v4507
    %4685 = vst.msk [vmem:[#allocation3 + $0x80] sm:$0xff] %vm4668, %v4509
    %4686 = vst.msk [vmem:[#allocation3 + $0x88] sm:$0xff] %vm4668, %v4511
    %4687 = vst.msk [vmem:[#allocation3 + $0x90] sm:$0xff] %vm4668, %v4513
    %4688 = vst.msk [vmem:[#allocation3 + $0x98] sm:$0xff] %vm4668, %v4515
    %4689 = vst.msk [vmem:[#allocation3 + $0xa0] sm:$0xff] %vm4668, %v4517
    %4690 = vst.msk [vmem:[#allocation3 + $0xa8] sm:$0xff] %vm4668, %v4519
    %4691 = vst.msk [vmem:[#allocation3 + $0xb0] sm:$0xff] %vm4668, %v4521
    %4692 = vst.msk [vmem:[#allocation3 + $0xb8] sm:$0xff] %vm4668, %v4523
    %4693 = vst.msk [vmem:[#allocation3 + $0xc0] sm:$0xff] %vm4668, %v4525
    %4694 = vst.msk [vmem:[#allocation3 + $0xc8] sm:$0xff] %vm4668, %v4527
    %4695 = vst.msk [vmem:[#allocation3 + $0xd0] sm:$0xff] %vm4668, %v4529
    %4696 = vst.msk [vmem:[#allocation3 + $0xd8] sm:$0xff] %vm4668, %v4531
    %4697 = vst.msk [vmem:[#allocation3 + $0xe0] sm:$0xff] %vm4668, %v4533
    %4698 = vst.msk [vmem:[#allocation3 + $0xe8] sm:$0xff] %vm4668, %v4535
    %4699 = vst.msk [vmem:[#allocation3 + $0xf0] sm:$0xff] %vm4668, %v4537
    %4700 = vst.msk [vmem:[#allocation3 + $0xf8] sm:$0xff] %vm4668, %v4539
    %4701 = vst.msk [vmem:[#allocation3 + $0x100] sm:$0xff] %vm4668, %v4541
    %4702 = vst.msk [vmem:[#allocation3 + $0x108] sm:$0xff] %vm4668, %v4543
    %4703 = vst.msk [vmem:[#allocation3 + $0x110] sm:$0xff] %vm4668, %v4545
    %4704 = vst.msk [vmem:[#allocation3 + $0x118] sm:$0xff] %vm4668, %v4547
    %4705 = vst.msk [vmem:[#allocation3 + $0x120] sm:$0xff] %vm4668, %v4549
    %4706 = vst.msk [vmem:[#allocation3 + $0x128] sm:$0xff] %vm4668, %v4551
    %4707 = vst.msk [vmem:[#allocation3 + $0x130] sm:$0xff] %vm4668, %v4553
    %4708 = vst.msk [vmem:[#allocation3 + $0x138] sm:$0xff] %vm4668, %v4555
    %4709 = vst.msk [vmem:[#allocation3 + $0x140] sm:$0xff] %vm4668, %v4557
    %4710 = vst.msk [vmem:[#allocation3 + $0x148] sm:$0xff] %vm4668, %v4559
    %4711 = vst.msk [vmem:[#allocation3 + $0x150] sm:$0xff] %vm4668, %v4561
    %4712 = vst.msk [vmem:[#allocation3 + $0x158] sm:$0xff] %vm4668, %v4563
    %4713 = vst.msk [vmem:[#allocation3 + $0x160] sm:$0xff] %vm4668, %v4565
    %4714 = vst.msk [vmem:[#allocation3 + $0x168] sm:$0xff] %vm4668, %v4567
    %4715 = vst.msk [vmem:[#allocation3 + $0x170] sm:$0xff] %vm4668, %v4569
    %4716 = vst.msk [vmem:[#allocation3 + $0x178] sm:$0xff] %vm4668, %v4571
    %4717 = vst.msk [vmem:[#allocation3 + $0x180] sm:$0xff] %vm4668, %v4573
    %4718 = vst.msk [vmem:[#allocation3 + $0x188] sm:$0xff] %vm4668, %v4575
    %4719 = vst.msk [vmem:[#allocation3 + $0x190] sm:$0xff] %vm4668, %v4577
    %4720 = vst.msk [vmem:[#allocation3 + $0x198] sm:$0xff] %vm4668, %v4579
    %4721 = vst.msk [vmem:[#allocation3 + $0x1a0] sm:$0xff] %vm4668, %v4581
    %4722 = vst.msk [vmem:[#allocation3 + $0x1a8] sm:$0xff] %vm4668, %v4583
    %4723 = vst.msk [vmem:[#allocation3 + $0x1b0] sm:$0xff] %vm4668, %v4585
    %4724 = vst.msk [vmem:[#allocation3 + $0x1b8] sm:$0xff] %vm4668, %v4587
    %4725 = vst.msk [vmem:[#allocation3 + $0x1c0] sm:$0xff] %vm4668, %v4589
    %4726 = vst.msk [vmem:[#allocation3 + $0x1c8] sm:$0xff] %vm4668, %v4591
    %4727 = vst.msk [vmem:[#allocation3 + $0x1d0] sm:$0xff] %vm4668, %v4593
    %4728 = vst.msk [vmem:[#allocation3 + $0x1d8] sm:$0xff] %vm4668, %v4595
    %4729 = vst.msk [vmem:[#allocation3 + $0x1e0] sm:$0xff] %vm4668, %v4597
    %4730 = vst.msk [vmem:[#allocation3 + $0x1e8] sm:$0xff] %vm4668, %v4599
    %4731 = vst.msk [vmem:[#allocation3 + $0x1f0] sm:$0xff] %vm4668, %v4601
    %4732 = vst.msk [vmem:[#allocation3 + $0x1f8] sm:$0xff] %vm4668, %v4603
    %v4733 = vld [vmem:[%s4] sm:$0xff]
    %v4734 = vld [vmem:[#allocation3] sm:$0xff]
    %v4735 = vld [vmem:[#allocation3 + $0x8] sm:$0xff]
    %v4736 = vld [vmem:[#allocation3 + $0x10] sm:$0xff]
    %v4737 = vld [vmem:[#allocation3 + $0x18] sm:$0xff]
    %v4738 = vld [vmem:[#allocation3 + $0x20] sm:$0xff]
    %v4739 = vld [vmem:[#allocation3 + $0x28] sm:$0xff]
    %v4740 = vld [vmem:[#allocation3 + $0x30] sm:$0xff]
    %v4741 = vld [vmem:[#allocation3 + $0x38] sm:$0xff]
    %v4742 = vld [vmem:[#allocation3 + $0x40] sm:$0xff]
    %v4743 = vld [vmem:[#allocation3 + $0x48] sm:$0xff]
    %v4744 = vld [vmem:[#allocation3 + $0x50] sm:$0xff]
    %v4745 = vld [vmem:[#allocation3 + $0x58] sm:$0xff]
    %v4746 = vld [vmem:[#allocation3 + $0x60] sm:$0xff]
    %v4747 = vld [vmem:[#allocation3 + $0x68] sm:$0xff]
    %v4748 = vld [vmem:[#allocation3 + $0x70] sm:$0xff]
    %v4749 = vld [vmem:[#allocation3 + $0x78] sm:$0xff]
    %v4750 = vld [vmem:[#allocation3 + $0x80] sm:$0xff]
    %v4751 = vld [vmem:[#allocation3 + $0x88] sm:$0xff]
    %v4752 = vld [vmem:[#allocation3 + $0x90] sm:$0xff]
    %v4753 = vld [vmem:[#allocation3 + $0x98] sm:$0xff]
    %v4754 = vld [vmem:[#allocation3 + $0xa0] sm:$0xff]
    %v4755 = vld [vmem:[#allocation3 + $0xa8] sm:$0xff]
    %v4756 = vld [vmem:[#allocation3 + $0xb0] sm:$0xff]
    %v4757 = vld [vmem:[#allocation3 + $0xb8] sm:$0xff]
    %v4758 = vld [vmem:[#allocation3 + $0xc0] sm:$0xff]
    %v4759 = vld [vmem:[#allocation3 + $0xc8] sm:$0xff]
    %v4760 = vld [vmem:[#allocation3 + $0xd0] sm:$0xff]
    %v4761 = vld [vmem:[#allocation3 + $0xd8] sm:$0xff]
    %v4762 = vld [vmem:[#allocation3 + $0xe0] sm:$0xff]
    %v4763 = vld [vmem:[#allocation3 + $0xe8] sm:$0xff]
    %v4764 = vld [vmem:[#allocation3 + $0xf0] sm:$0xff]
    %v4765 = vld [vmem:[#allocation3 + $0xf8] sm:$0xff]
    %v4766 = vld [vmem:[#allocation3 + $0x100] sm:$0xff]
    %v4767 = vld [vmem:[#allocation3 + $0x108] sm:$0xff]
    %v4768 = vld [vmem:[#allocation3 + $0x110] sm:$0xff]
    %v4769 = vld [vmem:[#allocation3 + $0x118] sm:$0xff]
    %v4770 = vld [vmem:[#allocation3 + $0x120] sm:$0xff]
    %v4771 = vld [vmem:[#allocation3 + $0x128] sm:$0xff]
    %v4772 = vld [vmem:[#allocation3 + $0x130] sm:$0xff]
    %v4773 = vld [vmem:[#allocation3 + $0x138] sm:$0xff]
    %v4774 = vld [vmem:[#allocation3 + $0x140] sm:$0xff]
    %v4775 = vld [vmem:[#allocation3 + $0x148] sm:$0xff]
    %v4776 = vld [vmem:[#allocation3 + $0x150] sm:$0xff]
    %v4777 = vld [vmem:[#allocation3 + $0x158] sm:$0xff]
    %v4778 = vld [vmem:[#allocation3 + $0x160] sm:$0xff]
    %v4779 = vld [vmem:[#allocation3 + $0x168] sm:$0xff]
    %v4780 = vld [vmem:[#allocation3 + $0x170] sm:$0xff]
    %v4781 = vld [vmem:[#allocation3 + $0x178] sm:$0xff]
    %v4782 = vld [vmem:[#allocation3 + $0x180] sm:$0xff]
    %v4783 = vld [vmem:[#allocation3 + $0x188] sm:$0xff]
    %v4784 = vld [vmem:[#allocation3 + $0x190] sm:$0xff]
    %v4785 = vld [vmem:[#allocation3 + $0x198] sm:$0xff]
    %v4786 = vld [vmem:[#allocation3 + $0x1a0] sm:$0xff]
    %v4787 = vld [vmem:[#allocation3 + $0x1a8] sm:$0xff]
    %v4788 = vld [vmem:[#allocation3 + $0x1b0] sm:$0xff]
    %v4789 = vld [vmem:[#allocation3 + $0x1b8] sm:$0xff]
    %v4790 = vld [vmem:[#allocation3 + $0x1c0] sm:$0xff]
    %v4791 = vld [vmem:[#allocation3 + $0x1c8] sm:$0xff]
    %v4792 = vld [vmem:[#allocation3 + $0x1d0] sm:$0xff]
    %v4793 = vld [vmem:[#allocation3 + $0x1d8] sm:$0xff]
    %v4794 = vld [vmem:[#allocation3 + $0x1e0] sm:$0xff]
    %v4795 = vld [vmem:[#allocation3 + $0x1e8] sm:$0xff]
    %v4796 = vld [vmem:[#allocation3 + $0x1f0] sm:$0xff]
    %v4797 = vld [vmem:[#allocation3 + $0x1f8] sm:$0xff]
    %vm4798 = vcmask 588800
    %v4800 = vsel %vm4798, %v4733, 0
    %v4803 = vsel %vm4798, %v4734, 0
    %v4806 = vsel %vm4798, %v4735, 0
    %v4809 = vsel %vm4798, %v4736, 0
    %v4812 = vsel %vm4798, %v4737, 0
    %v4815 = vsel %vm4798, %v4738, 0
    %v4818 = vsel %vm4798, %v4739, 0
    %v4821 = vsel %vm4798, %v4740, 0
    %v4824 = vsel %vm4798, %v4741, 0
    %v4827 = vsel %vm4798, %v4742, 0
    %v4830 = vsel %vm4798, %v4743, 0
    %v4833 = vsel %vm4798, %v4744, 0
    %v4836 = vsel %vm4798, %v4745, 0
    %v4839 = vsel %vm4798, %v4746, 0
    %v4842 = vsel %vm4798, %v4747, 0
    %v4845 = vsel %vm4798, %v4748, 0
    %v4848 = vsel %vm4798, %v4749, 0
    %v4851 = vsel %vm4798, %v4750, 0
    %v4854 = vsel %vm4798, %v4751, 0
    %v4857 = vsel %vm4798, %v4752, 0
    %v4860 = vsel %vm4798, %v4753, 0
    %v4863 = vsel %vm4798, %v4754, 0
    %v4866 = vsel %vm4798, %v4755, 0
    %v4869 = vsel %vm4798, %v4756, 0
    %v4872 = vsel %vm4798, %v4757, 0
    %v4875 = vsel %vm4798, %v4758, 0
    %v4878 = vsel %vm4798, %v4759, 0
    %v4881 = vsel %vm4798, %v4760, 0
    %v4884 = vsel %vm4798, %v4761, 0
    %v4887 = vsel %vm4798, %v4762, 0
    %v4890 = vsel %vm4798, %v4763, 0
    %v4893 = vsel %vm4798, %v4764, 0
    %v4896 = vsel %vm4798, %v4765, 0
    %v4899 = vsel %vm4798, %v4766, 0
    %v4902 = vsel %vm4798, %v4767, 0
    %v4905 = vsel %vm4798, %v4768, 0
    %v4908 = vsel %vm4798, %v4769, 0
    %v4911 = vsel %vm4798, %v4770, 0
    %v4914 = vsel %vm4798, %v4771, 0
    %v4917 = vsel %vm4798, %v4772, 0
    %v4920 = vsel %vm4798, %v4773, 0
    %v4923 = vsel %vm4798, %v4774, 0
    %v4926 = vsel %vm4798, %v4775, 0
    %v4929 = vsel %vm4798, %v4776, 0
    %v4932 = vsel %vm4798, %v4777, 0
    %v4935 = vsel %vm4798, %v4778, 0
    %v4938 = vsel %vm4798, %v4779, 0
    %v4941 = vsel %vm4798, %v4780, 0
    %v4944 = vsel %vm4798, %v4781, 0
    %v4947 = vsel %vm4798, %v4782, 0
    %v4950 = vsel %vm4798, %v4783, 0
    %v4953 = vsel %vm4798, %v4784, 0
    %v4956 = vsel %vm4798, %v4785, 0
    %v4959 = vsel %vm4798, %v4786, 0
    %v4962 = vsel %vm4798, %v4787, 0
    %v4965 = vsel %vm4798, %v4788, 0
    %v4968 = vsel %vm4798, %v4789, 0
    %v4971 = vsel %vm4798, %v4790, 0
    %v4974 = vsel %vm4798, %v4791, 0
    %v4977 = vsel %vm4798, %v4792, 0
    %v4980 = vsel %vm4798, %v4793, 0
    %v4983 = vsel %vm4798, %v4794, 0
    %v4986 = vsel %vm4798, %v4795, 0
    %v4989 = vsel %vm4798, %v4796, 0
    %v4992 = vsel %vm4798, %v4797, 0
    %4994 = vmatprep.subr.mxu0 0.0
    %4995 = vmatpush1.xpose.msra.mxu0 %v4848
    %4996 = vmatprep.subr.mxu0 0.0
    %4997 = vmatpush1.xpose.msra.mxu0 %v4845
    %4998 = vmatprep.subr.mxu0 0.0
    %4999 = vmatpush1.xpose.msra.mxu0 %v4842
    %5000 = vmatprep.subr.mxu0 0.0
    %5001 = vmatpush1.xpose.msra.mxu0 %v4839
    %5002 = vmatprep.subr.mxu0 0.0
    %5003 = vmatpush1.xpose.msra.mxu0 %v4836
    %5004 = vmatprep.subr.mxu0 0.0
    %5005 = vmatpush1.xpose.msra.mxu0 %v4833
    %5006 = vmatprep.subr.mxu0 0.0
    %5007 = vmatpush1.xpose.msra.mxu0 %v4830
    %5008 = vmatprep.subr.mxu0 0.0
    %5009 = vmatpush1.xpose.msra.mxu0 %v4827
    %5010 = vmatprep.subr.mxu0 0.0
    %5011 = vmatpush1.xpose.msra.mxu0 %v4824
    %5012 = vmatprep.subr.mxu0 0.0
    %5013 = vmatpush1.xpose.msra.mxu0 %v4821
    %5014 = vmatprep.subr.mxu0 0.0
    %5015 = vmatpush1.xpose.msra.mxu0 %v4818
    %5016 = vmatprep.subr.mxu0 0.0
    %5017 = vmatpush1.xpose.msra.mxu0 %v4815
    %5018 = vmatprep.subr.mxu0 0.0
    %5019 = vmatpush1.xpose.msra.mxu0 %v4812
    %5020 = vmatprep.subr.mxu0 0.0
    %5021 = vmatpush1.xpose.msra.mxu0 %v4809
    %5022 = vmatprep.subr.mxu0 0.0
    %5023 = vmatpush1.xpose.msra.mxu0 %v4806
    %5024 = vmatprep.subr.mxu0 0.0
    %5025 = vmatpush1.xpose.msra.mxu0 %v4803
    %5026 = vmatprep.subr.mxu0 0.0
    %5027 = vmatpush2.xpose.msra.mxu0 %v4896
    %5028 = vmatprep.subr.mxu0 0.0
    %5029 = vmatpush2.xpose.msra.mxu0 %v4893
    %5030 = vmatprep.subr.mxu0 0.0
    %5031 = vmatpush2.xpose.msra.mxu0 %v4890
    %5032 = vmatprep.subr.mxu0 0.0
    %5033 = vmatpush2.xpose.msra.mxu0 %v4887
    %5034 = vmatprep.subr.mxu0 0.0
    %5035 = vmatpush2.xpose.msra.mxu0 %v4884
    %5036 = vmatprep.subr.mxu0 0.0
    %5037 = vmatpush2.xpose.msra.mxu0 %v4881
    %5038 = vmatprep.subr.mxu0 0.0
    %5039 = vmatpush2.xpose.msra.mxu0 %v4878
    %5040 = vmatprep.subr.mxu0 0.0
    %5041 = vmatpush2.xpose.msra.mxu0 %v4875
    %5042 = vmatprep.subr.mxu0 0.0
    %5043 = vmatpush2.xpose.msra.mxu0 %v4872
    %5044 = vmatprep.subr.mxu0 0.0
    %5045 = vmatpush2.xpose.msra.mxu0 %v4869
    %5046 = vmatprep.subr.mxu0 0.0
    %5047 = vmatpush2.xpose.msra.mxu0 %v4866
    %5048 = vmatprep.subr.mxu0 0.0
    %5049 = vmatpush2.xpose.msra.mxu0 %v4863
    %5050 = vmatprep.subr.mxu0 0.0
    %5051 = vmatpush2.xpose.msra.mxu0 %v4860
    %5052 = vmatprep.subr.mxu0 0.0
    %5053 = vmatpush2.xpose.msra.mxu0 %v4857
    %5054 = vmatprep.subr.mxu0 0.0
    %5055 = vmatpush2.xpose.msra.mxu0 %v4854
    %5056 = vmatprep.subr.mxu0 0.0
    %5057 = vmatpush2.xpose.msra.mxu0 %v4851
    %5058 = vmatprep.mubr.f32.mxu0 0.0
    %5059 = vmatmul.mubr.f32.gmra.mxu0 %v4800
    %v5060 = vpop.f32.mrf.mxu0
    %v5061 = vadd.f32 0.0, %v5060
    %v5062 = vpop.f32.mrf.mxu0
    %v5063 = vadd.f32 0.0, %v5062
    %5064 = vdwg.mxu0
    %5065 = vmatprep.subr.mxu0 0.0
    %5066 = vmatpush1.xpose.msra.mxu0 %v4944
    %5067 = vmatprep.subr.mxu0 0.0
    %5068 = vmatpush1.xpose.msra.mxu0 %v4941
    %5069 = vmatprep.subr.mxu0 0.0
    %5070 = vmatpush1.xpose.msra.mxu0 %v4938
    %5071 = vmatprep.subr.mxu0 0.0
    %5072 = vmatpush1.xpose.msra.mxu0 %v4935
    %5073 = vmatprep.subr.mxu0 0.0
    %5074 = vmatpush1.xpose.msra.mxu0 %v4932
    %5075 = vmatprep.subr.mxu0 0.0
    %5076 = vmatpush1.xpose.msra.mxu0 %v4929
    %5077 = vmatprep.subr.mxu0 0.0
    %5078 = vmatpush1.xpose.msra.mxu0 %v4926
    %5079 = vmatprep.subr.mxu0 0.0
    %5080 = vmatpush1.xpose.msra.mxu0 %v4923
    %5081 = vmatprep.subr.mxu0 0.0
    %5082 = vmatpush1.xpose.msra.mxu0 %v4920
    %5083 = vmatprep.subr.mxu0 0.0
    %5084 = vmatpush1.xpose.msra.mxu0 %v4917
    %5085 = vmatprep.subr.mxu0 0.0
    %5086 = vmatpush1.xpose.msra.mxu0 %v4914
    %5087 = vmatprep.subr.mxu0 0.0
    %5088 = vmatpush1.xpose.msra.mxu0 %v4911
    %5089 = vmatprep.subr.mxu0 0.0
    %5090 = vmatpush1.xpose.msra.mxu0 %v4908
    %5091 = vmatprep.subr.mxu0 0.0
    %5092 = vmatpush1.xpose.msra.mxu0 %v4905
    %5093 = vmatprep.subr.mxu0 0.0
    %5094 = vmatpush1.xpose.msra.mxu0 %v4902
    %5095 = vmatprep.subr.mxu0 0.0
    %5096 = vmatpush1.xpose.msra.mxu0 %v4899
    %5097 = vmatprep.subr.mxu0 0.0
    %5098 = vmatpush2.xpose.msra.mxu0 %v4992
    %5099 = vmatprep.subr.mxu0 0.0
    %5100 = vmatpush2.xpose.msra.mxu0 %v4989
    %5101 = vmatprep.subr.mxu0 0.0
    %5102 = vmatpush2.xpose.msra.mxu0 %v4986
    %5103 = vmatprep.subr.mxu0 0.0
    %5104 = vmatpush2.xpose.msra.mxu0 %v4983
    %5105 = vmatprep.subr.mxu0 0.0
    %5106 = vmatpush2.xpose.msra.mxu0 %v4980
    %5107 = vmatprep.subr.mxu0 0.0
    %5108 = vmatpush2.xpose.msra.mxu0 %v4977
    %5109 = vmatprep.subr.mxu0 0.0
    %5110 = vmatpush2.xpose.msra.mxu0 %v4974
    %5111 = vmatprep.subr.mxu0 0.0
    %5112 = vmatpush2.xpose.msra.mxu0 %v4971
    %5113 = vmatprep.subr.mxu0 0.0
    %5114 = vmatpush2.xpose.msra.mxu0 %v4968
    %5115 = vmatprep.subr.mxu0 0.0
    %5116 = vmatpush2.xpose.msra.mxu0 %v4965
    %5117 = vmatprep.subr.mxu0 0.0
    %5118 = vmatpush2.xpose.msra.mxu0 %v4962
    %5119 = vmatprep.subr.mxu0 0.0
    %5120 = vmatpush2.xpose.msra.mxu0 %v4959
    %5121 = vmatprep.subr.mxu0 0.0
    %5122 = vmatpush2.xpose.msra.mxu0 %v4956
    %5123 = vmatprep.subr.mxu0 0.0
    %5124 = vmatpush2.xpose.msra.mxu0 %v4953
    %5125 = vmatprep.subr.mxu0 0.0
    %5126 = vmatpush2.xpose.msra.mxu0 %v4950
    %5127 = vmatprep.subr.mxu0 0.0
    %5128 = vmatpush2.xpose.msra.mxu0 %v4947
    %5129 = vmatprep.mubr.f32.mxu0 0.0
    %5130 = vmatmul.mubr.f32.gmra.mxu0 %v4800
    %v5131 = vpop.f32.mrf.mxu0
    %v5132 = vadd.f32 0.0, %v5131
    %v5133 = vpop.f32.mrf.mxu0
    %v5134 = vadd.f32 0.0, %v5133
    %5135 = vdwg.mxu0
    %v5136 = vadd.f32 %v5061, %v5063
    %v5137 = vadd.f32 %v5136, %v5132
    %v5138 = vadd.f32 %v5137, %v5134
    %5139 = vadd.xlane.f32.xlu0 %v5138
    %v5140 = vpop.xlane.xlu0 %5139
    %v5141 = vmul.f32 %v5140, 0.001953125
    %v5142 = vmul.f32 %v5061, %v5061
    %v5143 = vmul.f32 %v5063, %v5063
    %v5144 = vmul.f32 %v5132, %v5132
    %v5145 = vmul.f32 %v5134, %v5134
    %v5146 = vadd.f32 %v5142, %v5143
    %v5147 = vadd.f32 %v5146, %v5144
    %v5148 = vadd.f32 %v5147, %v5145
    %5149 = vadd.xlane.f32.xlu0 %v5148
    %v5150 = vpop.xlane.xlu0 %5149
    %v5151 = vmul.f32 %v5150, 0.001953125
    %v5152 = vmul.f32 %v5141, %v5141
    %v5153 = vsub.f32 %v5151, %v5152
    %v5154 = vmax.f32 %v5153, 0.0
    %v5155 = vsub.f32 %v5061, %v5141
    %v5156 = vsub.f32 %v5063, %v5141
    %v5157 = vsub.f32 %v5132, %v5141
    %v5158 = vsub.f32 %v5134, %v5141
    %v5159 = vadd.f32 %v5154, 1e-05
    %v5160 = vrsqrt.pop %v5159
    %v5161 = vmul.f32 %v5155, %v5160
    %v5162 = vmul.f32 %v5156, %v5160
    %v5163 = vmul.f32 %v5157, %v5160
    %v5164 = vmul.f32 %v5158, %v5160
    %v5165 = vld [vmem:[%s5] sm:$0xff]
    %5167 = vset.pattern.permute.xlu0 0
    %5168 = vperm.xlu0 %5167, %v5165
    %v5169 = vpop.permute.xlu0 %5168
    %v5171 = vmul.f32 %v5161, %v5169
    %v5172 = vmul.f32 %v5162, %v5169
    %v5173 = vmul.f32 %v5163, %v5169
    %v5174 = vmul.f32 %v5164, %v5169
    %v5175 = vld [vmem:[%s6] sm:$0xff]
    %5177 = vset.pattern.permute.xlu0 0
    %5178 = vperm.xlu0 %5177, %v5175
    %v5179 = vpop.permute.xlu0 %5178
    %v5181 = vadd.f32 %v5171, %v5179
    %v5182 = vadd.f32 %v5172, %v5179
    %v5183 = vadd.f32 %v5173, %v5179
    %v5184 = vadd.f32 %v5174, %v5179
    %v5185 = vmax.f32 %v5181, 0.0
    %v5186 = vmax.f32 %v5182, 0.0
    %v5187 = vmax.f32 %v5183, 0.0
    %v5188 = vmax.f32 %v5184, 0.0
    %5189 = vst [vmem:[#allocation4] sm:$0xff] %v5185
    %5190 = vst [vmem:[#allocation4 + $0x8] sm:$0xff] %v5186
    %5191 = vst [vmem:[#allocation4 + $0x10] sm:$0xff] %v5187
    %5192 = vst [vmem:[#allocation4 + $0x18] sm:$0xff] %v5188
    // Predicated region
    $region30: #{tpu_custom_call.1} parent=1 // pred_check
      _
    $region31: #{tpu_custom_call.1} parent=1 // pred_check_branch
      %5194 = sbr.rel (0) target = $region33
    $region32: #{tpu_custom_call.1} parent=1 // pred_region
      %s5196 = ssub.s32 512, 512
      %5197 = vsyncadd [#allocation5], %s5196
      %s5199 = sshll.u32 [#allocation4], 4
      %s5200 = int_to_ptr.vmem [resolvable:$true] %s5199
      %5202 = dma.vmem_to_hbm [thread:$0]  %s5200, 512, %s7, [#allocation5]
    $region33: #{tpu_custom_call.1} parent=1 // pred_fallthru
      _
    // Predicated region
    $region34: #{tpu_custom_call.1} parent=1 // pred_check
      _
    $region35: #{tpu_custom_call.1} parent=1 // pred_check_branch
      %5204 = sbr.rel (0) target = $region37
    $region36: #{tpu_custom_call.1} parent=1 // pred_region
      %5205 = dma.done [#allocation5], 512
    $region37: #{tpu_custom_call.1} parent=1 // pred_fallthru
      _
    %5206 = vsyncpa [#allocation5], 1

</llo_original>
